<compile_context>
chip_gen: v5e
topology: v5e:2x2
jax: 0.10.0
libtpu: 0.0.40
codegen_flags: <defaults>
</compile_context>

<pallas_src>
import math
from functools import partial

import numpy as np
import jax
import jax.numpy as jnp
from jax.experimental import pallas as pl
from jax.experimental.pallas import tpu as pltpu

# ----------------------------- configuration -----------------------------
CONV_DIM = 32          # conv_dim / transformer d_model
MASK_DIM = 16          # mask_dim
NHEADS = 4             # transformer_nheads
DIM_FF = 64            # transformer_dim_feedforward
ENC_LAYERS = 2         # transformer_enc_layers
# (name, channels, stride) sorted by stride ascending (finest -> coarsest)
FEATURE_SPECS = [("res3", 8, 8), ("res4", 12, 16), ("res5", 16, 32)]

_F32 = jnp.float32
_BF16 = jnp.bfloat16


def _vmem():
    return pl.BlockSpec(memory_space=pltpu.MemorySpace.VMEM)


# ----------------------------- Pallas kernels -----------------------------
def _fused_matmul_kernel(x_ref, w_ref, b_ref, o_ref, *, relu):
    # x: (tm, K) bf16, w: (K, Cout) bf16, b: (1, Cout) f32 -> o: (tm, Cout) f32
    acc = jnp.dot(x_ref[...], w_ref[...], preferred_element_type=_F32) + b_ref[...]
    if relu:
        acc = jnp.maximum(acc, 0.0)
    o_ref[...] = acc


def _transformer_branch_kernel(
    x_ref, wproj_ref, bproj_ref, pos_ref, hmask_ref,
    wq_ref, bq_ref, wk_ref, bk_ref, wv_ref, bv_ref, wo_ref, bo_ref,
    ln1w_ref, ln1b_ref, w1_ref, b1_ref, w2_ref, b2_ref, ln2w_ref, ln2b_ref,
    wconv_ref, bconv_ref, scat_ref,
    t_ref, y_ref, *, batch, nlayers, nheads,
):
    # Fused: input_proj (1x1 conv) -> post-norm transformer encoder layers ->
    # 3x3 output conv + relu.  All activations stay resident in VMEM.
    N, C = t_ref.shape
    B = batch
    S = N // B
    dh = C // nheads
    scale = 1.0 / math.sqrt(dh)

    def mm(a, b):  # MXU matmul: bf16 operands, f32 accumulation
        return jnp.dot(a.astype(_BF16), b.astype(_BF16),
                       preferred_element_type=_F32)

    def bdot(a, b, dims):  # batched MXU matmul
        return jax.lax.dot_general(a.astype(_BF16), b.astype(_BF16), dims,
                                   preferred_element_type=_F32)

    def layernorm(x, w, b):  # f32 statistics (eps = 1e-5, matches nn.LayerNorm)
        mu = jnp.mean(x, axis=-1, keepdims=True)
        xc = x - mu
        var = jnp.mean(xc * xc, axis=-1, keepdims=True)
        return xc * jax.lax.rsqrt(var + 1e-5) * w + b

    # ---- input_proj: 1x1 conv as a matmul ----
    src = mm(x_ref[...], wproj_ref[...]) + bproj_ref[...]        # (N, C) f32
    pos = pos_ref[...]                                           # (N, C) f32
    hmask4 = hmask_ref[...].reshape(nheads, 1, 1, C)             # (H,1,1,C) 0/1

    # ---- transformer encoder layers (post-norm, dropout = identity) ----
    for l in range(nlayers):
        qk_in = src + pos                    # q = k = src + pos, v = src
        q = mm(qk_in, wq_ref[l]) + bq_ref[l]                     # (N, C)
        k = mm(qk_in, wk_ref[l]) + bk_ref[l]
        v = mm(src, wv_ref[l]) + bv_ref[l]

        q3 = q.reshape(B, S, C)
        k3 = k.reshape(B, S, C)
        v3 = v.reshape(B, S, C)
        # head-major batched layout (nheads*B, S, C); per-head channels are
        # selected by masking q and v -> no lane-splitting reshapes, no concat.
        q_hb = (q3[None] * hmask4 * scale).reshape(nheads * B, S, C)
        v_hb = (v3[None] * hmask4).reshape(nheads * B, S, C)
        k_hb = jnp.broadcast_to(k3[None], (nheads, B, S, C)).reshape(
            nheads * B, S, C)

        sc = bdot(q_hb, k_hb, (((2,), (2,)), ((0,), (0,))))      # (HB, S, S)
        sc = sc - jnp.max(sc, axis=-1, keepdims=True)
        e = jnp.exp(sc)
        p = e * pl.reciprocal(jnp.sum(e, axis=-1, keepdims=True), approx=True)
        ctx = bdot(p, v_hb, (((2,), (1,)), ((0,), (0,))))        # (HB, S, C)

        ctx_sum = ctx[0:B]                   # sum masked per-head contexts
        for h in range(1, nheads):
            ctx_sum = ctx_sum + ctx[h * B:(h + 1) * B]
        ctx_flat = ctx_sum.reshape(N, C)

        attn = mm(ctx_flat, wo_ref[l]) + bo_ref[l]
        x1 = layernorm(src + attn, ln1w_ref[l], ln1b_ref[l])
        hid = jnp.maximum(mm(x1, w1_ref[l]) + b1_ref[l], 0.0)
        src = layernorm(x1 + mm(hid, w2_ref[l]) + b2_ref[l],
                        ln2w_ref[l], ln2b_ref[l])

    t_ref[...] = src                                             # encoder output

    # ---- fused 3x3 output conv + relu on the transformer output ----
    # y = relu(Scat @ concat_tap(t @ W_tap) + b); Scat is the (N, 9N) 0/1
    # zero-padded tap-gather matrix -> one batched dot + one K=9N deep matmul.
    t_b = jnp.broadcast_to(src.reshape(1, N, C), (9, N, C))
    tw = bdot(t_b, wconv_ref[...], (((2,), (1,)), ((0,), (0,))))  # (9, N, C)
    y = mm(scat_ref[...], tw.reshape(9 * N, C)) + bconv_ref[...]
    y_ref[...] = jnp.maximum(y, 0.0)


# ----------------------------- kernel wrappers -----------------------------
def fused_matmul(x, w, b, *, relu, tile_m=256):
    # Generic (N, K) @ (K, Cout) + bias (+ relu) kernel, tiled over tokens with a
    # "parallel" grid axis (megacore on v7x, small tiles for its 64 MiB VMEM).
    n, k = x.shape
    cout = w.shape[1]
    tm = tile_m if (n % tile_m == 0 and n > tile_m) else n
    return pl.pallas_call(
        partial(_fused_matmul_kernel, relu=relu),
        out_shape=jax.ShapeDtypeStruct((n, cout), _F32),
        grid=(n // tm,),
        in_specs=[
            pl.BlockSpec((tm, k), lambda i: (i, 0)),
            pl.BlockSpec((k, cout), lambda i: (0, 0)),
            pl.BlockSpec((1, cout), lambda i: (0, 0)),
        ],
        out_specs=pl.BlockSpec((tm, cout), lambda i: (i, 0)),
        compiler_params=pltpu.CompilerParams(
            dimension_semantics=("parallel",)),
    )(x.astype(_BF16), w.astype(_BF16), b.reshape(1, cout).astype(_F32))


def build_conv_gather(batch, h, w):
    # (N, 9N) 0/1 matrix: row n, column tap*N + m is 1 iff token m is the
    # (dy, dx)-neighbor of token n inside the same image (zero padding -> 0 row).
    n = batch * h * w
    s = np.zeros((n, 9 * n), np.float32)
    for b in range(batch):
        for y in range(h):
            for x in range(w):
                row = (b * h + y) * w + x
                for dy in range(3):
                    for dx in range(3):
                        yy, xx = y + dy - 1, x + dx - 1
                        if 0 <= yy < h and 0 <= xx < w:
                            col = (dy * 3 + dx) * n + (b * h + yy) * w + xx
                            s[row, col] = 1.0
    return jnp.asarray(s)


def transformer_branch(x_nhwc, params):
    b, h, w, cin = x_nhwc.shape
    c = CONV_DIM
    n = b * h * w
    pos = position_embedding_sine(b, h, w, c // 2).reshape(n, c).astype(_F32)
    hmask = jnp.asarray(
        (np.arange(c)[None, :] // (c // NHEADS)
         == np.arange(NHEADS)[:, None]).astype(np.float32))
    scat = build_conv_gather(b, h, w)
    lp = params["layers"]
    conv0 = params["output_convs"][0]
    args = [
        x_nhwc.reshape(n, cin),
        params["input_proj"]["w"], params["input_proj"]["b"], pos, hmask,
        lp["wq"], lp["bq"], lp["wk"], lp["bk"], lp["wv"], lp["bv"],
        lp["wo"], lp["bo"], lp["ln1w"], lp["ln1b"],
        lp["w1"], lp["b1"], lp["w2"], lp["b2"], lp["ln2w"], lp["ln2b"],
        conv0["w"].reshape(9, c, c), conv0["b"].reshape(1, c), scat,
    ]
    t, y = pl.pallas_call(
        partial(_transformer_branch_kernel,
                batch=b, nlayers=ENC_LAYERS, nheads=NHEADS),
        out_shape=(jax.ShapeDtypeStruct((n, c), _F32),
                   jax.ShapeDtypeStruct((n, c), _F32)),
        in_specs=[_vmem() for _ in args],
        out_specs=(_vmem(), _vmem()),
    )(*args)
    return t.reshape(b, h, w, c), y.reshape(b, h, w, c)


def im2col3x3(x_nhwc):
    # zero-padded 3x3 im2col, tap-major blocks along the channel dim
    b, h, w, c = x_nhwc.shape
    xp = jnp.pad(x_nhwc, ((0, 0), (1, 1), (1, 1), (0, 0)))
    taps = [xp[:, dy:dy + h, dx:dx + w, :] for dy in range(3) for dx in range(3)]
    return jnp.concatenate(taps, axis=-1).reshape(b * h * w, 9 * c)


def fpn_level(x_nhwc, y_prev, lat_w, lat_b, conv_w, conv_b):
    # Fused FPN level: relu(conv3x3(lateral1x1(x) + upsample(y_prev))) as a
    # single matmul.  The lateral weights are folded into the conv weights; the
    # lateral bias is folded into the upsampled y BEFORE im2col so that the
    # zero-padded taps stay exactly zero (matches Conv2d zero padding).
    b, h, w, cin = x_nhwc.shape
    c, cout = conv_w.shape[2], conv_w.shape[3]
    y_up = nearest_resize_nhwc(y_prev, h, w) + lat_b.reshape(1, 1, 1, c)
    cols = jnp.concatenate([im2col3x3(x_nhwc), im2col3x3(y_up)], axis=-1)
    wct = conv_w.reshape(9, c, cout)
    w_x = jnp.einsum("ic,tco->tio", lat_w, wct).reshape(9 * cin, cout)
    w_all = jnp.concatenate([w_x, wct.reshape(9 * c, cout)], axis=0)
    y = fused_matmul(cols, w_all, conv_b, relu=True)
    return y.reshape(b, h, w, cout)


def mask_features_conv(y_nhwc, mw, mb):
    b, h, w, c = y_nhwc.shape
    cout = mw.shape[-1]
    cols = im2col3x3(y_nhwc)
    out = fused_matmul(cols, mw.reshape(9 * c, cout), mb, relu=False)
    return out.reshape(b, h, w, cout)


# ----------------------------- plain-JAX glue -----------------------------
def position_embedding_sine(B, H, W, num_pos_feats, temperature=10000.0):
    # PositionEmbeddingSine(normalize=True, scale=2*pi), mask=None
    scale = 2.0 * math.pi
    eps = 1e-6
    y_embed = jnp.broadcast_to(
        jnp.arange(1, H + 1, dtype=_F32)[:, None], (H, W))
    x_embed = jnp.broadcast_to(
        jnp.arange(1, W + 1, dtype=_F32)[None, :], (H, W))
    y_embed = y_embed / (float(H) + eps) * scale
    x_embed = x_embed / (float(W) + eps) * scale
    dim_t = jnp.arange(num_pos_feats, dtype=_F32)
    dim_t = temperature ** (2.0 * jnp.floor(dim_t / 2.0) / num_pos_feats)
    pos_x = x_embed[:, :, None] / dim_t
    pos_y = y_embed[:, :, None] / dim_t
    pos_x = jnp.stack(
        (jnp.sin(pos_x[:, :, 0::2]), jnp.cos(pos_x[:, :, 1::2])), axis=3
    ).reshape(H, W, num_pos_feats)
    pos_y = jnp.stack(
        (jnp.sin(pos_y[:, :, 0::2]), jnp.cos(pos_y[:, :, 1::2])), axis=3
    ).reshape(H, W, num_pos_feats)
    pos = jnp.concatenate((pos_y, pos_x), axis=2)          # (H, W, 2*npf)
    return jnp.broadcast_to(pos[None], (B, H, W, 2 * num_pos_feats))


def nearest_resize_nhwc(x, out_h, out_w):
    # matches F.interpolate(mode='nearest'): src = floor(dst * in / out)
    B, H, W, C = x.shape
    rows = (jnp.arange(out_h) * H) // out_h
    cols = (jnp.arange(out_w) * W) // out_w
    return x[:, rows][:, :, cols]


# ----------------------------- parameters -----------------------------
def _uinit(key, shape, fan_in, fan_out):
    lim = math.sqrt(6.0 / (fan_in + fan_out))
    return jax.random.uniform(key, shape, _F32, -lim, lim)


def init_params(key):
    keys = iter(jax.random.split(key, 128))
    nk = lambda: next(keys)
    C = CONV_DIM
    L = ENC_LAYERS
    channels = [c for _, c, _ in FEATURE_SPECS]
    p = {}
    cin = channels[-1]
    p["input_proj"] = dict(w=_uinit(nk(), (cin, C), cin, C),
                           b=_uinit(nk(), (1, C), cin, C))

    def stk(shape, fi, fo):  # layer-stacked weights, (in, out) orientation
        return jnp.stack([_uinit(nk(), shape, fi, fo) for _ in range(L)])

    p["layers"] = dict(
        wq=stk((C, C), C, C), bq=jnp.zeros((L, 1, C), _F32),
        wk=stk((C, C), C, C), bk=jnp.zeros((L, 1, C), _F32),
        wv=stk((C, C), C, C), bv=jnp.zeros((L, 1, C), _F32),
        wo=stk((C, C), C, C), bo=jnp.zeros((L, 1, C), _F32),
        ln1w=jnp.ones((L, 1, C), _F32), ln1b=jnp.zeros((L, 1, C), _F32),
        w1=stk((C, DIM_FF), C, DIM_FF), b1=jnp.zeros((L, 1, DIM_FF), _F32),
        w2=stk((DIM_FF, C), DIM_FF, C), b2=jnp.zeros((L, 1, C), _F32),
        ln2w=jnp.ones((L, 1, C), _F32), ln2b=jnp.zeros((L, 1, C), _F32),
    )
    # lateral / output convs, reversed order (index 0 = coarsest level)
    lateral = [None]
    output = [dict(w=_uinit(nk(), (3, 3, C, C), 9 * C, C),
                   b=_uinit(nk(), (C,), 9 * C, C))]          # replaced layer_N
    for ch in channels[-2::-1]:
        lateral.append(dict(w=_uinit(nk(), (ch, C), ch, C),
                            b=_uinit(nk(), (C,), ch, C)))
        output.append(dict(w=_uinit(nk(), (3, 3, C, C), 9 * C, C),
                           b=_uinit(nk(), (C,), 9 * C, C)))
    p["lateral_convs"] = lateral
    p["output_convs"] = output
    p["mask_features"] = dict(
        w=_uinit(nk(), (3, 3, C, MASK_DIM), 9 * C, MASK_DIM),
        b=_uinit(nk(), (MASK_DIM,), 9 * C, MASK_DIM))
    return p


# ----------------------------- forward pass -----------------------------
def forward_features(features_nchw, params):
    # features_nchw: dict name -> (B, C, H, W), matching the PyTorch interface
    feats = {k: jnp.transpose(v, (0, 2, 3, 1)) for k, v in features_nchw.items()}
    in_features = [name for name, _, _ in FEATURE_SPECS]  # sorted by stride

    multi_scale = []
    y = None
    transformer_encoder_features = None

    for idx, f in enumerate(in_features[::-1]):  # coarsest first
        x = feats[f]
        if params["lateral_convs"][idx] is None:
            # fused transformer branch (input_proj + encoder + 3x3 conv)
            transformer_encoder_features, y = transformer_branch(x, params)
        else:
            lat = params["lateral_convs"][idx]
            outc = params["output_convs"][idx]
            y = fpn_level(x, y, lat["w"], lat["b"], outc["w"], outc["b"])
        if len(multi_scale) < 3:  # maskformer_num_feature_levels
            multi_scale.append(y)

    mask = mask_features_conv(y, params["mask_features"]["w"],
                              params["mask_features"]["b"])

    to_nchw = lambda a: jnp.transpose(a, (0, 3, 1, 2))
    return (
        to_nchw(mask),
        to_nchw(transformer_encoder_features),
        [to_nchw(m) for m in multi_scale],
    )


# ----------------------------- main -----------------------------
if __name__ == "__main__":
    key = jax.random.PRNGKey(0)
    k3, k4, k5, kp = jax.random.split(key, 4)
    B = 2
    features = {
        "res3": jax.random.normal(k3, (B, 8, 16, 16), jnp.float32),
        "res4": jax.random.normal(k4, (B, 12, 8, 8), jnp.float32),
        "res5": jax.random.normal(k5, (B, 16, 4, 4), jnp.float32),
    }
    params = init_params(kp)

    mask_feats, tr_feats, ms_feats = forward_features(features, params)

    jax.block_until_ready(mask_feats)
    jax.block_until_ready(tr_feats)
    for m in ms_feats:
        jax.block_until_ready(m)

    assert mask_feats.shape == (B, MASK_DIM, 16, 16)
    assert tr_feats.shape == (B, CONV_DIM, 4, 4)
    assert [m.shape for m in ms_feats] == [
        (B, CONV_DIM, 4, 4), (B, CONV_DIM, 8, 8), (B, CONV_DIM, 16, 16)
    ]
    print("KERNEL_OK")
</pallas_src>

<mosaic_0001>
module attributes {stable_mosaic.version = 11 : i64} {
  func.func @_transformer_branch_kernel(%arg0: memref<32x16xf32, #tpu.memory_space<vmem>>, %arg1: memref<16x32xf32, #tpu.memory_space<vmem>>, %arg2: memref<1x32xf32, #tpu.memory_space<vmem>>, %arg3: memref<32x32xf32, #tpu.memory_space<vmem>>, %arg4: memref<4x32xf32, #tpu.memory_space<vmem>>, %arg5: memref<2x32x32xf32, #tpu.memory_space<vmem>>, %arg6: memref<2x1x32xf32, #tpu.memory_space<vmem>>, %arg7: memref<2x32x32xf32, #tpu.memory_space<vmem>>, %arg8: memref<2x1x32xf32, #tpu.memory_space<vmem>>, %arg9: memref<2x32x32xf32, #tpu.memory_space<vmem>>, %arg10: memref<2x1x32xf32, #tpu.memory_space<vmem>>, %arg11: memref<2x32x32xf32, #tpu.memory_space<vmem>>, %arg12: memref<2x1x32xf32, #tpu.memory_space<vmem>>, %arg13: memref<2x1x32xf32, #tpu.memory_space<vmem>>, %arg14: memref<2x1x32xf32, #tpu.memory_space<vmem>>, %arg15: memref<2x32x64xf32, #tpu.memory_space<vmem>>, %arg16: memref<2x1x64xf32, #tpu.memory_space<vmem>>, %arg17: memref<2x64x32xf32, #tpu.memory_space<vmem>>, %arg18: memref<2x1x32xf32, #tpu.memory_space<vmem>>, %arg19: memref<2x1x32xf32, #tpu.memory_space<vmem>>, %arg20: memref<2x1x32xf32, #tpu.memory_space<vmem>>, %arg21: memref<9x32x32xf32, #tpu.memory_space<vmem>>, %arg22: memref<1x32xf32, #tpu.memory_space<vmem>>, %arg23: memref<32x288xf32, #tpu.memory_space<vmem>>, %arg24: memref<32x32xf32, #tpu.memory_space<vmem>>, %arg25: memref<32x32xf32, #tpu.memory_space<vmem>>) attributes {dimension_semantics = [], scalar_prefetch = 0 : i64, scratch_operands = 0 : i64, tpu.core_type = #tpu.core_type<tc>} {
    %c0 = arith.constant 0 : index
    %c0_0 = arith.constant 0 : index
    %0 = vector.load %arg0[%c0, %c0_0] : memref<32x16xf32, #tpu.memory_space<vmem>>, vector<32x16xf32>
    %c0_1 = arith.constant 0 : index
    %c0_2 = arith.constant 0 : index
    %1 = vector.load %arg1[%c0_1, %c0_2] : memref<16x32xf32, #tpu.memory_space<vmem>>, vector<16x32xf32>
    %2 = arith.truncf %0 : vector<32x16xf32> to vector<32x16xbf16>
    %3 = arith.truncf %1 : vector<16x32xf32> to vector<16x32xbf16>
    %cst = arith.constant dense<0.000000e+00> : vector<32x32xf32>
    %4 = tpu.matmul %2, %3, %cst {dimension_numbers = #tpu.dot_dimension_numbers<[1], [0], [0], [1], [0, 0, 1, 1], [], []>} : vector<32x16xbf16>, vector<16x32xbf16>, vector<32x32xf32> -> vector<32x32xf32>
    %c0_3 = arith.constant 0 : index
    %c0_4 = arith.constant 0 : index
    %5 = vector.load %arg2[%c0_3, %c0_4] : memref<1x32xf32, #tpu.memory_space<vmem>>, vector<1x32xf32>
    %6 = vector.broadcast %5 : vector<1x32xf32> to vector<32x32xf32>
    %7 = arith.addf %4, %6 : vector<32x32xf32>
    %c0_5 = arith.constant 0 : index
    %c0_6 = arith.constant 0 : index
    %8 = vector.load %arg3[%c0_5, %c0_6] : memref<32x32xf32, #tpu.memory_space<vmem>>, vector<32x32xf32>
    %c0_7 = arith.constant 0 : index
    %c0_8 = arith.constant 0 : index
    %9 = vector.load %arg4[%c0_7, %c0_8] : memref<4x32xf32, #tpu.memory_space<vmem>>, vector<4x32xf32>
    %10 = vector.shape_cast %9 : vector<4x32xf32> to vector<4x1x1x32xf32>
    %11 = arith.addf %7, %8 : vector<32x32xf32>
    %c0_9 = arith.constant 0 : index
    %c0_10 = arith.constant 0 : index
    %c0_11 = arith.constant 0 : index
    %12 = vector.load %arg5[%c0_9, %c0_10, %c0_11] : memref<2x32x32xf32, #tpu.memory_space<vmem>>, vector<1x32x32xf32>
    %13 = vector.shape_cast %12 : vector<1x32x32xf32> to vector<32x32xf32>
    %14 = arith.truncf %11 : vector<32x32xf32> to vector<32x32xbf16>
    %15 = arith.truncf %13 : vector<32x32xf32> to vector<32x32xbf16>
    %cst_12 = arith.constant dense<0.000000e+00> : vector<32x32xf32>
    %16 = tpu.matmul %14, %15, %cst_12 {dimension_numbers = #tpu.dot_dimension_numbers<[1], [0], [0], [1], [0, 0, 1, 1], [], []>} : vector<32x32xbf16>, vector<32x32xbf16>, vector<32x32xf32> -> vector<32x32xf32>
    %c0_13 = arith.constant 0 : index
    %c0_14 = arith.constant 0 : index
    %c0_15 = arith.constant 0 : index
    %17 = vector.load %arg6[%c0_13, %c0_14, %c0_15] : memref<2x1x32xf32, #tpu.memory_space<vmem>>, vector<1x1x32xf32>
    %18 = vector.shape_cast %17 : vector<1x1x32xf32> to vector<1x32xf32>
    %19 = vector.broadcast %18 : vector<1x32xf32> to vector<32x32xf32>
    %20 = arith.addf %16, %19 : vector<32x32xf32>
    %c0_16 = arith.constant 0 : index
    %c0_17 = arith.constant 0 : index
    %c0_18 = arith.constant 0 : index
    %21 = vector.load %arg7[%c0_16, %c0_17, %c0_18] : memref<2x32x32xf32, #tpu.memory_space<vmem>>, vector<1x32x32xf32>
    %22 = vector.shape_cast %21 : vector<1x32x32xf32> to vector<32x32xf32>
    %23 = arith.truncf %11 : vector<32x32xf32> to vector<32x32xbf16>
    %24 = arith.truncf %22 : vector<32x32xf32> to vector<32x32xbf16>
    %cst_19 = arith.constant dense<0.000000e+00> : vector<32x32xf32>
    %25 = tpu.matmul %23, %24, %cst_19 {dimension_numbers = #tpu.dot_dimension_numbers<[1], [0], [0], [1], [0, 0, 1, 1], [], []>} : vector<32x32xbf16>, vector<32x32xbf16>, vector<32x32xf32> -> vector<32x32xf32>
    %c0_20 = arith.constant 0 : index
    %c0_21 = arith.constant 0 : index
    %c0_22 = arith.constant 0 : index
    %26 = vector.load %arg8[%c0_20, %c0_21, %c0_22] : memref<2x1x32xf32, #tpu.memory_space<vmem>>, vector<1x1x32xf32>
    %27 = vector.shape_cast %26 : vector<1x1x32xf32> to vector<1x32xf32>
    %28 = vector.broadcast %27 : vector<1x32xf32> to vector<32x32xf32>
    %29 = arith.addf %25, %28 : vector<32x32xf32>
    %c0_23 = arith.constant 0 : index
    %c0_24 = arith.constant 0 : index
    %c0_25 = arith.constant 0 : index
    %30 = vector.load %arg9[%c0_23, %c0_24, %c0_25] : memref<2x32x32xf32, #tpu.memory_space<vmem>>, vector<1x32x32xf32>
    %31 = vector.shape_cast %30 : vector<1x32x32xf32> to vector<32x32xf32>
    %32 = arith.truncf %7 : vector<32x32xf32> to vector<32x32xbf16>
    %33 = arith.truncf %31 : vector<32x32xf32> to vector<32x32xbf16>
    %cst_26 = arith.constant dense<0.000000e+00> : vector<32x32xf32>
    %34 = tpu.matmul %32, %33, %cst_26 {dimension_numbers = #tpu.dot_dimension_numbers<[1], [0], [0], [1], [0, 0, 1, 1], [], []>} : vector<32x32xbf16>, vector<32x32xbf16>, vector<32x32xf32> -> vector<32x32xf32>
    %c0_27 = arith.constant 0 : index
    %c0_28 = arith.constant 0 : index
    %c0_29 = arith.constant 0 : index
    %35 = vector.load %arg10[%c0_27, %c0_28, %c0_29] : memref<2x1x32xf32, #tpu.memory_space<vmem>>, vector<1x1x32xf32>
    %36 = vector.shape_cast %35 : vector<1x1x32xf32> to vector<1x32xf32>
    %37 = vector.broadcast %36 : vector<1x32xf32> to vector<32x32xf32>
    %38 = arith.addf %34, %37 : vector<32x32xf32>
    %39 = vector.shape_cast %20 : vector<32x32xf32> to vector<2x16x32xf32>
    %40 = vector.shape_cast %29 : vector<32x32xf32> to vector<2x16x32xf32>
    %41 = vector.shape_cast %38 : vector<32x32xf32> to vector<2x16x32xf32>
    %42 = vector.shape_cast %39 : vector<2x16x32xf32> to vector<1x2x16x32xf32>
    %43 = vector.broadcast %42 : vector<1x2x16x32xf32> to vector<4x2x16x32xf32>
    %44 = vector.broadcast %10 : vector<4x1x1x32xf32> to vector<4x2x16x32xf32>
    %45 = arith.mulf %43, %44 : vector<4x2x16x32xf32>
    %cst_30 = arith.constant 0.353553385 : f32
    %46 = vector.broadcast %cst_30 : f32 to vector<4x2x16x32xf32>
    %47 = arith.mulf %45, %46 : vector<4x2x16x32xf32>
    %48 = vector.shape_cast %47 : vector<4x2x16x32xf32> to vector<8x16x32xf32>
    %49 = vector.shape_cast %41 : vector<2x16x32xf32> to vector<1x2x16x32xf32>
    %50 = vector.broadcast %49 : vector<1x2x16x32xf32> to vector<4x2x16x32xf32>
    %51 = vector.broadcast %10 : vector<4x1x1x32xf32> to vector<4x2x16x32xf32>
    %52 = arith.mulf %50, %51 : vector<4x2x16x32xf32>
    %53 = vector.shape_cast %52 : vector<4x2x16x32xf32> to vector<8x16x32xf32>
    %54 = vector.shape_cast %40 : vector<2x16x32xf32> to vector<1x2x16x32xf32>
    %55 = vector.shape_cast %54 : vector<1x2x16x32xf32> to vector<1x2x16x32xf32>
    %56 = vector.broadcast %55 : vector<1x2x16x32xf32> to vector<4x2x16x32xf32>
    %57 = vector.shape_cast %56 : vector<4x2x16x32xf32> to vector<8x16x32xf32>
    %58 = arith.truncf %48 : vector<8x16x32xf32> to vector<8x16x32xbf16>
    %59 = arith.truncf %57 : vector<8x16x32xf32> to vector<8x16x32xbf16>
    %cst_31 = arith.constant dense<0.000000e+00> : vector<8x16x16xf32>
    %60 = tpu.matmul %58, %59, %cst_31 {dimension_numbers = #tpu.dot_dimension_numbers<[2], [2], [1], [1], [0, 0, 0, 1, 1, 1], [0], [0]>} : vector<8x16x32xbf16>, vector<8x16x32xbf16>, vector<8x16x16xf32> -> vector<8x16x16xf32>
    %cst_32 = arith.constant dense<0xFF800000> : vector<8x16xf32>
    %61 = vector.multi_reduction <maximumf>, %60, %cst_32 [2] : vector<8x16x16xf32> to vector<8x16xf32>
    %62 = vector.shape_cast %61 : vector<8x16xf32> to vector<8x16x1xf32>
    %63 = vector.broadcast %62 : vector<8x16x1xf32> to vector<8x16x16xf32>
    %64 = arith.subf %60, %63 : vector<8x16x16xf32>
    %65 = math.exp %64 : vector<8x16x16xf32>
    %cst_33 = arith.constant dense<0.000000e+00> : vector<8x16xf32>
    %66 = vector.multi_reduction <add>, %65, %cst_33 [2] : vector<8x16x16xf32> to vector<8x16xf32>
    %67 = vector.shape_cast %66 : vector<8x16xf32> to vector<8x16x1xf32>
    %68 = tpu.reciprocal %67 {approx = true} : vector<8x16x1xf32> -> vector<8x16x1xf32>
    %69 = vector.broadcast %68 : vector<8x16x1xf32> to vector<8x16x16xf32>
    %70 = arith.mulf %65, %69 : vector<8x16x16xf32>
    %71 = arith.truncf %70 : vector<8x16x16xf32> to vector<8x16x16xbf16>
    %72 = arith.truncf %53 : vector<8x16x32xf32> to vector<8x16x32xbf16>
    %cst_34 = arith.constant dense<0.000000e+00> : vector<8x16x32xf32>
    %73 = tpu.matmul %71, %72, %cst_34 {dimension_numbers = #tpu.dot_dimension_numbers<[2], [1], [1], [2], [0, 0, 0, 1, 1, 2], [0], [0]>} : vector<8x16x16xbf16>, vector<8x16x32xbf16>, vector<8x16x32xf32> -> vector<8x16x32xf32>
    %74 = vector.extract_strided_slice %73 {offsets = [0, 0, 0], sizes = [2, 16, 32], strides = [1, 1, 1]} : vector<8x16x32xf32> to vector<2x16x32xf32>
    %75 = vector.extract_strided_slice %73 {offsets = [2, 0, 0], sizes = [2, 16, 32], strides = [1, 1, 1]} : vector<8x16x32xf32> to vector<2x16x32xf32>
    %76 = arith.addf %74, %75 : vector<2x16x32xf32>
    %77 = vector.extract_strided_slice %73 {offsets = [4, 0, 0], sizes = [2, 16, 32], strides = [1, 1, 1]} : vector<8x16x32xf32> to vector<2x16x32xf32>
    %78 = arith.addf %76, %77 : vector<2x16x32xf32>
    %79 = vector.extract_strided_slice %73 {offsets = [6, 0, 0], sizes = [2, 16, 32], strides = [1, 1, 1]} : vector<8x16x32xf32> to vector<2x16x32xf32>
    %80 = arith.addf %78, %79 : vector<2x16x32xf32>
    %81 = vector.shape_cast %80 : vector<2x16x32xf32> to vector<32x32xf32>
    %c0_35 = arith.constant 0 : index
    %c0_36 = arith.constant 0 : index
    %c0_37 = arith.constant 0 : index
    %82 = vector.load %arg11[%c0_35, %c0_36, %c0_37] : memref<2x32x32xf32, #tpu.memory_space<vmem>>, vector<1x32x32xf32>
    %83 = vector.shape_cast %82 : vector<1x32x32xf32> to vector<32x32xf32>
    %84 = arith.truncf %81 : vector<32x32xf32> to vector<32x32xbf16>
    %85 = arith.truncf %83 : vector<32x32xf32> to vector<32x32xbf16>
    %cst_38 = arith.constant dense<0.000000e+00> : vector<32x32xf32>
    %86 = tpu.matmul %84, %85, %cst_38 {dimension_numbers = #tpu.dot_dimension_numbers<[1], [0], [0], [1], [0, 0, 1, 1], [], []>} : vector<32x32xbf16>, vector<32x32xbf16>, vector<32x32xf32> -> vector<32x32xf32>
    %c0_39 = arith.constant 0 : index
    %c0_40 = arith.constant 0 : index
    %c0_41 = arith.constant 0 : index
    %87 = vector.load %arg12[%c0_39, %c0_40, %c0_41] : memref<2x1x32xf32, #tpu.memory_space<vmem>>, vector<1x1x32xf32>
    %88 = vector.shape_cast %87 : vector<1x1x32xf32> to vector<1x32xf32>
    %89 = vector.broadcast %88 : vector<1x32xf32> to vector<32x32xf32>
    %90 = arith.addf %86, %89 : vector<32x32xf32>
    %91 = arith.addf %7, %90 : vector<32x32xf32>
    %c0_42 = arith.constant 0 : index
    %c0_43 = arith.constant 0 : index
    %c0_44 = arith.constant 0 : index
    %92 = vector.load %arg13[%c0_42, %c0_43, %c0_44] : memref<2x1x32xf32, #tpu.memory_space<vmem>>, vector<1x1x32xf32>
    %93 = vector.shape_cast %92 : vector<1x1x32xf32> to vector<1x32xf32>
    %c0_45 = arith.constant 0 : index
    %c0_46 = arith.constant 0 : index
    %c0_47 = arith.constant 0 : index
    %94 = vector.load %arg14[%c0_45, %c0_46, %c0_47] : memref<2x1x32xf32, #tpu.memory_space<vmem>>, vector<1x1x32xf32>
    %95 = vector.shape_cast %94 : vector<1x1x32xf32> to vector<1x32xf32>
    %cst_48 = arith.constant dense<0.000000e+00> : vector<32xf32>
    %96 = vector.multi_reduction <add>, %91, %cst_48 [1] : vector<32x32xf32> to vector<32xf32>
    %97 = vector.shape_cast %96 : vector<32xf32> to vector<32x1xf32>
    %cst_49 = arith.constant 3.200000e+01 : f32
    %98 = vector.broadcast %cst_49 : f32 to vector<32x1xf32>
    %99 = arith.divf %97, %98 : vector<32x1xf32>
    %100 = vector.broadcast %99 : vector<32x1xf32> to vector<32x32xf32>
    %101 = arith.subf %91, %100 : vector<32x32xf32>
    %102 = arith.mulf %101, %101 : vector<32x32xf32>
    %cst_50 = arith.constant dense<0.000000e+00> : vector<32xf32>
    %103 = vector.multi_reduction <add>, %102, %cst_50 [1] : vector<32x32xf32> to vector<32xf32>
    %104 = vector.shape_cast %103 : vector<32xf32> to vector<32x1xf32>
    %cst_51 = arith.constant 3.200000e+01 : f32
    %105 = vector.broadcast %cst_51 : f32 to vector<32x1xf32>
    %106 = arith.divf %104, %105 : vector<32x1xf32>
    %cst_52 = arith.constant 9.99999974E-6 : f32
    %107 = vector.broadcast %cst_52 : f32 to vector<32x1xf32>
    %108 = arith.addf %106, %107 : vector<32x1xf32>
    %109 = math.rsqrt %108 : vector<32x1xf32>
    %110 = vector.broadcast %109 : vector<32x1xf32> to vector<32x32xf32>
    %111 = arith.mulf %101, %110 : vector<32x32xf32>
    %112 = vector.broadcast %93 : vector<1x32xf32> to vector<32x32xf32>
    %113 = arith.mulf %111, %112 : vector<32x32xf32>
    %114 = vector.broadcast %95 : vector<1x32xf32> to vector<32x32xf32>
    %115 = arith.addf %113, %114 : vector<32x32xf32>
    %c0_53 = arith.constant 0 : index
    %c0_54 = arith.constant 0 : index
    %c0_55 = arith.constant 0 : index
    %116 = vector.load %arg15[%c0_53, %c0_54, %c0_55] : memref<2x32x64xf32, #tpu.memory_space<vmem>>, vector<1x32x64xf32>
    %117 = vector.shape_cast %116 : vector<1x32x64xf32> to vector<32x64xf32>
    %118 = arith.truncf %115 : vector<32x32xf32> to vector<32x32xbf16>
    %119 = arith.truncf %117 : vector<32x64xf32> to vector<32x64xbf16>
    %cst_56 = arith.constant dense<0.000000e+00> : vector<32x64xf32>
    %120 = tpu.matmul %118, %119, %cst_56 {dimension_numbers = #tpu.dot_dimension_numbers<[1], [0], [0], [1], [0, 0, 1, 1], [], []>} : vector<32x32xbf16>, vector<32x64xbf16>, vector<32x64xf32> -> vector<32x64xf32>
    %c0_57 = arith.constant 0 : index
    %c0_58 = arith.constant 0 : index
    %c0_59 = arith.constant 0 : index
    %121 = vector.load %arg16[%c0_57, %c0_58, %c0_59] : memref<2x1x64xf32, #tpu.memory_space<vmem>>, vector<1x1x64xf32>
    %122 = vector.shape_cast %121 : vector<1x1x64xf32> to vector<1x64xf32>
    %123 = vector.broadcast %122 : vector<1x64xf32> to vector<32x64xf32>
    %124 = arith.addf %120, %123 : vector<32x64xf32>
    %cst_60 = arith.constant 0.000000e+00 : f32
    %125 = vector.broadcast %cst_60 : f32 to vector<32x64xf32>
    %126 = arith.maximumf %124, %125 : vector<32x64xf32>
    %c0_61 = arith.constant 0 : index
    %c0_62 = arith.constant 0 : index
    %c0_63 = arith.constant 0 : index
    %127 = vector.load %arg17[%c0_61, %c0_62, %c0_63] : memref<2x64x32xf32, #tpu.memory_space<vmem>>, vector<1x64x32xf32>
    %128 = vector.shape_cast %127 : vector<1x64x32xf32> to vector<64x32xf32>
    %129 = arith.truncf %126 : vector<32x64xf32> to vector<32x64xbf16>
    %130 = arith.truncf %128 : vector<64x32xf32> to vector<64x32xbf16>
    %cst_64 = arith.constant dense<0.000000e+00> : vector<32x32xf32>
    %131 = tpu.matmul %129, %130, %cst_64 {dimension_numbers = #tpu.dot_dimension_numbers<[1], [0], [0], [1], [0, 0, 1, 1], [], []>} : vector<32x64xbf16>, vector<64x32xbf16>, vector<32x32xf32> -> vector<32x32xf32>
    %132 = arith.addf %115, %131 : vector<32x32xf32>
    %c0_65 = arith.constant 0 : index
    %c0_66 = arith.constant 0 : index
    %c0_67 = arith.constant 0 : index
    %133 = vector.load %arg18[%c0_65, %c0_66, %c0_67] : memref<2x1x32xf32, #tpu.memory_space<vmem>>, vector<1x1x32xf32>
    %134 = vector.shape_cast %133 : vector<1x1x32xf32> to vector<1x32xf32>
    %135 = vector.broadcast %134 : vector<1x32xf32> to vector<32x32xf32>
    %136 = arith.addf %132, %135 : vector<32x32xf32>
    %c0_68 = arith.constant 0 : index
    %c0_69 = arith.constant 0 : index
    %c0_70 = arith.constant 0 : index
    %137 = vector.load %arg19[%c0_68, %c0_69, %c0_70] : memref<2x1x32xf32, #tpu.memory_space<vmem>>, vector<1x1x32xf32>
    %138 = vector.shape_cast %137 : vector<1x1x32xf32> to vector<1x32xf32>
    %c0_71 = arith.constant 0 : index
    %c0_72 = arith.constant 0 : index
    %c0_73 = arith.constant 0 : index
    %139 = vector.load %arg20[%c0_71, %c0_72, %c0_73] : memref<2x1x32xf32, #tpu.memory_space<vmem>>, vector<1x1x32xf32>
    %140 = vector.shape_cast %139 : vector<1x1x32xf32> to vector<1x32xf32>
    %cst_74 = arith.constant dense<0.000000e+00> : vector<32xf32>
    %141 = vector.multi_reduction <add>, %136, %cst_74 [1] : vector<32x32xf32> to vector<32xf32>
    %142 = vector.shape_cast %141 : vector<32xf32> to vector<32x1xf32>
    %cst_75 = arith.constant 3.200000e+01 : f32
    %143 = vector.broadcast %cst_75 : f32 to vector<32x1xf32>
    %144 = arith.divf %142, %143 : vector<32x1xf32>
    %145 = vector.broadcast %144 : vector<32x1xf32> to vector<32x32xf32>
    %146 = arith.subf %136, %145 : vector<32x32xf32>
    %147 = arith.mulf %146, %146 : vector<32x32xf32>
    %cst_76 = arith.constant dense<0.000000e+00> : vector<32xf32>
    %148 = vector.multi_reduction <add>, %147, %cst_76 [1] : vector<32x32xf32> to vector<32xf32>
    %149 = vector.shape_cast %148 : vector<32xf32> to vector<32x1xf32>
    %cst_77 = arith.constant 3.200000e+01 : f32
    %150 = vector.broadcast %cst_77 : f32 to vector<32x1xf32>
    %151 = arith.divf %149, %150 : vector<32x1xf32>
    %cst_78 = arith.constant 9.99999974E-6 : f32
    %152 = vector.broadcast %cst_78 : f32 to vector<32x1xf32>
    %153 = arith.addf %151, %152 : vector<32x1xf32>
    %154 = math.rsqrt %153 : vector<32x1xf32>
    %155 = vector.broadcast %154 : vector<32x1xf32> to vector<32x32xf32>
    %156 = arith.mulf %146, %155 : vector<32x32xf32>
    %157 = vector.broadcast %138 : vector<1x32xf32> to vector<32x32xf32>
    %158 = arith.mulf %156, %157 : vector<32x32xf32>
    %159 = vector.broadcast %140 : vector<1x32xf32> to vector<32x32xf32>
    %160 = arith.addf %158, %159 : vector<32x32xf32>
    %161 = arith.addf %160, %8 : vector<32x32xf32>
    %c1 = arith.constant 1 : index
    %c0_79 = arith.constant 0 : index
    %c0_80 = arith.constant 0 : index
    %162 = vector.load %arg5[%c1, %c0_79, %c0_80] : memref<2x32x32xf32, #tpu.memory_space<vmem>>, vector<1x32x32xf32>
    %163 = vector.shape_cast %162 : vector<1x32x32xf32> to vector<32x32xf32>
    %164 = arith.truncf %161 : vector<32x32xf32> to vector<32x32xbf16>
    %165 = arith.truncf %163 : vector<32x32xf32> to vector<32x32xbf16>
    %cst_81 = arith.constant dense<0.000000e+00> : vector<32x32xf32>
    %166 = tpu.matmul %164, %165, %cst_81 {dimension_numbers = #tpu.dot_dimension_numbers<[1], [0], [0], [1], [0, 0, 1, 1], [], []>} : vector<32x32xbf16>, vector<32x32xbf16>, vector<32x32xf32> -> vector<32x32xf32>
    %c1_82 = arith.constant 1 : index
    %c0_83 = arith.constant 0 : index
    %c0_84 = arith.constant 0 : index
    %167 = vector.load %arg6[%c1_82, %c0_83, %c0_84] : memref<2x1x32xf32, #tpu.memory_space<vmem>>, vector<1x1x32xf32>
    %168 = vector.shape_cast %167 : vector<1x1x32xf32> to vector<1x32xf32>
    %169 = vector.broadcast %168 : vector<1x32xf32> to vector<32x32xf32>
    %170 = arith.addf %166, %169 : vector<32x32xf32>
    %c1_85 = arith.constant 1 : index
    %c0_86 = arith.constant 0 : index
    %c0_87 = arith.constant 0 : index
    %171 = vector.load %arg7[%c1_85, %c0_86, %c0_87] : memref<2x32x32xf32, #tpu.memory_space<vmem>>, vector<1x32x32xf32>
    %172 = vector.shape_cast %171 : vector<1x32x32xf32> to vector<32x32xf32>
    %173 = arith.truncf %161 : vector<32x32xf32> to vector<32x32xbf16>
    %174 = arith.truncf %172 : vector<32x32xf32> to vector<32x32xbf16>
    %cst_88 = arith.constant dense<0.000000e+00> : vector<32x32xf32>
    %175 = tpu.matmul %173, %174, %cst_88 {dimension_numbers = #tpu.dot_dimension_numbers<[1], [0], [0], [1], [0, 0, 1, 1], [], []>} : vector<32x32xbf16>, vector<32x32xbf16>, vector<32x32xf32> -> vector<32x32xf32>
    %c1_89 = arith.constant 1 : index
    %c0_90 = arith.constant 0 : index
    %c0_91 = arith.constant 0 : index
    %176 = vector.load %arg8[%c1_89, %c0_90, %c0_91] : memref<2x1x32xf32, #tpu.memory_space<vmem>>, vector<1x1x32xf32>
    %177 = vector.shape_cast %176 : vector<1x1x32xf32> to vector<1x32xf32>
    %178 = vector.broadcast %177 : vector<1x32xf32> to vector<32x32xf32>
    %179 = arith.addf %175, %178 : vector<32x32xf32>
    %c1_92 = arith.constant 1 : index
    %c0_93 = arith.constant 0 : index
    %c0_94 = arith.constant 0 : index
    %180 = vector.load %arg9[%c1_92, %c0_93, %c0_94] : memref<2x32x32xf32, #tpu.memory_space<vmem>>, vector<1x32x32xf32>
    %181 = vector.shape_cast %180 : vector<1x32x32xf32> to vector<32x32xf32>
    %182 = arith.truncf %160 : vector<32x32xf32> to vector<32x32xbf16>
    %183 = arith.truncf %181 : vector<32x32xf32> to vector<32x32xbf16>
    %cst_95 = arith.constant dense<0.000000e+00> : vector<32x32xf32>
    %184 = tpu.matmul %182, %183, %cst_95 {dimension_numbers = #tpu.dot_dimension_numbers<[1], [0], [0], [1], [0, 0, 1, 1], [], []>} : vector<32x32xbf16>, vector<32x32xbf16>, vector<32x32xf32> -> vector<32x32xf32>
    %c1_96 = arith.constant 1 : index
    %c0_97 = arith.constant 0 : index
    %c0_98 = arith.constant 0 : index
    %185 = vector.load %arg10[%c1_96, %c0_97, %c0_98] : memref<2x1x32xf32, #tpu.memory_space<vmem>>, vector<1x1x32xf32>
    %186 = vector.shape_cast %185 : vector<1x1x32xf32> to vector<1x32xf32>
    %187 = vector.broadcast %186 : vector<1x32xf32> to vector<32x32xf32>
    %188 = arith.addf %184, %187 : vector<32x32xf32>
    %189 = vector.shape_cast %170 : vector<32x32xf32> to vector<2x16x32xf32>
    %190 = vector.shape_cast %179 : vector<32x32xf32> to vector<2x16x32xf32>
    %191 = vector.shape_cast %188 : vector<32x32xf32> to vector<2x16x32xf32>
    %192 = vector.shape_cast %189 : vector<2x16x32xf32> to vector<1x2x16x32xf32>
    %193 = vector.broadcast %192 : vector<1x2x16x32xf32> to vector<4x2x16x32xf32>
    %194 = vector.broadcast %10 : vector<4x1x1x32xf32> to vector<4x2x16x32xf32>
    %195 = arith.mulf %193, %194 : vector<4x2x16x32xf32>
    %cst_99 = arith.constant 0.353553385 : f32
    %196 = vector.broadcast %cst_99 : f32 to vector<4x2x16x32xf32>
    %197 = arith.mulf %195, %196 : vector<4x2x16x32xf32>
    %198 = vector.shape_cast %197 : vector<4x2x16x32xf32> to vector<8x16x32xf32>
    %199 = vector.shape_cast %191 : vector<2x16x32xf32> to vector<1x2x16x32xf32>
    %200 = vector.broadcast %199 : vector<1x2x16x32xf32> to vector<4x2x16x32xf32>
    %201 = vector.broadcast %10 : vector<4x1x1x32xf32> to vector<4x2x16x32xf32>
    %202 = arith.mulf %200, %201 : vector<4x2x16x32xf32>
    %203 = vector.shape_cast %202 : vector<4x2x16x32xf32> to vector<8x16x32xf32>
    %204 = vector.shape_cast %190 : vector<2x16x32xf32> to vector<1x2x16x32xf32>
    %205 = vector.shape_cast %204 : vector<1x2x16x32xf32> to vector<1x2x16x32xf32>
    %206 = vector.broadcast %205 : vector<1x2x16x32xf32> to vector<4x2x16x32xf32>
    %207 = vector.shape_cast %206 : vector<4x2x16x32xf32> to vector<8x16x32xf32>
    %208 = arith.truncf %198 : vector<8x16x32xf32> to vector<8x16x32xbf16>
    %209 = arith.truncf %207 : vector<8x16x32xf32> to vector<8x16x32xbf16>
    %cst_100 = arith.constant dense<0.000000e+00> : vector<8x16x16xf32>
    %210 = tpu.matmul %208, %209, %cst_100 {dimension_numbers = #tpu.dot_dimension_numbers<[2], [2], [1], [1], [0, 0, 0, 1, 1, 1], [0], [0]>} : vector<8x16x32xbf16>, vector<8x16x32xbf16>, vector<8x16x16xf32> -> vector<8x16x16xf32>
    %cst_101 = arith.constant dense<0xFF800000> : vector<8x16xf32>
    %211 = vector.multi_reduction <maximumf>, %210, %cst_101 [2] : vector<8x16x16xf32> to vector<8x16xf32>
    %212 = vector.shape_cast %211 : vector<8x16xf32> to vector<8x16x1xf32>
    %213 = vector.broadcast %212 : vector<8x16x1xf32> to vector<8x16x16xf32>
    %214 = arith.subf %210, %213 : vector<8x16x16xf32>
    %215 = math.exp %214 : vector<8x16x16xf32>
    %cst_102 = arith.constant dense<0.000000e+00> : vector<8x16xf32>
    %216 = vector.multi_reduction <add>, %215, %cst_102 [2] : vector<8x16x16xf32> to vector<8x16xf32>
    %217 = vector.shape_cast %216 : vector<8x16xf32> to vector<8x16x1xf32>
    %218 = tpu.reciprocal %217 {approx = true} : vector<8x16x1xf32> -> vector<8x16x1xf32>
    %219 = vector.broadcast %218 : vector<8x16x1xf32> to vector<8x16x16xf32>
    %220 = arith.mulf %215, %219 : vector<8x16x16xf32>
    %221 = arith.truncf %220 : vector<8x16x16xf32> to vector<8x16x16xbf16>
    %222 = arith.truncf %203 : vector<8x16x32xf32> to vector<8x16x32xbf16>
    %cst_103 = arith.constant dense<0.000000e+00> : vector<8x16x32xf32>
    %223 = tpu.matmul %221, %222, %cst_103 {dimension_numbers = #tpu.dot_dimension_numbers<[2], [1], [1], [2], [0, 0, 0, 1, 1, 2], [0], [0]>} : vector<8x16x16xbf16>, vector<8x16x32xbf16>, vector<8x16x32xf32> -> vector<8x16x32xf32>
    %224 = vector.extract_strided_slice %223 {offsets = [0, 0, 0], sizes = [2, 16, 32], strides = [1, 1, 1]} : vector<8x16x32xf32> to vector<2x16x32xf32>
    %225 = vector.extract_strided_slice %223 {offsets = [2, 0, 0], sizes = [2, 16, 32], strides = [1, 1, 1]} : vector<8x16x32xf32> to vector<2x16x32xf32>
    %226 = arith.addf %224, %225 : vector<2x16x32xf32>
    %227 = vector.extract_strided_slice %223 {offsets = [4, 0, 0], sizes = [2, 16, 32], strides = [1, 1, 1]} : vector<8x16x32xf32> to vector<2x16x32xf32>
    %228 = arith.addf %226, %227 : vector<2x16x32xf32>
    %229 = vector.extract_strided_slice %223 {offsets = [6, 0, 0], sizes = [2, 16, 32], strides = [1, 1, 1]} : vector<8x16x32xf32> to vector<2x16x32xf32>
    %230 = arith.addf %228, %229 : vector<2x16x32xf32>
    %231 = vector.shape_cast %230 : vector<2x16x32xf32> to vector<32x32xf32>
    %c1_104 = arith.constant 1 : index
    %c0_105 = arith.constant 0 : index
    %c0_106 = arith.constant 0 : index
    %232 = vector.load %arg11[%c1_104, %c0_105, %c0_106] : memref<2x32x32xf32, #tpu.memory_space<vmem>>, vector<1x32x32xf32>
    %233 = vector.shape_cast %232 : vector<1x32x32xf32> to vector<32x32xf32>
    %234 = arith.truncf %231 : vector<32x32xf32> to vector<32x32xbf16>
    %235 = arith.truncf %233 : vector<32x32xf32> to vector<32x32xbf16>
    %cst_107 = arith.constant dense<0.000000e+00> : vector<32x32xf32>
    %236 = tpu.matmul %234, %235, %cst_107 {dimension_numbers = #tpu.dot_dimension_numbers<[1], [0], [0], [1], [0, 0, 1, 1], [], []>} : vector<32x32xbf16>, vector<32x32xbf16>, vector<32x32xf32> -> vector<32x32xf32>
    %c1_108 = arith.constant 1 : index
    %c0_109 = arith.constant 0 : index
    %c0_110 = arith.constant 0 : index
    %237 = vector.load %arg12[%c1_108, %c0_109, %c0_110] : memref<2x1x32xf32, #tpu.memory_space<vmem>>, vector<1x1x32xf32>
    %238 = vector.shape_cast %237 : vector<1x1x32xf32> to vector<1x32xf32>
    %239 = vector.broadcast %238 : vector<1x32xf32> to vector<32x32xf32>
    %240 = arith.addf %236, %239 : vector<32x32xf32>
    %241 = arith.addf %160, %240 : vector<32x32xf32>
    %c1_111 = arith.constant 1 : index
    %c0_112 = arith.constant 0 : index
    %c0_113 = arith.constant 0 : index
    %242 = vector.load %arg13[%c1_111, %c0_112, %c0_113] : memref<2x1x32xf32, #tpu.memory_space<vmem>>, vector<1x1x32xf32>
    %243 = vector.shape_cast %242 : vector<1x1x32xf32> to vector<1x32xf32>
    %c1_114 = arith.constant 1 : index
    %c0_115 = arith.constant 0 : index
    %c0_116 = arith.constant 0 : index
    %244 = vector.load %arg14[%c1_114, %c0_115, %c0_116] : memref<2x1x32xf32, #tpu.memory_space<vmem>>, vector<1x1x32xf32>
    %245 = vector.shape_cast %244 : vector<1x1x32xf32> to vector<1x32xf32>
    %cst_117 = arith.constant dense<0.000000e+00> : vector<32xf32>
    %246 = vector.multi_reduction <add>, %241, %cst_117 [1] : vector<32x32xf32> to vector<32xf32>
    %247 = vector.shape_cast %246 : vector<32xf32> to vector<32x1xf32>
    %cst_118 = arith.constant 3.200000e+01 : f32
    %248 = vector.broadcast %cst_118 : f32 to vector<32x1xf32>
    %249 = arith.divf %247, %248 : vector<32x1xf32>
    %250 = vector.broadcast %249 : vector<32x1xf32> to vector<32x32xf32>
    %251 = arith.subf %241, %250 : vector<32x32xf32>
    %252 = arith.mulf %251, %251 : vector<32x32xf32>
    %cst_119 = arith.constant dense<0.000000e+00> : vector<32xf32>
    %253 = vector.multi_reduction <add>, %252, %cst_119 [1] : vector<32x32xf32> to vector<32xf32>
    %254 = vector.shape_cast %253 : vector<32xf32> to vector<32x1xf32>
    %cst_120 = arith.constant 3.200000e+01 : f32
    %255 = vector.broadcast %cst_120 : f32 to vector<32x1xf32>
    %256 = arith.divf %254, %255 : vector<32x1xf32>
    %cst_121 = arith.constant 9.99999974E-6 : f32
    %257 = vector.broadcast %cst_121 : f32 to vector<32x1xf32>
    %258 = arith.addf %256, %257 : vector<32x1xf32>
    %259 = math.rsqrt %258 : vector<32x1xf32>
    %260 = vector.broadcast %259 : vector<32x1xf32> to vector<32x32xf32>
    %261 = arith.mulf %251, %260 : vector<32x32xf32>
    %262 = vector.broadcast %243 : vector<1x32xf32> to vector<32x32xf32>
    %263 = arith.mulf %261, %262 : vector<32x32xf32>
    %264 = vector.broadcast %245 : vector<1x32xf32> to vector<32x32xf32>
    %265 = arith.addf %263, %264 : vector<32x32xf32>
    %c1_122 = arith.constant 1 : index
    %c0_123 = arith.constant 0 : index
    %c0_124 = arith.constant 0 : index
    %266 = vector.load %arg15[%c1_122, %c0_123, %c0_124] : memref<2x32x64xf32, #tpu.memory_space<vmem>>, vector<1x32x64xf32>
    %267 = vector.shape_cast %266 : vector<1x32x64xf32> to vector<32x64xf32>
    %268 = arith.truncf %265 : vector<32x32xf32> to vector<32x32xbf16>
    %269 = arith.truncf %267 : vector<32x64xf32> to vector<32x64xbf16>
    %cst_125 = arith.constant dense<0.000000e+00> : vector<32x64xf32>
    %270 = tpu.matmul %268, %269, %cst_125 {dimension_numbers = #tpu.dot_dimension_numbers<[1], [0], [0], [1], [0, 0, 1, 1], [], []>} : vector<32x32xbf16>, vector<32x64xbf16>, vector<32x64xf32> -> vector<32x64xf32>
    %c1_126 = arith.constant 1 : index
    %c0_127 = arith.constant 0 : index
    %c0_128 = arith.constant 0 : index
    %271 = vector.load %arg16[%c1_126, %c0_127, %c0_128] : memref<2x1x64xf32, #tpu.memory_space<vmem>>, vector<1x1x64xf32>
    %272 = vector.shape_cast %271 : vector<1x1x64xf32> to vector<1x64xf32>
    %273 = vector.broadcast %272 : vector<1x64xf32> to vector<32x64xf32>
    %274 = arith.addf %270, %273 : vector<32x64xf32>
    %cst_129 = arith.constant 0.000000e+00 : f32
    %275 = vector.broadcast %cst_129 : f32 to vector<32x64xf32>
    %276 = arith.maximumf %274, %275 : vector<32x64xf32>
    %c1_130 = arith.constant 1 : index
    %c0_131 = arith.constant 0 : index
    %c0_132 = arith.constant 0 : index
    %277 = vector.load %arg17[%c1_130, %c0_131, %c0_132] : memref<2x64x32xf32, #tpu.memory_space<vmem>>, vector<1x64x32xf32>
    %278 = vector.shape_cast %277 : vector<1x64x32xf32> to vector<64x32xf32>
    %279 = arith.truncf %276 : vector<32x64xf32> to vector<32x64xbf16>
    %280 = arith.truncf %278 : vector<64x32xf32> to vector<64x32xbf16>
    %cst_133 = arith.constant dense<0.000000e+00> : vector<32x32xf32>
    %281 = tpu.matmul %279, %280, %cst_133 {dimension_numbers = #tpu.dot_dimension_numbers<[1], [0], [0], [1], [0, 0, 1, 1], [], []>} : vector<32x64xbf16>, vector<64x32xbf16>, vector<32x32xf32> -> vector<32x32xf32>
    %282 = arith.addf %265, %281 : vector<32x32xf32>
    %c1_134 = arith.constant 1 : index
    %c0_135 = arith.constant 0 : index
    %c0_136 = arith.constant 0 : index
    %283 = vector.load %arg18[%c1_134, %c0_135, %c0_136] : memref<2x1x32xf32, #tpu.memory_space<vmem>>, vector<1x1x32xf32>
    %284 = vector.shape_cast %283 : vector<1x1x32xf32> to vector<1x32xf32>
    %285 = vector.broadcast %284 : vector<1x32xf32> to vector<32x32xf32>
    %286 = arith.addf %282, %285 : vector<32x32xf32>
    %c1_137 = arith.constant 1 : index
    %c0_138 = arith.constant 0 : index
    %c0_139 = arith.constant 0 : index
    %287 = vector.load %arg19[%c1_137, %c0_138, %c0_139] : memref<2x1x32xf32, #tpu.memory_space<vmem>>, vector<1x1x32xf32>
    %288 = vector.shape_cast %287 : vector<1x1x32xf32> to vector<1x32xf32>
    %c1_140 = arith.constant 1 : index
    %c0_141 = arith.constant 0 : index
    %c0_142 = arith.constant 0 : index
    %289 = vector.load %arg20[%c1_140, %c0_141, %c0_142] : memref<2x1x32xf32, #tpu.memory_space<vmem>>, vector<1x1x32xf32>
    %290 = vector.shape_cast %289 : vector<1x1x32xf32> to vector<1x32xf32>
    %cst_143 = arith.constant dense<0.000000e+00> : vector<32xf32>
    %291 = vector.multi_reduction <add>, %286, %cst_143 [1] : vector<32x32xf32> to vector<32xf32>
    %292 = vector.shape_cast %291 : vector<32xf32> to vector<32x1xf32>
    %cst_144 = arith.constant 3.200000e+01 : f32
    %293 = vector.broadcast %cst_144 : f32 to vector<32x1xf32>
    %294 = arith.divf %292, %293 : vector<32x1xf32>
    %295 = vector.broadcast %294 : vector<32x1xf32> to vector<32x32xf32>
    %296 = arith.subf %286, %295 : vector<32x32xf32>
    %297 = arith.mulf %296, %296 : vector<32x32xf32>
    %cst_145 = arith.constant dense<0.000000e+00> : vector<32xf32>
    %298 = vector.multi_reduction <add>, %297, %cst_145 [1] : vector<32x32xf32> to vector<32xf32>
    %299 = vector.shape_cast %298 : vector<32xf32> to vector<32x1xf32>
    %cst_146 = arith.constant 3.200000e+01 : f32
    %300 = vector.broadcast %cst_146 : f32 to vector<32x1xf32>
    %301 = arith.divf %299, %300 : vector<32x1xf32>
    %cst_147 = arith.constant 9.99999974E-6 : f32
    %302 = vector.broadcast %cst_147 : f32 to vector<32x1xf32>
    %303 = arith.addf %301, %302 : vector<32x1xf32>
    %304 = math.rsqrt %303 : vector<32x1xf32>
    %305 = vector.broadcast %304 : vector<32x1xf32> to vector<32x32xf32>
    %306 = arith.mulf %296, %305 : vector<32x32xf32>
    %307 = vector.broadcast %288 : vector<1x32xf32> to vector<32x32xf32>
    %308 = arith.mulf %306, %307 : vector<32x32xf32>
    %309 = vector.broadcast %290 : vector<1x32xf32> to vector<32x32xf32>
    %310 = arith.addf %308, %309 : vector<32x32xf32>
    %c0_148 = arith.constant 0 : index
    %c0_149 = arith.constant 0 : index
    %311 = vector.load %arg24[%c0_148, %c0_149] : memref<32x32xf32, #tpu.memory_space<vmem>>, vector<32x32xf32>
    tpu.vector_store %arg24[%c0_148, %c0_149], %310 {strides = array<i32>} : memref<32x32xf32, #tpu.memory_space<vmem>>, vector<32x32xf32>,
    %312 = vector.shape_cast %310 : vector<32x32xf32> to vector<1x32x32xf32>
    %313 = vector.shape_cast %312 : vector<1x32x32xf32> to vector<1x32x32xf32>
    %314 = vector.broadcast %313 : vector<1x32x32xf32> to vector<9x32x32xf32>
    %c0_150 = arith.constant 0 : index
    %c0_151 = arith.constant 0 : index
    %c0_152 = arith.constant 0 : index
    %315 = vector.load %arg21[%c0_150, %c0_151, %c0_152] : memref<9x32x32xf32, #tpu.memory_space<vmem>>, vector<9x32x32xf32>
    %316 = arith.truncf %314 : vector<9x32x32xf32> to vector<9x32x32xbf16>
    %317 = arith.truncf %315 : vector<9x32x32xf32> to vector<9x32x32xbf16>
    %cst_153 = arith.constant dense<0.000000e+00> : vector<9x32x32xf32>
    %318 = tpu.matmul %316, %317, %cst_153 {dimension_numbers = #tpu.dot_dimension_numbers<[2], [1], [1], [2], [0, 0, 0, 1, 1, 2], [0], [0]>} : vector<9x32x32xbf16>, vector<9x32x32xbf16>, vector<9x32x32xf32> -> vector<9x32x32xf32>
    %c0_154 = arith.constant 0 : index
    %c0_155 = arith.constant 0 : index
    %319 = vector.load %arg23[%c0_154, %c0_155] : memref<32x288xf32, #tpu.memory_space<vmem>>, vector<32x288xf32>
    %320 = vector.shape_cast %318 : vector<9x32x32xf32> to vector<288x32xf32>
    %321 = arith.truncf %319 : vector<32x288xf32> to vector<32x288xbf16>
    %322 = arith.truncf %320 : vector<288x32xf32> to vector<288x32xbf16>
    %cst_156 = arith.constant dense<0.000000e+00> : vector<32x32xf32>
    %323 = tpu.matmul %321, %322, %cst_156 {dimension_numbers = #tpu.dot_dimension_numbers<[1], [0], [0], [1], [0, 0, 1, 1], [], []>} : vector<32x288xbf16>, vector<288x32xbf16>, vector<32x32xf32> -> vector<32x32xf32>
    %c0_157 = arith.constant 0 : index
    %c0_158 = arith.constant 0 : index
    %324 = vector.load %arg22[%c0_157, %c0_158] : memref<1x32xf32, #tpu.memory_space<vmem>>, vector<1x32xf32>
    %325 = vector.broadcast %324 : vector<1x32xf32> to vector<32x32xf32>
    %326 = arith.addf %323, %325 : vector<32x32xf32>
    %cst_159 = arith.constant 0.000000e+00 : f32
    %327 = vector.broadcast %cst_159 : f32 to vector<32x32xf32>
    %328 = arith.maximumf %326, %327 : vector<32x32xf32>
    %c0_160 = arith.constant 0 : index
    %c0_161 = arith.constant 0 : index
    %329 = vector.load %arg25[%c0_160, %c0_161] : memref<32x32xf32, #tpu.memory_space<vmem>>, vector<32x32xf32>
    tpu.vector_store %arg25[%c0_160, %c0_161], %328 {strides = array<i32>} : memref<32x32xf32, #tpu.memory_space<vmem>>, vector<32x32xf32>,
    return
  }
}

</mosaic_0001>

<llo_original>
// kernel: tpu_custom_call.1
$region0: #{tpu_custom_call.1}
  #allocation0 [shape = 'u32[]', space=smem, size = 0x4, offset = 0x4, fixed_abs, tag = 'smem constant byte address 0x4 - core index']
  #allocation1 [shape = 'u32[72,128]{1,0:T(1,128)}', space=vmem, size = 0x9000, scoped, tag = 'internal scratch']
  %s0 = inlined_call_operand.vmem [shape: f32[32,16], index: 0, kind: input, shape index: {}]
  %s1 = inlined_call_operand.hbm [shape: f32[16,32], index: 1, kind: input, shape index: {}]
  %s2 = inlined_call_operand.hbm [shape: f32[1,32], index: 2, kind: input, shape index: {}]
  %s3 = inlined_call_operand.vmem [shape: f32[32,32], index: 3, kind: input, shape index: {}]
  %s4 = inlined_call_operand.hbm [shape: f32[4,32], index: 4, kind: input, shape index: {}]
  %s5 = inlined_call_operand.vmem [shape: f32[2,32,32], index: 5, kind: input, shape index: {}]
  %s6 = inlined_call_operand.hbm [shape: f32[2,1,32], index: 6, kind: input, shape index: {}]
  %s7 = inlined_call_operand.hbm [shape: f32[2,32,32], index: 7, kind: input, shape index: {}]
  %s8 = inlined_call_operand.hbm [shape: f32[2,1,32], index: 8, kind: input, shape index: {}]
  %s9 = inlined_call_operand.hbm [shape: f32[2,32,32], index: 9, kind: input, shape index: {}]
  %s10 = inlined_call_operand.hbm [shape: f32[2,1,32], index: 10, kind: input, shape index: {}]
  %s11 = inlined_call_operand.hbm [shape: f32[2,32,32], index: 11, kind: input, shape index: {}]
  %s12 = inlined_call_operand.hbm [shape: f32[2,1,32], index: 12, kind: input, shape index: {}]
  %s13 = inlined_call_operand.hbm [shape: f32[2,1,32], index: 13, kind: input, shape index: {}]
  %s14 = inlined_call_operand.hbm [shape: f32[2,1,32], index: 14, kind: input, shape index: {}]
  %s15 = inlined_call_operand.hbm [shape: f32[2,32,64], index: 15, kind: input, shape index: {}]
  %s16 = inlined_call_operand.hbm [shape: f32[2,1,64], index: 16, kind: input, shape index: {}]
  %s17 = inlined_call_operand.vmem [shape: f32[2,64,32], index: 17, kind: input, shape index: {}]
  %s18 = inlined_call_operand.hbm [shape: f32[2,1,32], index: 18, kind: input, shape index: {}]
  %s19 = inlined_call_operand.hbm [shape: f32[2,1,32], index: 19, kind: input, shape index: {}]
  %s20 = inlined_call_operand.hbm [shape: f32[2,1,32], index: 20, kind: input, shape index: {}]
  %s21 = inlined_call_operand.hbm [shape: f32[9,32,32], index: 21, kind: input, shape index: {}]
  %s22 = inlined_call_operand.vmem [shape: f32[1,32], index: 22, kind: input, shape index: {}]
  %s23 = inlined_call_operand.vmem [shape: f32[32,288], index: 23, kind: input, shape index: {}]
  %s24 = inlined_call_operand.hbm [shape: f32[32,32], index: 24, kind: output, shape index: {0}]
  %s25 = inlined_call_operand.hbm [shape: f32[32,32], index: 25, kind: output, shape index: {1}]
  %26 = xla_tuple %s24, %s25
  %s27 = sld [smem:[#allocation0]]
  $region186: #{tpu_custom_call.1} parent=0
    _
  %s29 = ssub.s32 1, %s27
  %s30 = scalar_select 0, %s29, %s27
  $region1: #{tpu_custom_call.1} parent=0
    #allocation2 [shape = 'u8[8192]{0}', space=vmem, size = 0x2000, scoped, tag = 'input window, operand 1, single buffered']
    #allocation3 [shape = 's32[1]{0}', space=sflag, size = 0x4, scoped, tag = 'scoped memory for tpu_custom_call.1']
    #allocation4 [shape = 's32[1]{0}', space=sflag, size = 0x4, scoped, tag = 'scoped memory for tpu_custom_call.1']
    #allocation5 [shape = 'u8[512]{0}', space=vmem, size = 0x400, scoped, tag = 'input window, operand 2, single buffered']
    #allocation6 [shape = 's32[1]{0}', space=sflag, size = 0x4, scoped, tag = 'scoped memory for tpu_custom_call.1']
    #allocation7 [shape = 'u8[2048]{0}', space=vmem, size = 0x800, scoped, tag = 'input window, operand 4, single buffered']
    #allocation8 [shape = 'u8[1024]{0}', space=vmem, size = 0x400, scoped, tag = 'input window, operand 6, single buffered']
    #allocation9 [shape = 's32[1]{0}', space=sflag, size = 0x4, scoped, tag = 'scoped memory for tpu_custom_call.1']
    #allocation10 [shape = 'u8[32768]{0}', space=vmem, size = 0x8000, scoped, tag = 'input window, operand 7, single buffered']
    #allocation11 [shape = 'u8[1024]{0}', space=vmem, size = 0x400, scoped, tag = 'input window, operand 8, single buffered']
    #allocation12 [shape = 's32[1]{0}', space=sflag, size = 0x4, scoped, tag = 'scoped memory for tpu_custom_call.1']
    #allocation13 [shape = 'u8[32768]{0}', space=vmem, size = 0x8000, scoped, tag = 'input window, operand 9, single buffered']
    #allocation14 [shape = 'u8[1024]{0}', space=vmem, size = 0x400, scoped, tag = 'input window, operand 10, single buffered']
    #allocation15 [shape = 's32[1]{0}', space=sflag, size = 0x4, scoped, tag = 'scoped memory for tpu_custom_call.1']
    #allocation16 [shape = 'u8[32768]{0}', space=vmem, size = 0x8000, scoped, tag = 'input window, operand 11, single buffered']
    #allocation17 [shape = 'u8[1024]{0}', space=vmem, size = 0x400, scoped, tag = 'input window, operand 12, single buffered']
    #allocation18 [shape = 's32[1]{0}', space=sflag, size = 0x4, scoped, tag = 'scoped memory for tpu_custom_call.1']
    #allocation19 [shape = 'u8[1024]{0}', space=vmem, size = 0x400, scoped, tag = 'input window, operand 13, single buffered']
    #allocation20 [shape = 'u8[1024]{0}', space=vmem, size = 0x400, scoped, tag = 'input window, operand 14, single buffered']
    #allocation21 [shape = 's32[1]{0}', space=sflag, size = 0x4, scoped, tag = 'scoped memory for tpu_custom_call.1']
    #allocation22 [shape = 'u8[32768]{0}', space=vmem, size = 0x8000, scoped, tag = 'input window, operand 15, single buffered']
    #allocation23 [shape = 'u8[1024]{0}', space=vmem, size = 0x400, scoped, tag = 'input window, operand 16, single buffered']
    #allocation24 [shape = 's32[1]{0}', space=sflag, size = 0x4, scoped, tag = 'scoped memory for tpu_custom_call.1']
    #allocation25 [shape = 'u8[1024]{0}', space=vmem, size = 0x400, scoped, tag = 'input window, operand 18, single buffered']
    #allocation26 [shape = 'u8[1024]{0}', space=vmem, size = 0x400, scoped, tag = 'input window, operand 19, single buffered']
    #allocation27 [shape = 's32[1]{0}', space=sflag, size = 0x4, scoped, tag = 'scoped memory for tpu_custom_call.1']
    #allocation28 [shape = 'u8[1024]{0}', space=vmem, size = 0x400, scoped, tag = 'input window, operand 20, single buffered']
    #allocation29 [shape = 'u8[147456]{0}', space=vmem, size = 0x24000, scoped, tag = 'input window, operand 21, single buffered']
    #allocation30 [shape = 's32[1]{0}', space=sflag, size = 0x4, scoped, tag = 'scoped memory for tpu_custom_call.1']
    #allocation31 [shape = 'u8[16384]{0}', space=vmem, size = 0x4000, scoped, tag = 'output window, operand 0, single buffered']
    #allocation32 [shape = 'u8[16384]{0}', space=vmem, size = 0x4000, scoped, tag = 'output window, operand 1, single buffered']
    #allocation33 [shape = 's32[1]{0}', space=sflag, size = 0x4, scoped, tag = 'scoped memory for tpu_custom_call.1']
    %31 = vsyncpa [#allocation3], 0
    %32 = vsyncpa [#allocation6], 0
    %33 = vsyncpa [#allocation9], 0
    %34 = vsyncpa [#allocation12], 0
    %35 = vsyncpa [#allocation15], 0
    %36 = vsyncpa [#allocation18], 0
    %37 = vsyncpa [#allocation21], 0
    %38 = vsyncpa [#allocation24], 0
    %39 = vsyncpa [#allocation27], 0
    %40 = vsyncpa [#allocation30], 0
    %41 = vsyncpa [#allocation4], 0
    %42 = vsyncpa [#allocation33], 0
    // Predicated region
    $region2: #{tpu_custom_call.1} parent=1 // pred_check
      _
    $region3: #{tpu_custom_call.1} parent=1 // pred_check_branch
      %44 = sbr.rel (0) target = $region5
    $region4: #{tpu_custom_call.1} parent=1 // pred_region
      _
    $region5: #{tpu_custom_call.1} parent=1 // pred_fallthru
      _
    // Predicated region
    $region6: #{tpu_custom_call.1} parent=1 // pred_check
      _
    $region7: #{tpu_custom_call.1} parent=1 // pred_check_branch
      %46 = sbr.rel (0) target = $region9
    $region8: #{tpu_custom_call.1} parent=1 // pred_region
      %48 = vsyncadd [#allocation3], 0
      %s49 = sshll.u32 %s1, 4
      %s50 = int_to_ptr.hbm [resolvable:$true] %s49
      %s51 = sshll.u32 [#allocation2], 4
      %s52 = int_to_ptr.vmem [resolvable:$true] %s51
      %57 = dma.hbm_to_vmem [thread:$0]  %s50, 256, %s52, [#allocation3], 128, 128, 8
    $region9: #{tpu_custom_call.1} parent=1 // pred_fallthru
      _
    // Predicated region
    $region10: #{tpu_custom_call.1} parent=1 // pred_check
      _
    $region11: #{tpu_custom_call.1} parent=1 // pred_check_branch
      %59 = sbr.rel (0) target = $region13
    $region12: #{tpu_custom_call.1} parent=1 // pred_region
      %61 = vsyncadd [#allocation6], 0
      %s63 = sshll.u32 %s2, 4
      %s64 = int_to_ptr.hbm [resolvable:$true] %s63
      %s65 = sshll.u32 [#allocation5], 4
      %s66 = int_to_ptr.vmem [resolvable:$true] %s65
      %68 = dma.hbm_to_vmem [thread:$0]  %s64, 16, %s66, [#allocation6]
    $region13: #{tpu_custom_call.1} parent=1 // pred_fallthru
      _
    // Predicated region
    $region14: #{tpu_custom_call.1} parent=1 // pred_check
      _
    $region15: #{tpu_custom_call.1} parent=1 // pred_check_branch
      %70 = sbr.rel (0) target = $region17
    $region16: #{tpu_custom_call.1} parent=1 // pred_region
      _
    $region17: #{tpu_custom_call.1} parent=1 // pred_fallthru
      _
    // Predicated region
    $region18: #{tpu_custom_call.1} parent=1 // pred_check
      _
    $region19: #{tpu_custom_call.1} parent=1 // pred_check_branch
      %72 = sbr.rel (0) target = $region21
    $region20: #{tpu_custom_call.1} parent=1 // pred_region
      %74 = vsyncadd [#allocation6], 0
      %s76 = sshll.u32 %s4, 4
      %s77 = int_to_ptr.hbm [resolvable:$true] %s76
      %s78 = sshll.u32 [#allocation7], 4
      %s79 = int_to_ptr.vmem [resolvable:$true] %s78
      %81 = dma.hbm_to_vmem [thread:$0]  %s77, 64, %s79, [#allocation6]
    $region21: #{tpu_custom_call.1} parent=1 // pred_fallthru
      _
    // Predicated region
    $region22: #{tpu_custom_call.1} parent=1 // pred_check
      _
    $region23: #{tpu_custom_call.1} parent=1 // pred_check_branch
      %83 = sbr.rel (0) target = $region25
    $region24: #{tpu_custom_call.1} parent=1 // pred_region
      _
    $region25: #{tpu_custom_call.1} parent=1 // pred_fallthru
      _
    // Predicated region
    $region26: #{tpu_custom_call.1} parent=1 // pred_check
      _
    $region27: #{tpu_custom_call.1} parent=1 // pred_check_branch
      %85 = sbr.rel (0) target = $region29
    $region28: #{tpu_custom_call.1} parent=1 // pred_region
      %87 = vsyncadd [#allocation9], 0
      %s88 = sshll.u32 %s6, 4
      %s89 = int_to_ptr.hbm [resolvable:$true] %s88
      %s90 = sshll.u32 [#allocation8], 4
      %s91 = int_to_ptr.vmem [resolvable:$true] %s90
      %96 = dma.hbm_to_vmem [thread:$0]  %s89, 32, %s91, [#allocation9], 16, 16, 1
    $region29: #{tpu_custom_call.1} parent=1 // pred_fallthru
      _
    // Predicated region
    $region30: #{tpu_custom_call.1} parent=1 // pred_check
      _
    $region31: #{tpu_custom_call.1} parent=1 // pred_check_branch
      %98 = sbr.rel (0) target = $region33
    $region32: #{tpu_custom_call.1} parent=1 // pred_region
      %100 = vsyncadd [#allocation9], 0
      %s101 = sshll.u32 %s7, 4
      %s102 = int_to_ptr.hbm [resolvable:$true] %s101
      %s103 = sshll.u32 [#allocation10], 4
      %s104 = int_to_ptr.vmem [resolvable:$true] %s103
      %109 = dma.hbm_to_vmem [thread:$0]  %s102, 1024, %s104, [#allocation9], 128, 128, 8
    $region33: #{tpu_custom_call.1} parent=1 // pred_fallthru
      _
    // Predicated region
    $region34: #{tpu_custom_call.1} parent=1 // pred_check
      _
    $region35: #{tpu_custom_call.1} parent=1 // pred_check_branch
      %111 = sbr.rel (0) target = $region37
    $region36: #{tpu_custom_call.1} parent=1 // pred_region
      %113 = vsyncadd [#allocation12], 0
      %s114 = sshll.u32 %s8, 4
      %s115 = int_to_ptr.hbm [resolvable:$true] %s114
      %s116 = sshll.u32 [#allocation11], 4
      %s117 = int_to_ptr.vmem [resolvable:$true] %s116
      %122 = dma.hbm_to_vmem [thread:$0]  %s115, 32, %s117, [#allocation12], 16, 16, 1
    $region37: #{tpu_custom_call.1} parent=1 // pred_fallthru
      _
    // Predicated region
    $region38: #{tpu_custom_call.1} parent=1 // pred_check
      _
    $region39: #{tpu_custom_call.1} parent=1 // pred_check_branch
      %124 = sbr.rel (0) target = $region41
    $region40: #{tpu_custom_call.1} parent=1 // pred_region
      %126 = vsyncadd [#allocation12], 0
      %s127 = sshll.u32 %s9, 4
      %s128 = int_to_ptr.hbm [resolvable:$true] %s127
      %s129 = sshll.u32 [#allocation13], 4
      %s130 = int_to_ptr.vmem [resolvable:$true] %s129
      %135 = dma.hbm_to_vmem [thread:$0]  %s128, 1024, %s130, [#allocation12], 128, 128, 8
    $region41: #{tpu_custom_call.1} parent=1 // pred_fallthru
      _
    // Predicated region
    $region42: #{tpu_custom_call.1} parent=1 // pred_check
      _
    $region43: #{tpu_custom_call.1} parent=1 // pred_check_branch
      %137 = sbr.rel (0) target = $region45
    $region44: #{tpu_custom_call.1} parent=1 // pred_region
      %139 = vsyncadd [#allocation15], 0
      %s140 = sshll.u32 %s10, 4
      %s141 = int_to_ptr.hbm [resolvable:$true] %s140
      %s142 = sshll.u32 [#allocation14], 4
      %s143 = int_to_ptr.vmem [resolvable:$true] %s142
      %148 = dma.hbm_to_vmem [thread:$0]  %s141, 32, %s143, [#allocation15], 16, 16, 1
    $region45: #{tpu_custom_call.1} parent=1 // pred_fallthru
      _
    // Predicated region
    $region46: #{tpu_custom_call.1} parent=1 // pred_check
      _
    $region47: #{tpu_custom_call.1} parent=1 // pred_check_branch
      %150 = sbr.rel (0) target = $region49
    $region48: #{tpu_custom_call.1} parent=1 // pred_region
      %152 = vsyncadd [#allocation15], 0
      %s153 = sshll.u32 %s11, 4
      %s154 = int_to_ptr.hbm [resolvable:$true] %s153
      %s155 = sshll.u32 [#allocation16], 4
      %s156 = int_to_ptr.vmem [resolvable:$true] %s155
      %161 = dma.hbm_to_vmem [thread:$0]  %s154, 1024, %s156, [#allocation15], 128, 128, 8
    $region49: #{tpu_custom_call.1} parent=1 // pred_fallthru
      _
    // Predicated region
    $region50: #{tpu_custom_call.1} parent=1 // pred_check
      _
    $region51: #{tpu_custom_call.1} parent=1 // pred_check_branch
      %163 = sbr.rel (0) target = $region53
    $region52: #{tpu_custom_call.1} parent=1 // pred_region
      %165 = vsyncadd [#allocation18], 0
      %s166 = sshll.u32 %s12, 4
      %s167 = int_to_ptr.hbm [resolvable:$true] %s166
      %s168 = sshll.u32 [#allocation17], 4
      %s169 = int_to_ptr.vmem [resolvable:$true] %s168
      %174 = dma.hbm_to_vmem [thread:$0]  %s167, 32, %s169, [#allocation18], 16, 16, 1
    $region53: #{tpu_custom_call.1} parent=1 // pred_fallthru
      _
    // Predicated region
    $region54: #{tpu_custom_call.1} parent=1 // pred_check
      _
    $region55: #{tpu_custom_call.1} parent=1 // pred_check_branch
      %176 = sbr.rel (0) target = $region57
    $region56: #{tpu_custom_call.1} parent=1 // pred_region
      %178 = vsyncadd [#allocation18], 0
      %s179 = sshll.u32 %s13, 4
      %s180 = int_to_ptr.hbm [resolvable:$true] %s179
      %s181 = sshll.u32 [#allocation19], 4
      %s182 = int_to_ptr.vmem [resolvable:$true] %s181
      %187 = dma.hbm_to_vmem [thread:$0]  %s180, 32, %s182, [#allocation18], 16, 16, 1
    $region57: #{tpu_custom_call.1} parent=1 // pred_fallthru
      _
    // Predicated region
    $region58: #{tpu_custom_call.1} parent=1 // pred_check
      _
    $region59: #{tpu_custom_call.1} parent=1 // pred_check_branch
      %189 = sbr.rel (0) target = $region61
    $region60: #{tpu_custom_call.1} parent=1 // pred_region
      %191 = vsyncadd [#allocation21], 0
      %s192 = sshll.u32 %s14, 4
      %s193 = int_to_ptr.hbm [resolvable:$true] %s192
      %s194 = sshll.u32 [#allocation20], 4
      %s195 = int_to_ptr.vmem [resolvable:$true] %s194
      %200 = dma.hbm_to_vmem [thread:$0]  %s193, 32, %s195, [#allocation21], 16, 16, 1
    $region61: #{tpu_custom_call.1} parent=1 // pred_fallthru
      _
    // Predicated region
    $region62: #{tpu_custom_call.1} parent=1 // pred_check
      _
    $region63: #{tpu_custom_call.1} parent=1 // pred_check_branch
      %202 = sbr.rel (0) target = $region65
    $region64: #{tpu_custom_call.1} parent=1 // pred_region
      %204 = vsyncadd [#allocation21], 0
      %s205 = sshll.u32 %s15, 4
      %s206 = int_to_ptr.hbm [resolvable:$true] %s205
      %s207 = sshll.u32 [#allocation22], 4
      %s208 = int_to_ptr.vmem [resolvable:$true] %s207
      %213 = dma.hbm_to_vmem [thread:$0]  %s206, 1024, %s208, [#allocation21], 128, 128, 8
    $region65: #{tpu_custom_call.1} parent=1 // pred_fallthru
      _
    // Predicated region
    $region66: #{tpu_custom_call.1} parent=1 // pred_check
      _
    $region67: #{tpu_custom_call.1} parent=1 // pred_check_branch
      %215 = sbr.rel (0) target = $region69
    $region68: #{tpu_custom_call.1} parent=1 // pred_region
      %217 = vsyncadd [#allocation24], 0
      %s218 = sshll.u32 %s16, 4
      %s219 = int_to_ptr.hbm [resolvable:$true] %s218
      %s220 = sshll.u32 [#allocation23], 4
      %s221 = int_to_ptr.vmem [resolvable:$true] %s220
      %226 = dma.hbm_to_vmem [thread:$0]  %s219, 32, %s221, [#allocation24], 16, 16, 1
    $region69: #{tpu_custom_call.1} parent=1 // pred_fallthru
      _
    // Predicated region
    $region70: #{tpu_custom_call.1} parent=1 // pred_check
      _
    $region71: #{tpu_custom_call.1} parent=1 // pred_check_branch
      %228 = sbr.rel (0) target = $region73
    $region72: #{tpu_custom_call.1} parent=1 // pred_region
      _
    $region73: #{tpu_custom_call.1} parent=1 // pred_fallthru
      _
    // Predicated region
    $region74: #{tpu_custom_call.1} parent=1 // pred_check
      _
    $region75: #{tpu_custom_call.1} parent=1 // pred_check_branch
      %230 = sbr.rel (0) target = $region77
    $region76: #{tpu_custom_call.1} parent=1 // pred_region
      %232 = vsyncadd [#allocation24], 0
      %s233 = sshll.u32 %s18, 4
      %s234 = int_to_ptr.hbm [resolvable:$true] %s233
      %s235 = sshll.u32 [#allocation25], 4
      %s236 = int_to_ptr.vmem [resolvable:$true] %s235
      %241 = dma.hbm_to_vmem [thread:$0]  %s234, 32, %s236, [#allocation24], 16, 16, 1
    $region77: #{tpu_custom_call.1} parent=1 // pred_fallthru
      _
    // Predicated region
    $region78: #{tpu_custom_call.1} parent=1 // pred_check
      _
    $region79: #{tpu_custom_call.1} parent=1 // pred_check_branch
      %243 = sbr.rel (0) target = $region81
    $region80: #{tpu_custom_call.1} parent=1 // pred_region
      %245 = vsyncadd [#allocation27], 0
      %s246 = sshll.u32 %s19, 4
      %s247 = int_to_ptr.hbm [resolvable:$true] %s246
      %s248 = sshll.u32 [#allocation26], 4
      %s249 = int_to_ptr.vmem [resolvable:$true] %s248
      %254 = dma.hbm_to_vmem [thread:$0]  %s247, 32, %s249, [#allocation27], 16, 16, 1
    $region81: #{tpu_custom_call.1} parent=1 // pred_fallthru
      _
    // Predicated region
    $region82: #{tpu_custom_call.1} parent=1 // pred_check
      _
    $region83: #{tpu_custom_call.1} parent=1 // pred_check_branch
      %256 = sbr.rel (0) target = $region85
    $region84: #{tpu_custom_call.1} parent=1 // pred_region
      %258 = vsyncadd [#allocation27], 0
      %s259 = sshll.u32 %s20, 4
      %s260 = int_to_ptr.hbm [resolvable:$true] %s259
      %s261 = sshll.u32 [#allocation28], 4
      %s262 = int_to_ptr.vmem [resolvable:$true] %s261
      %267 = dma.hbm_to_vmem [thread:$0]  %s260, 32, %s262, [#allocation27], 16, 16, 1
    $region85: #{tpu_custom_call.1} parent=1 // pred_fallthru
      _
    // Predicated region
    $region86: #{tpu_custom_call.1} parent=1 // pred_check
      _
    $region87: #{tpu_custom_call.1} parent=1 // pred_check_branch
      %269 = sbr.rel (0) target = $region89
    $region88: #{tpu_custom_call.1} parent=1 // pred_region
      %271 = vsyncadd [#allocation30], 0
      %s272 = sshll.u32 %s21, 4
      %s273 = int_to_ptr.hbm [resolvable:$true] %s272
      %s274 = sshll.u32 [#allocation29], 4
      %s275 = int_to_ptr.vmem [resolvable:$true] %s274
      %280 = dma.hbm_to_vmem [thread:$0]  %s273, 4608, %s275, [#allocation30], 128, 128, 8
    $region89: #{tpu_custom_call.1} parent=1 // pred_fallthru
      _
    // Predicated region
    $region90: #{tpu_custom_call.1} parent=1 // pred_check
      _
    $region91: #{tpu_custom_call.1} parent=1 // pred_check_branch
      %282 = sbr.rel (0) target = $region93
    $region92: #{tpu_custom_call.1} parent=1 // pred_region
      _
    $region93: #{tpu_custom_call.1} parent=1 // pred_fallthru
      _
    // Predicated region
    $region94: #{tpu_custom_call.1} parent=1 // pred_check
      _
    $region95: #{tpu_custom_call.1} parent=1 // pred_check_branch
      %284 = sbr.rel (0) target = $region97
    $region96: #{tpu_custom_call.1} parent=1 // pred_region
      _
    $region97: #{tpu_custom_call.1} parent=1 // pred_fallthru
      _
    // Predicated region
    $region98: #{tpu_custom_call.1} parent=1 // pred_check
      _
    $region99: #{tpu_custom_call.1} parent=1 // pred_check_branch
      %286 = sbr.rel (0) target = $region101
    $region100: #{tpu_custom_call.1} parent=1 // pred_region
      %288 = dma.done [#allocation3], 256
    $region101: #{tpu_custom_call.1} parent=1 // pred_fallthru
      _
    // Predicated region
    $region102: #{tpu_custom_call.1} parent=1 // pred_check
      _
    $region103: #{tpu_custom_call.1} parent=1 // pred_check_branch
      %290 = sbr.rel (0) target = $region105
    $region104: #{tpu_custom_call.1} parent=1 // pred_region
      %292 = dma.done [#allocation6], 16
    $region105: #{tpu_custom_call.1} parent=1 // pred_fallthru
      _
    // Predicated region
    $region106: #{tpu_custom_call.1} parent=1 // pred_check
      _
    $region107: #{tpu_custom_call.1} parent=1 // pred_check_branch
      %294 = sbr.rel (0) target = $region109
    $region108: #{tpu_custom_call.1} parent=1 // pred_region
      %296 = dma.done [#allocation6], 64
    $region109: #{tpu_custom_call.1} parent=1 // pred_fallthru
      _
    // Predicated region
    $region110: #{tpu_custom_call.1} parent=1 // pred_check
      _
    $region111: #{tpu_custom_call.1} parent=1 // pred_check_branch
      %298 = sbr.rel (0) target = $region113
    $region112: #{tpu_custom_call.1} parent=1 // pred_region
      %300 = dma.done [#allocation9], 32
    $region113: #{tpu_custom_call.1} parent=1 // pred_fallthru
      _
    // Predicated region
    $region114: #{tpu_custom_call.1} parent=1 // pred_check
      _
    $region115: #{tpu_custom_call.1} parent=1 // pred_check_branch
      %302 = sbr.rel (0) target = $region117
    $region116: #{tpu_custom_call.1} parent=1 // pred_region
      %304 = dma.done [#allocation9], 1024
    $region117: #{tpu_custom_call.1} parent=1 // pred_fallthru
      _
    // Predicated region
    $region118: #{tpu_custom_call.1} parent=1 // pred_check
      _
    $region119: #{tpu_custom_call.1} parent=1 // pred_check_branch
      %306 = sbr.rel (0) target = $region121
    $region120: #{tpu_custom_call.1} parent=1 // pred_region
      %308 = dma.done [#allocation12], 32
    $region121: #{tpu_custom_call.1} parent=1 // pred_fallthru
      _
    // Predicated region
    $region122: #{tpu_custom_call.1} parent=1 // pred_check
      _
    $region123: #{tpu_custom_call.1} parent=1 // pred_check_branch
      %310 = sbr.rel (0) target = $region125
    $region124: #{tpu_custom_call.1} parent=1 // pred_region
      %312 = dma.done [#allocation12], 1024
    $region125: #{tpu_custom_call.1} parent=1 // pred_fallthru
      _
    // Predicated region
    $region126: #{tpu_custom_call.1} parent=1 // pred_check
      _
    $region127: #{tpu_custom_call.1} parent=1 // pred_check_branch
      %314 = sbr.rel (0) target = $region129
    $region128: #{tpu_custom_call.1} parent=1 // pred_region
      %316 = dma.done [#allocation15], 32
    $region129: #{tpu_custom_call.1} parent=1 // pred_fallthru
      _
    // Predicated region
    $region130: #{tpu_custom_call.1} parent=1 // pred_check
      _
    $region131: #{tpu_custom_call.1} parent=1 // pred_check_branch
      %318 = sbr.rel (0) target = $region133
    $region132: #{tpu_custom_call.1} parent=1 // pred_region
      %320 = dma.done [#allocation15], 1024
    $region133: #{tpu_custom_call.1} parent=1 // pred_fallthru
      _
    // Predicated region
    $region134: #{tpu_custom_call.1} parent=1 // pred_check
      _
    $region135: #{tpu_custom_call.1} parent=1 // pred_check_branch
      %322 = sbr.rel (0) target = $region137
    $region136: #{tpu_custom_call.1} parent=1 // pred_region
      %324 = dma.done [#allocation18], 32
    $region137: #{tpu_custom_call.1} parent=1 // pred_fallthru
      _
    // Predicated region
    $region138: #{tpu_custom_call.1} parent=1 // pred_check
      _
    $region139: #{tpu_custom_call.1} parent=1 // pred_check_branch
      %326 = sbr.rel (0) target = $region141
    $region140: #{tpu_custom_call.1} parent=1 // pred_region
      %328 = dma.done [#allocation18], 32
    $region141: #{tpu_custom_call.1} parent=1 // pred_fallthru
      _
    // Predicated region
    $region142: #{tpu_custom_call.1} parent=1 // pred_check
      _
    $region143: #{tpu_custom_call.1} parent=1 // pred_check_branch
      %330 = sbr.rel (0) target = $region145
    $region144: #{tpu_custom_call.1} parent=1 // pred_region
      %332 = dma.done [#allocation21], 32
    $region145: #{tpu_custom_call.1} parent=1 // pred_fallthru
      _
    // Predicated region
    $region146: #{tpu_custom_call.1} parent=1 // pred_check
      _
    $region147: #{tpu_custom_call.1} parent=1 // pred_check_branch
      %334 = sbr.rel (0) target = $region149
    $region148: #{tpu_custom_call.1} parent=1 // pred_region
      %336 = dma.done [#allocation21], 1024
    $region149: #{tpu_custom_call.1} parent=1 // pred_fallthru
      _
    // Predicated region
    $region150: #{tpu_custom_call.1} parent=1 // pred_check
      _
    $region151: #{tpu_custom_call.1} parent=1 // pred_check_branch
      %338 = sbr.rel (0) target = $region153
    $region152: #{tpu_custom_call.1} parent=1 // pred_region
      %340 = dma.done [#allocation24], 32
    $region153: #{tpu_custom_call.1} parent=1 // pred_fallthru
      _
    // Predicated region
    $region154: #{tpu_custom_call.1} parent=1 // pred_check
      _
    $region155: #{tpu_custom_call.1} parent=1 // pred_check_branch
      %342 = sbr.rel (0) target = $region157
    $region156: #{tpu_custom_call.1} parent=1 // pred_region
      %344 = dma.done [#allocation24], 32
    $region157: #{tpu_custom_call.1} parent=1 // pred_fallthru
      _
    // Predicated region
    $region158: #{tpu_custom_call.1} parent=1 // pred_check
      _
    $region159: #{tpu_custom_call.1} parent=1 // pred_check_branch
      %346 = sbr.rel (0) target = $region161
    $region160: #{tpu_custom_call.1} parent=1 // pred_region
      %348 = dma.done [#allocation27], 32
    $region161: #{tpu_custom_call.1} parent=1 // pred_fallthru
      _
    // Predicated region
    $region162: #{tpu_custom_call.1} parent=1 // pred_check
      _
    $region163: #{tpu_custom_call.1} parent=1 // pred_check_branch
      %350 = sbr.rel (0) target = $region165
    $region164: #{tpu_custom_call.1} parent=1 // pred_region
      %352 = dma.done [#allocation27], 32
    $region165: #{tpu_custom_call.1} parent=1 // pred_fallthru
      _
    // Predicated region
    $region166: #{tpu_custom_call.1} parent=1 // pred_check
      _
    $region167: #{tpu_custom_call.1} parent=1 // pred_check_branch
      %354 = sbr.rel (0) target = $region169
    $region168: #{tpu_custom_call.1} parent=1 // pred_region
      %356 = dma.done [#allocation30], 4608
    $region169: #{tpu_custom_call.1} parent=1 // pred_fallthru
      _
    %v358 = vld [vmem:[%s0] sm:$0xff]
    %v359 = vld [vmem:[%s0 + $0x8] sm:$0xff]
    %v360 = vld [vmem:[%s0 + $0x10] sm:$0xff]
    %v361 = vld [vmem:[%s0 + $0x18] sm:$0xff]
    %v362 = vld [vmem:[#allocation2] sm:$0xff]
    %v363 = vld [vmem:[#allocation2 + $0x8] sm:$0xff]
    %v364 = vpack.c.bf16 %v359, %v358
    %v365 = vpack.c.bf16 %v361, %v360
    %v366 = vpack.c.bf16 %v363, %v362
    %v367 = vld [vmem:[#allocation5] sm:$0x1]
    %v369 = vperm.slane %v367, 0
    %vm371 = vcmask 130048
    %v373 = vsel %vm371, %v364, 0
    %v376 = vsel %vm371, %v365, 0
    %378 = vmatpush.bf16.msra.mxu0 0
    %379 = vmatpush.bf16.msra.mxu0 0
    %380 = vmatpush.bf16.msra.mxu0 0
    %381 = vmatpush.bf16.msra.mxu0 0
    %382 = vmatpush.bf16.msra.mxu0 0
    %383 = vmatpush.bf16.msra.mxu0 0
    %384 = vmatpush.bf16.msra.mxu0 0
    %385 = vmatpush.bf16.msra.mxu0 %v366
    %386 = vmatmul.bf16.gmra.mxu0 %v373
    %v387 = vpop.f32.mrf.mxu0
    %v388 = vadd.f32 %v369, %v387
    %v389 = vpop.f32.mrf.mxu0
    %v390 = vadd.f32 %v369, %v389
    %391 = vmatmul.bf16.gmra.mxu0 %v376
    %v392 = vpop.f32.mrf.mxu0
    %v393 = vadd.f32 %v369, %v392
    %v394 = vpop.f32.mrf.mxu0
    %v395 = vadd.f32 %v369, %v394
    %396 = vdwg.mxu0
    %v397 = vld [vmem:[%s3] sm:$0xff]
    %v398 = vld [vmem:[%s3 + $0x8] sm:$0xff]
    %v399 = vld [vmem:[%s3 + $0x10] sm:$0xff]
    %v400 = vld [vmem:[%s3 + $0x18] sm:$0xff]
    %v401 = vld [vmem:[#allocation7] sm:$0xf]
    %v403 = vrot.slane %v401, 1
    %v404 = vrot.slane %v401, 2
    %v405 = vrot.slane %v401, 3
    %v406 = vadd.f32 %v388, %v397
    %v407 = vadd.f32 %v390, %v398
    %v408 = vadd.f32 %v393, %v399
    %v409 = vadd.f32 %v395, %v400
    %v410 = vld [vmem:[%s5] sm:$0xff]
    %v411 = vld [vmem:[%s5 + $0x8] sm:$0xff]
    %v412 = vld [vmem:[%s5 + $0x10] sm:$0xff]
    %v413 = vld [vmem:[%s5 + $0x18] sm:$0xff]
    %v414 = vpack.c.bf16 %v407, %v406
    %v415 = vpack.c.bf16 %v409, %v408
    %v416 = vpack.c.bf16 %v411, %v410
    %v417 = vpack.c.bf16 %v413, %v412
    %v418 = vld [vmem:[#allocation8] sm:$0x1]
    %v420 = vperm.slane %v418, 0
    %vm422 = vcmask 261120
    %v424 = vsel %vm422, %v414, 0
    %v427 = vsel %vm422, %v415, 0
    %429 = vmatpush.bf16.msra.mxu0 0
    %430 = vmatpush.bf16.msra.mxu0 0
    %431 = vmatpush.bf16.msra.mxu0 0
    %432 = vmatpush.bf16.msra.mxu0 0
    %433 = vmatpush.bf16.msra.mxu0 0
    %434 = vmatpush.bf16.msra.mxu0 0
    %435 = vmatpush.bf16.msra.mxu0 %v417
    %436 = vmatpush.bf16.msra.mxu0 %v416
    %437 = vmatmul.bf16.gmra.mxu0 %v424
    %v438 = vpop.f32.mrf.mxu0
    %v439 = vadd.f32 %v420, %v438
    %v440 = vpop.f32.mrf.mxu0
    %v441 = vadd.f32 %v420, %v440
    %442 = vmatmul.bf16.gmra.mxu0 %v427
    %v443 = vpop.f32.mrf.mxu0
    %v444 = vadd.f32 %v420, %v443
    %v445 = vpop.f32.mrf.mxu0
    %v446 = vadd.f32 %v420, %v445
    %447 = vdwg.mxu0
    %v448 = vld [vmem:[#allocation10] sm:$0xff]
    %v449 = vld [vmem:[#allocation10 + $0x8] sm:$0xff]
    %v450 = vld [vmem:[#allocation10 + $0x10] sm:$0xff]
    %v451 = vld [vmem:[#allocation10 + $0x18] sm:$0xff]
    %v452 = vpack.c.bf16 %v449, %v448
    %v453 = vpack.c.bf16 %v451, %v450
    %v454 = vld [vmem:[#allocation11] sm:$0x1]
    %v456 = vperm.slane %v454, 0
    %458 = vmatpush.bf16.msra.mxu0 0
    %459 = vmatpush.bf16.msra.mxu0 0
    %460 = vmatpush.bf16.msra.mxu0 0
    %461 = vmatpush.bf16.msra.mxu0 0
    %462 = vmatpush.bf16.msra.mxu0 0
    %463 = vmatpush.bf16.msra.mxu0 0
    %464 = vmatpush.bf16.msra.mxu0 %v453
    %465 = vmatpush.bf16.msra.mxu0 %v452
    %466 = vmatmul.bf16.gmra.mxu0 %v424
    %v467 = vpop.f32.mrf.mxu0
    %v468 = vadd.f32 %v456, %v467
    %v469 = vpop.f32.mrf.mxu0
    %v470 = vadd.f32 %v456, %v469
    %471 = vmatmul.bf16.gmra.mxu0 %v427
    %v472 = vpop.f32.mrf.mxu0
    %v473 = vadd.f32 %v456, %v472
    %v474 = vpop.f32.mrf.mxu0
    %v475 = vadd.f32 %v456, %v474
    %476 = vdwg.mxu0
    %v477 = vld [vmem:[#allocation13] sm:$0xff]
    %v478 = vld [vmem:[#allocation13 + $0x8] sm:$0xff]
    %v479 = vld [vmem:[#allocation13 + $0x10] sm:$0xff]
    %v480 = vld [vmem:[#allocation13 + $0x18] sm:$0xff]
    %v481 = vpack.c.bf16 %v390, %v388
    %v482 = vpack.c.bf16 %v395, %v393
    %v483 = vpack.c.bf16 %v478, %v477
    %v484 = vpack.c.bf16 %v480, %v479
    %v485 = vld [vmem:[#allocation14] sm:$0x1]
    %v487 = vperm.slane %v485, 0
    %v490 = vsel %vm422, %v481, 0
    %v493 = vsel %vm422, %v482, 0
    %495 = vmatpush.bf16.msra.mxu0 0
    %496 = vmatpush.bf16.msra.mxu0 0
    %497 = vmatpush.bf16.msra.mxu0 0
    %498 = vmatpush.bf16.msra.mxu0 0
    %499 = vmatpush.bf16.msra.mxu0 0
    %500 = vmatpush.bf16.msra.mxu0 0
    %501 = vmatpush.bf16.msra.mxu0 %v484
    %502 = vmatpush.bf16.msra.mxu0 %v483
    %503 = vmatmul.bf16.gmra.mxu0 %v490
    %v504 = vpop.f32.mrf.mxu0
    %v505 = vadd.f32 %v487, %v504
    %v506 = vpop.f32.mrf.mxu0
    %v507 = vadd.f32 %v487, %v506
    %508 = vmatmul.bf16.gmra.mxu0 %v493
    %v509 = vpop.f32.mrf.mxu0
    %v510 = vadd.f32 %v487, %v509
    %v511 = vpop.f32.mrf.mxu0
    %v512 = vadd.f32 %v487, %v511
    %513 = vdwg.mxu0
    %v514 = vperm.slane %v401, 0
    %v515 = vperm.slane %v403, 0
    %v516 = vperm.slane %v404, 0
    %v517 = vperm.slane %v405, 0
    %v522 = vmul.f32 %v439, %v514
    %v523 = vmul.f32 %v441, %v514
    %v524 = vmul.f32 %v444, %v514
    %v525 = vmul.f32 %v446, %v514
    %v526 = vmul.f32 %v439, %v515
    %v527 = vmul.f32 %v441, %v515
    %v528 = vmul.f32 %v444, %v515
    %v529 = vmul.f32 %v446, %v515
    %v530 = vmul.f32 %v439, %v516
    %v531 = vmul.f32 %v441, %v516
    %v532 = vmul.f32 %v444, %v516
    %v533 = vmul.f32 %v446, %v516
    %v534 = vmul.f32 %v439, %v517
    %v535 = vmul.f32 %v441, %v517
    %v536 = vmul.f32 %v444, %v517
    %v537 = vmul.f32 %v446, %v517
    %v538 = vmul.f32 %v522, 0.35355338
    %v539 = vmul.f32 %v523, 0.35355338
    %v540 = vmul.f32 %v524, 0.35355338
    %v541 = vmul.f32 %v525, 0.35355338
    %v542 = vmul.f32 %v526, 0.35355338
    %v543 = vmul.f32 %v527, 0.35355338
    %v544 = vmul.f32 %v528, 0.35355338
    %v545 = vmul.f32 %v529, 0.35355338
    %v546 = vmul.f32 %v530, 0.35355338
    %v547 = vmul.f32 %v531, 0.35355338
    %v548 = vmul.f32 %v532, 0.35355338
    %v549 = vmul.f32 %v533, 0.35355338
    %v550 = vmul.f32 %v534, 0.35355338
    %v551 = vmul.f32 %v535, 0.35355338
    %v552 = vmul.f32 %v536, 0.35355338
    %v553 = vmul.f32 %v537, 0.35355338
    %v554 = vmul.f32 %v505, %v514
    %v555 = vmul.f32 %v507, %v514
    %v556 = vmul.f32 %v510, %v514
    %v557 = vmul.f32 %v512, %v514
    %v558 = vmul.f32 %v505, %v515
    %v559 = vmul.f32 %v507, %v515
    %v560 = vmul.f32 %v510, %v515
    %v561 = vmul.f32 %v512, %v515
    %v562 = vmul.f32 %v505, %v516
    %v563 = vmul.f32 %v507, %v516
    %v564 = vmul.f32 %v510, %v516
    %v565 = vmul.f32 %v512, %v516
    %v566 = vmul.f32 %v505, %v517
    %v567 = vmul.f32 %v507, %v517
    %v568 = vmul.f32 %v510, %v517
    %v569 = vmul.f32 %v512, %v517
    %v570 = vpack.c.bf16 %v538, %v538
    %v571 = vpack.c.bf16 %v539, %v539
    %v572 = vpack.c.bf16 %v540, %v540
    %v573 = vpack.c.bf16 %v541, %v541
    %v574 = vpack.c.bf16 %v542, %v542
    %v575 = vpack.c.bf16 %v543, %v543
    %v576 = vpack.c.bf16 %v544, %v544
    %v577 = vpack.c.bf16 %v545, %v545
    %v578 = vpack.c.bf16 %v546, %v546
    %v579 = vpack.c.bf16 %v547, %v547
    %v580 = vpack.c.bf16 %v548, %v548
    %v581 = vpack.c.bf16 %v549, %v549
    %v582 = vpack.c.bf16 %v550, %v550
    %v583 = vpack.c.bf16 %v551, %v551
    %v584 = vpack.c.bf16 %v552, %v552
    %v585 = vpack.c.bf16 %v553, %v553
    %v586 = vpack.c.bf16 %v468, %v468
    %v587 = vpack.c.bf16 %v470, %v470
    %v588 = vpack.c.bf16 %v473, %v473
    %v589 = vpack.c.bf16 %v475, %v475
    %v592 = vunpack.c.l.b16 %v570
    %v593 = vunpack.c.l.b16 %v571
    %v594 = vpack.c.b16 %v593, %v592
    %v597 = vunpack.c.l.b16 %v586
    %v598 = vunpack.c.l.b16 %v587
    %v599 = vpack.c.b16 %v598, %v597
    %v601 = vsel %vm422, %v594, 0
    %v604 = vsel %vm422, %v599, 0
    %606 = vmatpush.bf16.xpose.msra.mxu0 0
    %607 = vmatpush.bf16.xpose.msra.mxu0 0
    %608 = vmatpush.bf16.xpose.msra.mxu0 0
    %609 = vmatpush.bf16.xpose.msra.mxu0 0
    %610 = vmatpush.bf16.xpose.msra.mxu0 0
    %611 = vmatpush.bf16.xpose.msra.mxu0 0
    %612 = vmatpush.bf16.xpose.msra.mxu0 0
    %613 = vmatpush.bf16.xpose.msra.mxu0 %v604
    %614 = vmatmul.bf16.gmra.mxu0 %v601
    %v615 = vpop.f32.mrf.mxu0
    %v616 = vadd.f32 0.0, %v615
    %v617 = vpop.f32.mrf.mxu0
    %v618 = vadd.f32 0.0, %v617
    %619 = vdwg.mxu0
    %v622 = vunpack.c.l.b16 %v572
    %v623 = vunpack.c.l.b16 %v573
    %v624 = vpack.c.b16 %v623, %v622
    %v627 = vunpack.c.l.b16 %v588
    %v628 = vunpack.c.l.b16 %v589
    %v629 = vpack.c.b16 %v628, %v627
    %v631 = vsel %vm422, %v624, 0
    %v634 = vsel %vm422, %v629, 0
    %636 = vmatpush.bf16.xpose.msra.mxu0 0
    %637 = vmatpush.bf16.xpose.msra.mxu0 0
    %638 = vmatpush.bf16.xpose.msra.mxu0 0
    %639 = vmatpush.bf16.xpose.msra.mxu0 0
    %640 = vmatpush.bf16.xpose.msra.mxu0 0
    %641 = vmatpush.bf16.xpose.msra.mxu0 0
    %642 = vmatpush.bf16.xpose.msra.mxu0 0
    %643 = vmatpush.bf16.xpose.msra.mxu0 %v634
    %644 = vmatmul.bf16.gmra.mxu0 %v631
    %v645 = vpop.f32.mrf.mxu0
    %v646 = vadd.f32 0.0, %v645
    %v647 = vpop.f32.mrf.mxu0
    %v648 = vadd.f32 0.0, %v647
    %649 = vdwg.mxu0
    %v652 = vunpack.c.l.b16 %v574
    %v653 = vunpack.c.l.b16 %v575
    %v654 = vpack.c.b16 %v653, %v652
    %v656 = vsel %vm422, %v654, 0
    %658 = vmatpush.bf16.xpose.msra.mxu0 0
    %659 = vmatpush.bf16.xpose.msra.mxu0 0
    %660 = vmatpush.bf16.xpose.msra.mxu0 0
    %661 = vmatpush.bf16.xpose.msra.mxu0 0
    %662 = vmatpush.bf16.xpose.msra.mxu0 0
    %663 = vmatpush.bf16.xpose.msra.mxu0 0
    %664 = vmatpush.bf16.xpose.msra.mxu0 0
    %665 = vmatpush.bf16.xpose.msra.mxu0 %v604
    %666 = vmatmul.bf16.gmra.mxu0 %v656
    %v667 = vpop.f32.mrf.mxu0
    %v668 = vadd.f32 0.0, %v667
    %v669 = vpop.f32.mrf.mxu0
    %v670 = vadd.f32 0.0, %v669
    %671 = vdwg.mxu0
    %v674 = vunpack.c.l.b16 %v576
    %v675 = vunpack.c.l.b16 %v577
    %v676 = vpack.c.b16 %v675, %v674
    %v678 = vsel %vm422, %v676, 0
    %680 = vmatpush.bf16.xpose.msra.mxu0 0
    %681 = vmatpush.bf16.xpose.msra.mxu0 0
    %682 = vmatpush.bf16.xpose.msra.mxu0 0
    %683 = vmatpush.bf16.xpose.msra.mxu0 0
    %684 = vmatpush.bf16.xpose.msra.mxu0 0
    %685 = vmatpush.bf16.xpose.msra.mxu0 0
    %686 = vmatpush.bf16.xpose.msra.mxu0 0
    %687 = vmatpush.bf16.xpose.msra.mxu0 %v634
    %688 = vmatmul.bf16.gmra.mxu0 %v678
    %v689 = vpop.f32.mrf.mxu0
    %v690 = vadd.f32 0.0, %v689
    %v691 = vpop.f32.mrf.mxu0
    %v692 = vadd.f32 0.0, %v691
    %693 = vdwg.mxu0
    %v696 = vunpack.c.l.b16 %v578
    %v697 = vunpack.c.l.b16 %v579
    %v698 = vpack.c.b16 %v697, %v696
    %v700 = vsel %vm422, %v698, 0
    %702 = vmatpush.bf16.xpose.msra.mxu0 0
    %703 = vmatpush.bf16.xpose.msra.mxu0 0
    %704 = vmatpush.bf16.xpose.msra.mxu0 0
    %705 = vmatpush.bf16.xpose.msra.mxu0 0
    %706 = vmatpush.bf16.xpose.msra.mxu0 0
    %707 = vmatpush.bf16.xpose.msra.mxu0 0
    %708 = vmatpush.bf16.xpose.msra.mxu0 0
    %709 = vmatpush.bf16.xpose.msra.mxu0 %v604
    %710 = vmatmul.bf16.gmra.mxu0 %v700
    %v711 = vpop.f32.mrf.mxu0
    %v712 = vadd.f32 0.0, %v711
    %v713 = vpop.f32.mrf.mxu0
    %v714 = vadd.f32 0.0, %v713
    %715 = vdwg.mxu0
    %v718 = vunpack.c.l.b16 %v580
    %v719 = vunpack.c.l.b16 %v581
    %v720 = vpack.c.b16 %v719, %v718
    %v722 = vsel %vm422, %v720, 0
    %724 = vmatpush.bf16.xpose.msra.mxu0 0
    %725 = vmatpush.bf16.xpose.msra.mxu0 0
    %726 = vmatpush.bf16.xpose.msra.mxu0 0
    %727 = vmatpush.bf16.xpose.msra.mxu0 0
    %728 = vmatpush.bf16.xpose.msra.mxu0 0
    %729 = vmatpush.bf16.xpose.msra.mxu0 0
    %730 = vmatpush.bf16.xpose.msra.mxu0 0
    %731 = vmatpush.bf16.xpose.msra.mxu0 %v634
    %732 = vmatmul.bf16.gmra.mxu0 %v722
    %v733 = vpop.f32.mrf.mxu0
    %v734 = vadd.f32 0.0, %v733
    %v735 = vpop.f32.mrf.mxu0
    %v736 = vadd.f32 0.0, %v735
    %737 = vdwg.mxu0
    %v740 = vunpack.c.l.b16 %v582
    %v741 = vunpack.c.l.b16 %v583
    %v742 = vpack.c.b16 %v741, %v740
    %v744 = vsel %vm422, %v742, 0
    %746 = vmatpush.bf16.xpose.msra.mxu0 0
    %747 = vmatpush.bf16.xpose.msra.mxu0 0
    %748 = vmatpush.bf16.xpose.msra.mxu0 0
    %749 = vmatpush.bf16.xpose.msra.mxu0 0
    %750 = vmatpush.bf16.xpose.msra.mxu0 0
    %751 = vmatpush.bf16.xpose.msra.mxu0 0
    %752 = vmatpush.bf16.xpose.msra.mxu0 0
    %753 = vmatpush.bf16.xpose.msra.mxu0 %v604
    %754 = vmatmul.bf16.gmra.mxu0 %v744
    %v755 = vpop.f32.mrf.mxu0
    %v756 = vadd.f32 0.0, %v755
    %v757 = vpop.f32.mrf.mxu0
    %v758 = vadd.f32 0.0, %v757
    %759 = vdwg.mxu0
    %v762 = vunpack.c.l.b16 %v584
    %v763 = vunpack.c.l.b16 %v585
    %v764 = vpack.c.b16 %v763, %v762
    %v766 = vsel %vm422, %v764, 0
    %768 = vmatpush.bf16.xpose.msra.mxu0 0
    %769 = vmatpush.bf16.xpose.msra.mxu0 0
    %770 = vmatpush.bf16.xpose.msra.mxu0 0
    %771 = vmatpush.bf16.xpose.msra.mxu0 0
    %772 = vmatpush.bf16.xpose.msra.mxu0 0
    %773 = vmatpush.bf16.xpose.msra.mxu0 0
    %774 = vmatpush.bf16.xpose.msra.mxu0 0
    %775 = vmatpush.bf16.xpose.msra.mxu0 %v634
    %776 = vmatmul.bf16.gmra.mxu0 %v766
    %v777 = vpop.f32.mrf.mxu0
    %v778 = vadd.f32 0.0, %v777
    %v779 = vpop.f32.mrf.mxu0
    %v780 = vadd.f32 0.0, %v779
    %781 = vdwg.mxu0
    %v782 = vsel %vm371, %v616, -inf
    %783 = vmax.xlane.f32.xlu0 %v782
    %v784 = vpop.xlane.xlu0 %783
    %v785 = vsel %vm371, %v618, -inf
    %786 = vmax.xlane.f32.xlu0 %v785
    %v787 = vpop.xlane.xlu0 %786
    %v788 = vsel %vm371, %v646, -inf
    %789 = vmax.xlane.f32.xlu0 %v788
    %v790 = vpop.xlane.xlu0 %789
    %v791 = vsel %vm371, %v648, -inf
    %792 = vmax.xlane.f32.xlu0 %v791
    %v793 = vpop.xlane.xlu0 %792
    %v794 = vsel %vm371, %v668, -inf
    %795 = vmax.xlane.f32.xlu0 %v794
    %v796 = vpop.xlane.xlu0 %795
    %v797 = vsel %vm371, %v670, -inf
    %798 = vmax.xlane.f32.xlu0 %v797
    %v799 = vpop.xlane.xlu0 %798
    %v800 = vsel %vm371, %v690, -inf
    %801 = vmax.xlane.f32.xlu0 %v800
    %v802 = vpop.xlane.xlu0 %801
    %v803 = vsel %vm371, %v692, -inf
    %804 = vmax.xlane.f32.xlu0 %v803
    %v805 = vpop.xlane.xlu0 %804
    %v806 = vsel %vm371, %v712, -inf
    %807 = vmax.xlane.f32.xlu0 %v806
    %v808 = vpop.xlane.xlu0 %807
    %v809 = vsel %vm371, %v714, -inf
    %810 = vmax.xlane.f32.xlu0 %v809
    %v811 = vpop.xlane.xlu0 %810
    %v812 = vsel %vm371, %v734, -inf
    %813 = vmax.xlane.f32.xlu0 %v812
    %v814 = vpop.xlane.xlu0 %813
    %v815 = vsel %vm371, %v736, -inf
    %816 = vmax.xlane.f32.xlu0 %v815
    %v817 = vpop.xlane.xlu0 %816
    %v818 = vsel %vm371, %v756, -inf
    %819 = vmax.xlane.f32.xlu0 %v818
    %v820 = vpop.xlane.xlu0 %819
    %v821 = vsel %vm371, %v758, -inf
    %822 = vmax.xlane.f32.xlu0 %v821
    %v823 = vpop.xlane.xlu0 %822
    %v824 = vsel %vm371, %v778, -inf
    %825 = vmax.xlane.f32.xlu0 %v824
    %v826 = vpop.xlane.xlu0 %825
    %v827 = vsel %vm371, %v780, -inf
    %828 = vmax.xlane.f32.xlu0 %v827
    %v829 = vpop.xlane.xlu0 %828
    %v830 = vsub.f32 %v616, %v784
    %v831 = vsub.f32 %v618, %v787
    %v832 = vsub.f32 %v646, %v790
    %v833 = vsub.f32 %v648, %v793
    %v834 = vsub.f32 %v668, %v796
    %v835 = vsub.f32 %v670, %v799
    %v836 = vsub.f32 %v690, %v802
    %v837 = vsub.f32 %v692, %v805
    %v838 = vsub.f32 %v712, %v808
    %v839 = vsub.f32 %v714, %v811
    %v840 = vsub.f32 %v734, %v814
    %v841 = vsub.f32 %v736, %v817
    %v842 = vsub.f32 %v756, %v820
    %v843 = vsub.f32 %v758, %v823
    %v844 = vsub.f32 %v778, %v826
    %v845 = vsub.f32 %v780, %v829
    %v846 = vmul.f32 %v830, 1.442695
    %v847 = vpow.pop %v846
    %v848 = vmul.f32 %v831, 1.442695
    %v849 = vpow.pop %v848
    %v850 = vmul.f32 %v832, 1.442695
    %v851 = vpow.pop %v850
    %v852 = vmul.f32 %v833, 1.442695
    %v853 = vpow.pop %v852
    %v854 = vmul.f32 %v834, 1.442695
    %v855 = vpow.pop %v854
    %v856 = vmul.f32 %v835, 1.442695
    %v857 = vpow.pop %v856
    %v858 = vmul.f32 %v836, 1.442695
    %v859 = vpow.pop %v858
    %v860 = vmul.f32 %v837, 1.442695
    %v861 = vpow.pop %v860
    %v862 = vmul.f32 %v838, 1.442695
    %v863 = vpow.pop %v862
    %v864 = vmul.f32 %v839, 1.442695
    %v865 = vpow.pop %v864
    %v866 = vmul.f32 %v840, 1.442695
    %v867 = vpow.pop %v866
    %v868 = vmul.f32 %v841, 1.442695
    %v869 = vpow.pop %v868
    %v870 = vmul.f32 %v842, 1.442695
    %v871 = vpow.pop %v870
    %v872 = vmul.f32 %v843, 1.442695
    %v873 = vpow.pop %v872
    %v874 = vmul.f32 %v844, 1.442695
    %v875 = vpow.pop %v874
    %v876 = vmul.f32 %v845, 1.442695
    %v877 = vpow.pop %v876
    %v878 = vsel %vm371, %v847, 0.0
    %879 = vadd.xlane.f32.xlu0 %v878
    %v880 = vpop.xlane.xlu0 %879
    %v881 = vsel %vm371, %v849, 0.0
    %882 = vadd.xlane.f32.xlu0 %v881
    %v883 = vpop.xlane.xlu0 %882
    %v884 = vsel %vm371, %v851, 0.0
    %885 = vadd.xlane.f32.xlu0 %v884
    %v886 = vpop.xlane.xlu0 %885
    %v887 = vsel %vm371, %v853, 0.0
    %888 = vadd.xlane.f32.xlu0 %v887
    %v889 = vpop.xlane.xlu0 %888
    %v890 = vsel %vm371, %v855, 0.0
    %891 = vadd.xlane.f32.xlu0 %v890
    %v892 = vpop.xlane.xlu0 %891
    %v893 = vsel %vm371, %v857, 0.0
    %894 = vadd.xlane.f32.xlu0 %v893
    %v895 = vpop.xlane.xlu0 %894
    %v896 = vsel %vm371, %v859, 0.0
    %897 = vadd.xlane.f32.xlu0 %v896
    %v898 = vpop.xlane.xlu0 %897
    %v899 = vsel %vm371, %v861, 0.0
    %900 = vadd.xlane.f32.xlu0 %v899
    %v901 = vpop.xlane.xlu0 %900
    %v902 = vsel %vm371, %v863, 0.0
    %903 = vadd.xlane.f32.xlu0 %v902
    %v904 = vpop.xlane.xlu0 %903
    %v905 = vsel %vm371, %v865, 0.0
    %906 = vadd.xlane.f32.xlu0 %v905
    %v907 = vpop.xlane.xlu0 %906
    %v908 = vsel %vm371, %v867, 0.0
    %909 = vadd.xlane.f32.xlu0 %v908
    %v910 = vpop.xlane.xlu0 %909
    %v911 = vsel %vm371, %v869, 0.0
    %912 = vadd.xlane.f32.xlu0 %v911
    %v913 = vpop.xlane.xlu0 %912
    %v914 = vsel %vm371, %v871, 0.0
    %915 = vadd.xlane.f32.xlu0 %v914
    %v916 = vpop.xlane.xlu0 %915
    %v917 = vsel %vm371, %v873, 0.0
    %918 = vadd.xlane.f32.xlu0 %v917
    %v919 = vpop.xlane.xlu0 %918
    %v920 = vsel %vm371, %v875, 0.0
    %921 = vadd.xlane.f32.xlu0 %v920
    %v922 = vpop.xlane.xlu0 %921
    %v923 = vsel %vm371, %v877, 0.0
    %924 = vadd.xlane.f32.xlu0 %v923
    %v925 = vpop.xlane.xlu0 %924
    %v926 = vrcp.pop %v880
    %v927 = vrcp.pop %v883
    %v928 = vrcp.pop %v886
    %v929 = vrcp.pop %v889
    %v930 = vrcp.pop %v892
    %v931 = vrcp.pop %v895
    %v932 = vrcp.pop %v898
    %v933 = vrcp.pop %v901
    %v934 = vrcp.pop %v904
    %v935 = vrcp.pop %v907
    %v936 = vrcp.pop %v910
    %v937 = vrcp.pop %v913
    %v938 = vrcp.pop %v916
    %v939 = vrcp.pop %v919
    %v940 = vrcp.pop %v922
    %v941 = vrcp.pop %v925
    %v942 = vmul.f32 %v847, %v926
    %v943 = vmul.f32 %v849, %v927
    %v944 = vmul.f32 %v851, %v928
    %v945 = vmul.f32 %v853, %v929
    %v946 = vmul.f32 %v855, %v930
    %v947 = vmul.f32 %v857, %v931
    %v948 = vmul.f32 %v859, %v932
    %v949 = vmul.f32 %v861, %v933
    %v950 = vmul.f32 %v863, %v934
    %v951 = vmul.f32 %v865, %v935
    %v952 = vmul.f32 %v867, %v936
    %v953 = vmul.f32 %v869, %v937
    %v954 = vmul.f32 %v871, %v938
    %v955 = vmul.f32 %v873, %v939
    %v956 = vmul.f32 %v875, %v940
    %v957 = vmul.f32 %v877, %v941
    %v958 = vpack.c.bf16 %v942, %v942
    %v959 = vpack.c.bf16 %v943, %v943
    %v960 = vpack.c.bf16 %v944, %v944
    %v961 = vpack.c.bf16 %v945, %v945
    %v962 = vpack.c.bf16 %v946, %v946
    %v963 = vpack.c.bf16 %v947, %v947
    %v964 = vpack.c.bf16 %v948, %v948
    %v965 = vpack.c.bf16 %v949, %v949
    %v966 = vpack.c.bf16 %v950, %v950
    %v967 = vpack.c.bf16 %v951, %v951
    %v968 = vpack.c.bf16 %v952, %v952
    %v969 = vpack.c.bf16 %v953, %v953
    %v970 = vpack.c.bf16 %v954, %v954
    %v971 = vpack.c.bf16 %v955, %v955
    %v972 = vpack.c.bf16 %v956, %v956
    %v973 = vpack.c.bf16 %v957, %v957
    %v974 = vpack.c.bf16 %v554, %v554
    %v975 = vpack.c.bf16 %v555, %v555
    %v976 = vpack.c.bf16 %v556, %v556
    %v977 = vpack.c.bf16 %v557, %v557
    %v978 = vpack.c.bf16 %v558, %v558
    %v979 = vpack.c.bf16 %v559, %v559
    %v980 = vpack.c.bf16 %v560, %v560
    %v981 = vpack.c.bf16 %v561, %v561
    %v982 = vpack.c.bf16 %v562, %v562
    %v983 = vpack.c.bf16 %v563, %v563
    %v984 = vpack.c.bf16 %v564, %v564
    %v985 = vpack.c.bf16 %v565, %v565
    %v986 = vpack.c.bf16 %v566, %v566
    %v987 = vpack.c.bf16 %v567, %v567
    %v988 = vpack.c.bf16 %v568, %v568
    %v989 = vpack.c.bf16 %v569, %v569
    %v992 = vunpack.c.l.b16 %v958
    %v993 = vunpack.c.l.b16 %v959
    %v994 = vpack.c.b16 %v993, %v992
    %v997 = vunpack.c.l.b16 %v974
    %v998 = vunpack.c.l.b16 %v975
    %v999 = vpack.c.b16 %v998, %v997
    %v1002 = vsel %vm371, %v994, 0
    %1004 = vmatpush.bf16.msra.mxu0 0
    %1005 = vmatpush.bf16.msra.mxu0 0
    %1006 = vmatpush.bf16.msra.mxu0 0
    %1007 = vmatpush.bf16.msra.mxu0 0
    %1008 = vmatpush.bf16.msra.mxu0 0
    %1009 = vmatpush.bf16.msra.mxu0 0
    %1010 = vmatpush.bf16.msra.mxu0 0
    %1011 = vmatpush.bf16.msra.mxu0 %v999
    %1012 = vmatmul.bf16.gmra.mxu0 %v1002
    %v1013 = vpop.f32.mrf.mxu0
    %v1014 = vadd.f32 0.0, %v1013
    %v1015 = vpop.f32.mrf.mxu0
    %v1016 = vadd.f32 0.0, %v1015
    %1017 = vdwg.mxu0
    %v1020 = vunpack.c.l.b16 %v960
    %v1021 = vunpack.c.l.b16 %v961
    %v1022 = vpack.c.b16 %v1021, %v1020
    %v1025 = vunpack.c.l.b16 %v976
    %v1026 = vunpack.c.l.b16 %v977
    %v1027 = vpack.c.b16 %v1026, %v1025
    %v1030 = vsel %vm371, %v1022, 0
    %1032 = vmatpush.bf16.msra.mxu0 0
    %1033 = vmatpush.bf16.msra.mxu0 0
    %1034 = vmatpush.bf16.msra.mxu0 0
    %1035 = vmatpush.bf16.msra.mxu0 0
    %1036 = vmatpush.bf16.msra.mxu0 0
    %1037 = vmatpush.bf16.msra.mxu0 0
    %1038 = vmatpush.bf16.msra.mxu0 0
    %1039 = vmatpush.bf16.msra.mxu0 %v1027
    %1040 = vmatmul.bf16.gmra.mxu0 %v1030
    %v1041 = vpop.f32.mrf.mxu0
    %v1042 = vadd.f32 0.0, %v1041
    %v1043 = vpop.f32.mrf.mxu0
    %v1044 = vadd.f32 0.0, %v1043
    %1045 = vdwg.mxu0
    %v1048 = vunpack.c.l.b16 %v962
    %v1049 = vunpack.c.l.b16 %v963
    %v1050 = vpack.c.b16 %v1049, %v1048
    %v1053 = vunpack.c.l.b16 %v978
    %v1054 = vunpack.c.l.b16 %v979
    %v1055 = vpack.c.b16 %v1054, %v1053
    %v1058 = vsel %vm371, %v1050, 0
    %1060 = vmatpush.bf16.msra.mxu0 0
    %1061 = vmatpush.bf16.msra.mxu0 0
    %1062 = vmatpush.bf16.msra.mxu0 0
    %1063 = vmatpush.bf16.msra.mxu0 0
    %1064 = vmatpush.bf16.msra.mxu0 0
    %1065 = vmatpush.bf16.msra.mxu0 0
    %1066 = vmatpush.bf16.msra.mxu0 0
    %1067 = vmatpush.bf16.msra.mxu0 %v1055
    %1068 = vmatmul.bf16.gmra.mxu0 %v1058
    %v1069 = vpop.f32.mrf.mxu0
    %v1070 = vadd.f32 0.0, %v1069
    %v1071 = vpop.f32.mrf.mxu0
    %v1072 = vadd.f32 0.0, %v1071
    %1073 = vdwg.mxu0
    %v1076 = vunpack.c.l.b16 %v964
    %v1077 = vunpack.c.l.b16 %v965
    %v1078 = vpack.c.b16 %v1077, %v1076
    %v1081 = vunpack.c.l.b16 %v980
    %v1082 = vunpack.c.l.b16 %v981
    %v1083 = vpack.c.b16 %v1082, %v1081
    %v1086 = vsel %vm371, %v1078, 0
    %1088 = vmatpush.bf16.msra.mxu0 0
    %1089 = vmatpush.bf16.msra.mxu0 0
    %1090 = vmatpush.bf16.msra.mxu0 0
    %1091 = vmatpush.bf16.msra.mxu0 0
    %1092 = vmatpush.bf16.msra.mxu0 0
    %1093 = vmatpush.bf16.msra.mxu0 0
    %1094 = vmatpush.bf16.msra.mxu0 0
    %1095 = vmatpush.bf16.msra.mxu0 %v1083
    %1096 = vmatmul.bf16.gmra.mxu0 %v1086
    %v1097 = vpop.f32.mrf.mxu0
    %v1098 = vadd.f32 0.0, %v1097
    %v1099 = vpop.f32.mrf.mxu0
    %v1100 = vadd.f32 0.0, %v1099
    %1101 = vdwg.mxu0
    %v1104 = vunpack.c.l.b16 %v966
    %v1105 = vunpack.c.l.b16 %v967
    %v1106 = vpack.c.b16 %v1105, %v1104
    %v1109 = vunpack.c.l.b16 %v982
    %v1110 = vunpack.c.l.b16 %v983
    %v1111 = vpack.c.b16 %v1110, %v1109
    %v1114 = vsel %vm371, %v1106, 0
    %1116 = vmatpush.bf16.msra.mxu0 0
    %1117 = vmatpush.bf16.msra.mxu0 0
    %1118 = vmatpush.bf16.msra.mxu0 0
    %1119 = vmatpush.bf16.msra.mxu0 0
    %1120 = vmatpush.bf16.msra.mxu0 0
    %1121 = vmatpush.bf16.msra.mxu0 0
    %1122 = vmatpush.bf16.msra.mxu0 0
    %1123 = vmatpush.bf16.msra.mxu0 %v1111
    %1124 = vmatmul.bf16.gmra.mxu0 %v1114
    %v1125 = vpop.f32.mrf.mxu0
    %v1126 = vadd.f32 0.0, %v1125
    %v1127 = vpop.f32.mrf.mxu0
    %v1128 = vadd.f32 0.0, %v1127
    %1129 = vdwg.mxu0
    %v1132 = vunpack.c.l.b16 %v968
    %v1133 = vunpack.c.l.b16 %v969
    %v1134 = vpack.c.b16 %v1133, %v1132
    %v1137 = vunpack.c.l.b16 %v984
    %v1138 = vunpack.c.l.b16 %v985
    %v1139 = vpack.c.b16 %v1138, %v1137
    %v1142 = vsel %vm371, %v1134, 0
    %1144 = vmatpush.bf16.msra.mxu0 0
    %1145 = vmatpush.bf16.msra.mxu0 0
    %1146 = vmatpush.bf16.msra.mxu0 0
    %1147 = vmatpush.bf16.msra.mxu0 0
    %1148 = vmatpush.bf16.msra.mxu0 0
    %1149 = vmatpush.bf16.msra.mxu0 0
    %1150 = vmatpush.bf16.msra.mxu0 0
    %1151 = vmatpush.bf16.msra.mxu0 %v1139
    %1152 = vmatmul.bf16.gmra.mxu0 %v1142
    %v1153 = vpop.f32.mrf.mxu0
    %v1154 = vadd.f32 0.0, %v1153
    %v1155 = vpop.f32.mrf.mxu0
    %v1156 = vadd.f32 0.0, %v1155
    %1157 = vdwg.mxu0
    %v1160 = vunpack.c.l.b16 %v970
    %v1161 = vunpack.c.l.b16 %v971
    %v1162 = vpack.c.b16 %v1161, %v1160
    %v1165 = vunpack.c.l.b16 %v986
    %v1166 = vunpack.c.l.b16 %v987
    %v1167 = vpack.c.b16 %v1166, %v1165
    %v1170 = vsel %vm371, %v1162, 0
    %1172 = vmatpush.bf16.msra.mxu0 0
    %1173 = vmatpush.bf16.msra.mxu0 0
    %1174 = vmatpush.bf16.msra.mxu0 0
    %1175 = vmatpush.bf16.msra.mxu0 0
    %1176 = vmatpush.bf16.msra.mxu0 0
    %1177 = vmatpush.bf16.msra.mxu0 0
    %1178 = vmatpush.bf16.msra.mxu0 0
    %1179 = vmatpush.bf16.msra.mxu0 %v1167
    %1180 = vmatmul.bf16.gmra.mxu0 %v1170
    %v1181 = vpop.f32.mrf.mxu0
    %v1182 = vadd.f32 0.0, %v1181
    %v1183 = vpop.f32.mrf.mxu0
    %v1184 = vadd.f32 0.0, %v1183
    %1185 = vdwg.mxu0
    %v1188 = vunpack.c.l.b16 %v972
    %v1189 = vunpack.c.l.b16 %v973
    %v1190 = vpack.c.b16 %v1189, %v1188
    %v1193 = vunpack.c.l.b16 %v988
    %v1194 = vunpack.c.l.b16 %v989
    %v1195 = vpack.c.b16 %v1194, %v1193
    %v1198 = vsel %vm371, %v1190, 0
    %1200 = vmatpush.bf16.msra.mxu0 0
    %1201 = vmatpush.bf16.msra.mxu0 0
    %1202 = vmatpush.bf16.msra.mxu0 0
    %1203 = vmatpush.bf16.msra.mxu0 0
    %1204 = vmatpush.bf16.msra.mxu0 0
    %1205 = vmatpush.bf16.msra.mxu0 0
    %1206 = vmatpush.bf16.msra.mxu0 0
    %1207 = vmatpush.bf16.msra.mxu0 %v1195
    %1208 = vmatmul.bf16.gmra.mxu0 %v1198
    %v1209 = vpop.f32.mrf.mxu0
    %v1210 = vadd.f32 0.0, %v1209
    %v1211 = vpop.f32.mrf.mxu0
    %v1212 = vadd.f32 0.0, %v1211
    %1213 = vdwg.mxu0
    %v1214 = vadd.f32 %v1014, %v1070
    %v1215 = vadd.f32 %v1016, %v1072
    %v1216 = vadd.f32 %v1042, %v1098
    %v1217 = vadd.f32 %v1044, %v1100
    %v1218 = vadd.f32 %v1214, %v1126
    %v1219 = vadd.f32 %v1215, %v1128
    %v1220 = vadd.f32 %v1216, %v1154
    %v1221 = vadd.f32 %v1217, %v1156
    %v1222 = vadd.f32 %v1218, %v1182
    %v1223 = vadd.f32 %v1219, %v1184
    %v1224 = vadd.f32 %v1220, %v1210
    %v1225 = vadd.f32 %v1221, %v1212
    %v1226 = vld [vmem:[#allocation16] sm:$0xff]
    %v1227 = vld [vmem:[#allocation16 + $0x8] sm:$0xff]
    %v1228 = vld [vmem:[#allocation16 + $0x10] sm:$0xff]
    %v1229 = vld [vmem:[#allocation16 + $0x18] sm:$0xff]
    %v1230 = vpack.c.bf16 %v1223, %v1222
    %v1231 = vpack.c.bf16 %v1225, %v1224
    %v1232 = vpack.c.bf16 %v1227, %v1226
    %v1233 = vpack.c.bf16 %v1229, %v1228
    %v1234 = vld [vmem:[#allocation17] sm:$0x1]
    %v1236 = vperm.slane %v1234, 0
    %v1239 = vsel %vm422, %v1230, 0
    %v1242 = vsel %vm422, %v1231, 0
    %1244 = vmatpush.bf16.msra.mxu0 0
    %1245 = vmatpush.bf16.msra.mxu0 0
    %1246 = vmatpush.bf16.msra.mxu0 0
    %1247 = vmatpush.bf16.msra.mxu0 0
    %1248 = vmatpush.bf16.msra.mxu0 0
    %1249 = vmatpush.bf16.msra.mxu0 0
    %1250 = vmatpush.bf16.msra.mxu0 %v1233
    %1251 = vmatpush.bf16.msra.mxu0 %v1232
    %1252 = vmatmul.bf16.gmra.mxu0 %v1239
    %v1253 = vpop.f32.mrf.mxu0
    %v1254 = vadd.f32 %v1236, %v1253
    %v1255 = vpop.f32.mrf.mxu0
    %v1256 = vadd.f32 %v1236, %v1255
    %1257 = vmatmul.bf16.gmra.mxu0 %v1242
    %v1258 = vpop.f32.mrf.mxu0
    %v1259 = vadd.f32 %v1236, %v1258
    %v1260 = vpop.f32.mrf.mxu0
    %v1261 = vadd.f32 %v1236, %v1260
    %1262 = vdwg.mxu0
    %v1263 = vadd.f32 %v388, %v1254
    %v1264 = vadd.f32 %v390, %v1256
    %v1265 = vadd.f32 %v393, %v1259
    %v1266 = vadd.f32 %v395, %v1261
    %v1267 = vld [vmem:[#allocation19] sm:$0x1]
    %v1268 = vld [vmem:[#allocation20] sm:$0x1]
    %v1269 = vsel %vm422, %v1263, 0.0
    %1270 = vadd.xlane.f32.xlu0 %v1269
    %v1271 = vpop.xlane.xlu0 %1270
    %v1272 = vsel %vm422, %v1264, 0.0
    %1273 = vadd.xlane.f32.xlu0 %v1272
    %v1274 = vpop.xlane.xlu0 %1273
    %v1275 = vsel %vm422, %v1265, 0.0
    %1276 = vadd.xlane.f32.xlu0 %v1275
    %v1277 = vpop.xlane.xlu0 %1276
    %v1278 = vsel %vm422, %v1266, 0.0
    %1279 = vadd.xlane.f32.xlu0 %v1278
    %v1280 = vpop.xlane.xlu0 %1279
    %v1281 = vrcp.pop 32.0
    %v1282 = vmul.f32 32.0, %v1281
    %v1283 = vsub.f32 1.0, %v1282
    %v1284 = vmul.f32 %v1281, %v1283
    %v1285 = vadd.f32 %v1281, %v1284
    %vm1286 = vweird.f32 %v1281
    %v1287 = vsel %vm1286, %v1281, %v1285
    %v1288 = vmul.f32 %v1271, %v1287
    %v1289 = vmul.f32 %v1274, %v1287
    %v1290 = vmul.f32 %v1277, %v1287
    %v1291 = vmul.f32 %v1280, %v1287
    %v1292 = vsub.f32 %v1263, %v1288
    %v1293 = vsub.f32 %v1264, %v1289
    %v1294 = vsub.f32 %v1265, %v1290
    %v1295 = vsub.f32 %v1266, %v1291
    %v1296 = vmul.f32 %v1292, %v1292
    %v1297 = vmul.f32 %v1293, %v1293
    %v1298 = vmul.f32 %v1294, %v1294
    %v1299 = vmul.f32 %v1295, %v1295
    %v1300 = vsel %vm422, %v1296, 0.0
    %1301 = vadd.xlane.f32.xlu0 %v1300
    %v1302 = vpop.xlane.xlu0 %1301
    %v1303 = vsel %vm422, %v1297, 0.0
    %1304 = vadd.xlane.f32.xlu0 %v1303
    %v1305 = vpop.xlane.xlu0 %1304
    %v1306 = vsel %vm422, %v1298, 0.0
    %1307 = vadd.xlane.f32.xlu0 %v1306
    %v1308 = vpop.xlane.xlu0 %1307
    %v1309 = vsel %vm422, %v1299, 0.0
    %1310 = vadd.xlane.f32.xlu0 %v1309
    %v1311 = vpop.xlane.xlu0 %1310
    %v1312 = vmul.f32 %v1302, %v1287
    %v1313 = vmul.f32 %v1305, %v1287
    %v1314 = vmul.f32 %v1308, %v1287
    %v1315 = vmul.f32 %v1311, %v1287
    %v1316 = vadd.f32 %v1312, 1e-05
    %v1317 = vadd.f32 %v1313, 1e-05
    %v1318 = vadd.f32 %v1314, 1e-05
    %v1319 = vadd.f32 %v1315, 1e-05
    %v1320 = vrsqrt.pop %v1316
    %v1321 = vmul.f32 %v1320, %v1316
    %v1322 = vmul.f32 %v1321, %v1320
    %v1323 = vmul.f32 0.5, %v1322
    %v1324 = vsub.f32 1.5, %v1323
    %v1325 = vmul.f32 %v1320, %v1324
    %vm1326 = vweird.f32 %v1316
    %vm1327 = vweird.f32 %v1320
    %vm1328 = vmor %vm1326, %vm1327
    %v1329 = vsel %vm1328, %v1320, %v1325
    %v1330 = vrsqrt.pop %v1317
    %v1331 = vmul.f32 %v1330, %v1317
    %v1332 = vmul.f32 %v1331, %v1330
    %v1333 = vmul.f32 0.5, %v1332
    %v1334 = vsub.f32 1.5, %v1333
    %v1335 = vmul.f32 %v1330, %v1334
    %vm1336 = vweird.f32 %v1317
    %vm1337 = vweird.f32 %v1330
    %vm1338 = vmor %vm1336, %vm1337
    %v1339 = vsel %vm1338, %v1330, %v1335
    %v1340 = vrsqrt.pop %v1318
    %v1341 = vmul.f32 %v1340, %v1318
    %v1342 = vmul.f32 %v1341, %v1340
    %v1343 = vmul.f32 0.5, %v1342
    %v1344 = vsub.f32 1.5, %v1343
    %v1345 = vmul.f32 %v1340, %v1344
    %vm1346 = vweird.f32 %v1318
    %vm1347 = vweird.f32 %v1340
    %vm1348 = vmor %vm1346, %vm1347
    %v1349 = vsel %vm1348, %v1340, %v1345
    %v1350 = vrsqrt.pop %v1319
    %v1351 = vmul.f32 %v1350, %v1319
    %v1352 = vmul.f32 %v1351, %v1350
    %v1353 = vmul.f32 0.5, %v1352
    %v1354 = vsub.f32 1.5, %v1353
    %v1355 = vmul.f32 %v1350, %v1354
    %vm1356 = vweird.f32 %v1319
    %vm1357 = vweird.f32 %v1350
    %vm1358 = vmor %vm1356, %vm1357
    %v1359 = vsel %vm1358, %v1350, %v1355
    %v1360 = vmul.f32 %v1292, %v1329
    %v1361 = vmul.f32 %v1293, %v1339
    %v1362 = vmul.f32 %v1294, %v1349
    %v1363 = vmul.f32 %v1295, %v1359
    %v1365 = vperm.slane %v1267, 0
    %v1367 = vmul.f32 %v1360, %v1365
    %v1368 = vmul.f32 %v1361, %v1365
    %v1369 = vmul.f32 %v1362, %v1365
    %v1370 = vmul.f32 %v1363, %v1365
    %v1372 = vperm.slane %v1268, 0
    %v1374 = vadd.f32 %v1367, %v1372
    %v1375 = vadd.f32 %v1368, %v1372
    %v1376 = vadd.f32 %v1369, %v1372
    %v1377 = vadd.f32 %v1370, %v1372
    %v1378 = vld [vmem:[#allocation22] sm:$0xff]
    %v1379 = vld [vmem:[#allocation22 + $0x8] sm:$0xff]
    %v1380 = vld [vmem:[#allocation22 + $0x10] sm:$0xff]
    %v1381 = vld [vmem:[#allocation22 + $0x18] sm:$0xff]
    %v1382 = vpack.c.bf16 %v1375, %v1374
    %v1383 = vpack.c.bf16 %v1377, %v1376
    %v1384 = vpack.c.bf16 %v1379, %v1378
    %v1385 = vpack.c.bf16 %v1381, %v1380
    %v1386 = vld [vmem:[#allocation23] sm:$0x1]
    %v1388 = vperm.slane %v1386, 0
    %v1391 = vsel %vm422, %v1382, 0
    %v1394 = vsel %vm422, %v1383, 0
    %1396 = vmatpush.bf16.msra.mxu0 0
    %1397 = vmatpush.bf16.msra.mxu0 0
    %1398 = vmatpush.bf16.msra.mxu0 0
    %1399 = vmatpush.bf16.msra.mxu0 0
    %1400 = vmatpush.bf16.msra.mxu0 0
    %1401 = vmatpush.bf16.msra.mxu0 0
    %1402 = vmatpush.bf16.msra.mxu0 %v1385
    %1403 = vmatpush.bf16.msra.mxu0 %v1384
    %1404 = vmatmul.bf16.gmra.mxu0 %v1391
    %v1405 = vpop.f32.mrf.mxu0
    %v1406 = vadd.f32 %v1388, %v1405
    %v1407 = vpop.f32.mrf.mxu0
    %v1408 = vadd.f32 %v1388, %v1407
    %1409 = vmatmul.bf16.gmra.mxu0 %v1394
    %v1410 = vpop.f32.mrf.mxu0
    %v1411 = vadd.f32 %v1388, %v1410
    %v1412 = vpop.f32.mrf.mxu0
    %v1413 = vadd.f32 %v1388, %v1412
    %1414 = vdwg.mxu0
    %v1415 = vmax.f32 %v1406, 0.0
    %v1416 = vmax.f32 %v1408, 0.0
    %v1417 = vmax.f32 %v1411, 0.0
    %v1418 = vmax.f32 %v1413, 0.0
    %v1419 = vld [vmem:[%s17] sm:$0xff]
    %v1420 = vld [vmem:[%s17 + $0x8] sm:$0xff]
    %v1421 = vld [vmem:[%s17 + $0x10] sm:$0xff]
    %v1422 = vld [vmem:[%s17 + $0x18] sm:$0xff]
    %v1423 = vld [vmem:[%s17 + $0x20] sm:$0xff]
    %v1424 = vld [vmem:[%s17 + $0x28] sm:$0xff]
    %v1425 = vld [vmem:[%s17 + $0x30] sm:$0xff]
    %v1426 = vld [vmem:[%s17 + $0x38] sm:$0xff]
    %v1427 = vpack.c.bf16 %v1416, %v1415
    %v1428 = vpack.c.bf16 %v1418, %v1417
    %v1429 = vpack.c.bf16 %v1420, %v1419
    %v1430 = vpack.c.bf16 %v1422, %v1421
    %v1431 = vpack.c.bf16 %v1424, %v1423
    %v1432 = vpack.c.bf16 %v1426, %v1425
    %vm1433 = vcmask 523264
    %v1435 = vsel %vm1433, %v1427, 0
    %v1438 = vsel %vm1433, %v1428, 0
    %1440 = vmatpush.bf16.msra.mxu0 0
    %1441 = vmatpush.bf16.msra.mxu0 0
    %1442 = vmatpush.bf16.msra.mxu0 0
    %1443 = vmatpush.bf16.msra.mxu0 0
    %1444 = vmatpush.bf16.msra.mxu0 %v1432
    %1445 = vmatpush.bf16.msra.mxu0 %v1431
    %1446 = vmatpush.bf16.msra.mxu0 %v1430
    %1447 = vmatpush.bf16.msra.mxu0 %v1429
    %1448 = vmatmul.bf16.gmra.mxu0 %v1435
    %v1449 = vpop.f32.mrf.mxu0
    %v1450 = vadd.f32 0.0, %v1449
    %v1451 = vpop.f32.mrf.mxu0
    %v1452 = vadd.f32 0.0, %v1451
    %1453 = vmatmul.bf16.gmra.mxu0 %v1438
    %v1454 = vpop.f32.mrf.mxu0
    %v1455 = vadd.f32 0.0, %v1454
    %v1456 = vpop.f32.mrf.mxu0
    %v1457 = vadd.f32 0.0, %v1456
    %1458 = vdwg.mxu0
    %v1459 = vadd.f32 %v1374, %v1450
    %v1460 = vadd.f32 %v1375, %v1452
    %v1461 = vadd.f32 %v1376, %v1455
    %v1462 = vadd.f32 %v1377, %v1457
    %v1463 = vld [vmem:[#allocation25] sm:$0x1]
    %v1465 = vperm.slane %v1463, 0
    %v1467 = vadd.f32 %v1459, %v1465
    %v1468 = vadd.f32 %v1460, %v1465
    %v1469 = vadd.f32 %v1461, %v1465
    %v1470 = vadd.f32 %v1462, %v1465
    %v1471 = vld [vmem:[#allocation26] sm:$0x1]
    %v1472 = vld [vmem:[#allocation28] sm:$0x1]
    %v1473 = vsel %vm422, %v1467, 0.0
    %1474 = vadd.xlane.f32.xlu0 %v1473
    %v1475 = vpop.xlane.xlu0 %1474
    %v1476 = vsel %vm422, %v1468, 0.0
    %1477 = vadd.xlane.f32.xlu0 %v1476
    %v1478 = vpop.xlane.xlu0 %1477
    %v1479 = vsel %vm422, %v1469, 0.0
    %1480 = vadd.xlane.f32.xlu0 %v1479
    %v1481 = vpop.xlane.xlu0 %1480
    %v1482 = vsel %vm422, %v1470, 0.0
    %1483 = vadd.xlane.f32.xlu0 %v1482
    %v1484 = vpop.xlane.xlu0 %1483
    %v1485 = vmul.f32 %v1475, %v1287
    %v1486 = vmul.f32 %v1478, %v1287
    %v1487 = vmul.f32 %v1481, %v1287
    %v1488 = vmul.f32 %v1484, %v1287
    %v1489 = vsub.f32 %v1467, %v1485
    %v1490 = vsub.f32 %v1468, %v1486
    %v1491 = vsub.f32 %v1469, %v1487
    %v1492 = vsub.f32 %v1470, %v1488
    %v1493 = vmul.f32 %v1489, %v1489
    %v1494 = vmul.f32 %v1490, %v1490
    %v1495 = vmul.f32 %v1491, %v1491
    %v1496 = vmul.f32 %v1492, %v1492
    %v1497 = vsel %vm422, %v1493, 0.0
    %1498 = vadd.xlane.f32.xlu0 %v1497
    %v1499 = vpop.xlane.xlu0 %1498
    %v1500 = vsel %vm422, %v1494, 0.0
    %1501 = vadd.xlane.f32.xlu0 %v1500
    %v1502 = vpop.xlane.xlu0 %1501
    %v1503 = vsel %vm422, %v1495, 0.0
    %1504 = vadd.xlane.f32.xlu0 %v1503
    %v1505 = vpop.xlane.xlu0 %1504
    %v1506 = vsel %vm422, %v1496, 0.0
    %1507 = vadd.xlane.f32.xlu0 %v1506
    %v1508 = vpop.xlane.xlu0 %1507
    %v1509 = vmul.f32 %v1499, %v1287
    %v1510 = vmul.f32 %v1502, %v1287
    %v1511 = vmul.f32 %v1505, %v1287
    %v1512 = vmul.f32 %v1508, %v1287
    %v1513 = vadd.f32 %v1509, 1e-05
    %v1514 = vadd.f32 %v1510, 1e-05
    %v1515 = vadd.f32 %v1511, 1e-05
    %v1516 = vadd.f32 %v1512, 1e-05
    %v1517 = vrsqrt.pop %v1513
    %v1518 = vmul.f32 %v1517, %v1513
    %v1519 = vmul.f32 %v1518, %v1517
    %v1520 = vmul.f32 0.5, %v1519
    %v1521 = vsub.f32 1.5, %v1520
    %v1522 = vmul.f32 %v1517, %v1521
    %vm1523 = vweird.f32 %v1513
    %vm1524 = vweird.f32 %v1517
    %vm1525 = vmor %vm1523, %vm1524
    %v1526 = vsel %vm1525, %v1517, %v1522
    %v1527 = vrsqrt.pop %v1514
    %v1528 = vmul.f32 %v1527, %v1514
    %v1529 = vmul.f32 %v1528, %v1527
    %v1530 = vmul.f32 0.5, %v1529
    %v1531 = vsub.f32 1.5, %v1530
    %v1532 = vmul.f32 %v1527, %v1531
    %vm1533 = vweird.f32 %v1514
    %vm1534 = vweird.f32 %v1527
    %vm1535 = vmor %vm1533, %vm1534
    %v1536 = vsel %vm1535, %v1527, %v1532
    %v1537 = vrsqrt.pop %v1515
    %v1538 = vmul.f32 %v1537, %v1515
    %v1539 = vmul.f32 %v1538, %v1537
    %v1540 = vmul.f32 0.5, %v1539
    %v1541 = vsub.f32 1.5, %v1540
    %v1542 = vmul.f32 %v1537, %v1541
    %vm1543 = vweird.f32 %v1515
    %vm1544 = vweird.f32 %v1537
    %vm1545 = vmor %vm1543, %vm1544
    %v1546 = vsel %vm1545, %v1537, %v1542
    %v1547 = vrsqrt.pop %v1516
    %v1548 = vmul.f32 %v1547, %v1516
    %v1549 = vmul.f32 %v1548, %v1547
    %v1550 = vmul.f32 0.5, %v1549
    %v1551 = vsub.f32 1.5, %v1550
    %v1552 = vmul.f32 %v1547, %v1551
    %vm1553 = vweird.f32 %v1516
    %vm1554 = vweird.f32 %v1547
    %vm1555 = vmor %vm1553, %vm1554
    %v1556 = vsel %vm1555, %v1547, %v1552
    %v1557 = vmul.f32 %v1489, %v1526
    %v1558 = vmul.f32 %v1490, %v1536
    %v1559 = vmul.f32 %v1491, %v1546
    %v1560 = vmul.f32 %v1492, %v1556
    %v1562 = vperm.slane %v1471, 0
    %v1564 = vmul.f32 %v1557, %v1562
    %v1565 = vmul.f32 %v1558, %v1562
    %v1566 = vmul.f32 %v1559, %v1562
    %v1567 = vmul.f32 %v1560, %v1562
    %v1569 = vperm.slane %v1472, 0
    %v1571 = vadd.f32 %v1564, %v1569
    %v1572 = vadd.f32 %v1565, %v1569
    %v1573 = vadd.f32 %v1566, %v1569
    %v1574 = vadd.f32 %v1567, %v1569
    %v1575 = vadd.f32 %v1571, %v397
    %v1576 = vadd.f32 %v1572, %v398
    %v1577 = vadd.f32 %v1573, %v399
    %v1578 = vadd.f32 %v1574, %v400
    %s1579 = scalar_lea.vmem %s5, 32
    %v1580 = vld [vmem:[%s1579] sm:$0xff]
    %v1581 = vld [vmem:[%s1579 + $0x8] sm:$0xff]
    %v1582 = vld [vmem:[%s1579 + $0x10] sm:$0xff]
    %v1583 = vld [vmem:[%s1579 + $0x18] sm:$0xff]
    %v1584 = vpack.c.bf16 %v1576, %v1575
    %v1585 = vpack.c.bf16 %v1578, %v1577
    %v1586 = vpack.c.bf16 %v1581, %v1580
    %v1587 = vpack.c.bf16 %v1583, %v1582
    %s1588 = scalar_lea.vmem [#allocation8], 1
    %v1589 = vld [vmem:[%s1588] sm:$0x1]
    %v1591 = vperm.slane %v1589, 0
    %v1594 = vsel %vm422, %v1584, 0
    %v1597 = vsel %vm422, %v1585, 0
    %1599 = vmatpush.bf16.msra.mxu0 0
    %1600 = vmatpush.bf16.msra.mxu0 0
    %1601 = vmatpush.bf16.msra.mxu0 0
    %1602 = vmatpush.bf16.msra.mxu0 0
    %1603 = vmatpush.bf16.msra.mxu0 0
    %1604 = vmatpush.bf16.msra.mxu0 0
    %1605 = vmatpush.bf16.msra.mxu0 %v1587
    %1606 = vmatpush.bf16.msra.mxu0 %v1586
    %1607 = vmatmul.bf16.gmra.mxu0 %v1594
    %v1608 = vpop.f32.mrf.mxu0
    %v1609 = vadd.f32 %v1591, %v1608
    %v1610 = vpop.f32.mrf.mxu0
    %v1611 = vadd.f32 %v1591, %v1610
    %1612 = vmatmul.bf16.gmra.mxu0 %v1597
    %v1613 = vpop.f32.mrf.mxu0
    %v1614 = vadd.f32 %v1591, %v1613
    %v1615 = vpop.f32.mrf.mxu0
    %v1616 = vadd.f32 %v1591, %v1615
    %1617 = vdwg.mxu0
    %s1618 = scalar_lea.vmem [#allocation10], 32
    %v1619 = vld [vmem:[%s1618] sm:$0xff]
    %v1620 = vld [vmem:[%s1618 + $0x8] sm:$0xff]
    %v1621 = vld [vmem:[%s1618 + $0x10] sm:$0xff]
    %v1622 = vld [vmem:[%s1618 + $0x18] sm:$0xff]
    %v1623 = vpack.c.bf16 %v1620, %v1619
    %v1624 = vpack.c.bf16 %v1622, %v1621
    %s1625 = scalar_lea.vmem [#allocation11], 1
    %v1626 = vld [vmem:[%s1625] sm:$0x1]
    %v1628 = vperm.slane %v1626, 0
    %1630 = vmatpush.bf16.msra.mxu0 0
    %1631 = vmatpush.bf16.msra.mxu0 0
    %1632 = vmatpush.bf16.msra.mxu0 0
    %1633 = vmatpush.bf16.msra.mxu0 0
    %1634 = vmatpush.bf16.msra.mxu0 0
    %1635 = vmatpush.bf16.msra.mxu0 0
    %1636 = vmatpush.bf16.msra.mxu0 %v1624
    %1637 = vmatpush.bf16.msra.mxu0 %v1623
    %1638 = vmatmul.bf16.gmra.mxu0 %v1594
    %v1639 = vpop.f32.mrf.mxu0
    %v1640 = vadd.f32 %v1628, %v1639
    %v1641 = vpop.f32.mrf.mxu0
    %v1642 = vadd.f32 %v1628, %v1641
    %1643 = vmatmul.bf16.gmra.mxu0 %v1597
    %v1644 = vpop.f32.mrf.mxu0
    %v1645 = vadd.f32 %v1628, %v1644
    %v1646 = vpop.f32.mrf.mxu0
    %v1647 = vadd.f32 %v1628, %v1646
    %1648 = vdwg.mxu0
    %s1649 = scalar_lea.vmem [#allocation13], 32
    %v1650 = vld [vmem:[%s1649] sm:$0xff]
    %v1651 = vld [vmem:[%s1649 + $0x8] sm:$0xff]
    %v1652 = vld [vmem:[%s1649 + $0x10] sm:$0xff]
    %v1653 = vld [vmem:[%s1649 + $0x18] sm:$0xff]
    %v1654 = vpack.c.bf16 %v1572, %v1571
    %v1655 = vpack.c.bf16 %v1574, %v1573
    %v1656 = vpack.c.bf16 %v1651, %v1650
    %v1657 = vpack.c.bf16 %v1653, %v1652
    %s1658 = scalar_lea.vmem [#allocation14], 1
    %v1659 = vld [vmem:[%s1658] sm:$0x1]
    %v1661 = vperm.slane %v1659, 0
    %v1664 = vsel %vm422, %v1654, 0
    %v1667 = vsel %vm422, %v1655, 0
    %1669 = vmatpush.bf16.msra.mxu0 0
    %1670 = vmatpush.bf16.msra.mxu0 0
    %1671 = vmatpush.bf16.msra.mxu0 0
    %1672 = vmatpush.bf16.msra.mxu0 0
    %1673 = vmatpush.bf16.msra.mxu0 0
    %1674 = vmatpush.bf16.msra.mxu0 0
    %1675 = vmatpush.bf16.msra.mxu0 %v1657
    %1676 = vmatpush.bf16.msra.mxu0 %v1656
    %1677 = vmatmul.bf16.gmra.mxu0 %v1664
    %v1678 = vpop.f32.mrf.mxu0
    %v1679 = vadd.f32 %v1661, %v1678
    %v1680 = vpop.f32.mrf.mxu0
    %v1681 = vadd.f32 %v1661, %v1680
    %1682 = vmatmul.bf16.gmra.mxu0 %v1667
    %v1683 = vpop.f32.mrf.mxu0
    %v1684 = vadd.f32 %v1661, %v1683
    %v1685 = vpop.f32.mrf.mxu0
    %v1686 = vadd.f32 %v1661, %v1685
    %1687 = vdwg.mxu0
    %v1688 = vmul.f32 %v1609, %v514
    %v1689 = vmul.f32 %v1611, %v514
    %v1690 = vmul.f32 %v1614, %v514
    %v1691 = vmul.f32 %v1616, %v514
    %v1692 = vmul.f32 %v1609, %v515
    %v1693 = vmul.f32 %v1611, %v515
    %v1694 = vmul.f32 %v1614, %v515
    %v1695 = vmul.f32 %v1616, %v515
    %v1696 = vmul.f32 %v1609, %v516
    %v1697 = vmul.f32 %v1611, %v516
    %v1698 = vmul.f32 %v1614, %v516
    %v1699 = vmul.f32 %v1616, %v516
    %v1700 = vmul.f32 %v1609, %v517
    %v1701 = vmul.f32 %v1611, %v517
    %v1702 = vmul.f32 %v1614, %v517
    %v1703 = vmul.f32 %v1616, %v517
    %v1704 = vmul.f32 %v1688, 0.35355338
    %v1705 = vmul.f32 %v1689, 0.35355338
    %v1706 = vmul.f32 %v1690, 0.35355338
    %v1707 = vmul.f32 %v1691, 0.35355338
    %v1708 = vmul.f32 %v1692, 0.35355338
    %v1709 = vmul.f32 %v1693, 0.35355338
    %v1710 = vmul.f32 %v1694, 0.35355338
    %v1711 = vmul.f32 %v1695, 0.35355338
    %v1712 = vmul.f32 %v1696, 0.35355338
    %v1713 = vmul.f32 %v1697, 0.35355338
    %v1714 = vmul.f32 %v1698, 0.35355338
    %v1715 = vmul.f32 %v1699, 0.35355338
    %v1716 = vmul.f32 %v1700, 0.35355338
    %v1717 = vmul.f32 %v1701, 0.35355338
    %v1718 = vmul.f32 %v1702, 0.35355338
    %v1719 = vmul.f32 %v1703, 0.35355338
    %v1720 = vmul.f32 %v1679, %v514
    %v1721 = vmul.f32 %v1681, %v514
    %v1722 = vmul.f32 %v1684, %v514
    %v1723 = vmul.f32 %v1686, %v514
    %v1724 = vmul.f32 %v1679, %v515
    %v1725 = vmul.f32 %v1681, %v515
    %v1726 = vmul.f32 %v1684, %v515
    %v1727 = vmul.f32 %v1686, %v515
    %v1728 = vmul.f32 %v1679, %v516
    %v1729 = vmul.f32 %v1681, %v516
    %v1730 = vmul.f32 %v1684, %v516
    %v1731 = vmul.f32 %v1686, %v516
    %v1732 = vmul.f32 %v1679, %v517
    %v1733 = vmul.f32 %v1681, %v517
    %v1734 = vmul.f32 %v1684, %v517
    %v1735 = vmul.f32 %v1686, %v517
    %v1736 = vpack.c.bf16 %v1704, %v1704
    %v1737 = vpack.c.bf16 %v1705, %v1705
    %v1738 = vpack.c.bf16 %v1706, %v1706
    %v1739 = vpack.c.bf16 %v1707, %v1707
    %v1740 = vpack.c.bf16 %v1708, %v1708
    %v1741 = vpack.c.bf16 %v1709, %v1709
    %v1742 = vpack.c.bf16 %v1710, %v1710
    %v1743 = vpack.c.bf16 %v1711, %v1711
    %v1744 = vpack.c.bf16 %v1712, %v1712
    %v1745 = vpack.c.bf16 %v1713, %v1713
    %v1746 = vpack.c.bf16 %v1714, %v1714
    %v1747 = vpack.c.bf16 %v1715, %v1715
    %v1748 = vpack.c.bf16 %v1716, %v1716
    %v1749 = vpack.c.bf16 %v1717, %v1717
    %v1750 = vpack.c.bf16 %v1718, %v1718
    %v1751 = vpack.c.bf16 %v1719, %v1719
    %v1752 = vpack.c.bf16 %v1640, %v1640
    %v1753 = vpack.c.bf16 %v1642, %v1642
    %v1754 = vpack.c.bf16 %v1645, %v1645
    %v1755 = vpack.c.bf16 %v1647, %v1647
    %v1758 = vunpack.c.l.b16 %v1736
    %v1759 = vunpack.c.l.b16 %v1737
    %v1760 = vpack.c.b16 %v1759, %v1758
    %v1763 = vunpack.c.l.b16 %v1752
    %v1764 = vunpack.c.l.b16 %v1753
    %v1765 = vpack.c.b16 %v1764, %v1763
    %v1767 = vsel %vm422, %v1760, 0
    %v1770 = vsel %vm422, %v1765, 0
    %1772 = vmatpush.bf16.xpose.msra.mxu0 0
    %1773 = vmatpush.bf16.xpose.msra.mxu0 0
    %1774 = vmatpush.bf16.xpose.msra.mxu0 0
    %1775 = vmatpush.bf16.xpose.msra.mxu0 0
    %1776 = vmatpush.bf16.xpose.msra.mxu0 0
    %1777 = vmatpush.bf16.xpose.msra.mxu0 0
    %1778 = vmatpush.bf16.xpose.msra.mxu0 0
    %1779 = vmatpush.bf16.xpose.msra.mxu0 %v1770
    %1780 = vmatmul.bf16.gmra.mxu0 %v1767
    %v1781 = vpop.f32.mrf.mxu0
    %v1782 = vadd.f32 0.0, %v1781
    %v1783 = vpop.f32.mrf.mxu0
    %v1784 = vadd.f32 0.0, %v1783
    %1785 = vdwg.mxu0
    %v1788 = vunpack.c.l.b16 %v1738
    %v1789 = vunpack.c.l.b16 %v1739
    %v1790 = vpack.c.b16 %v1789, %v1788
    %v1793 = vunpack.c.l.b16 %v1754
    %v1794 = vunpack.c.l.b16 %v1755
    %v1795 = vpack.c.b16 %v1794, %v1793
    %v1797 = vsel %vm422, %v1790, 0
    %v1800 = vsel %vm422, %v1795, 0
    %1802 = vmatpush.bf16.xpose.msra.mxu0 0
    %1803 = vmatpush.bf16.xpose.msra.mxu0 0
    %1804 = vmatpush.bf16.xpose.msra.mxu0 0
    %1805 = vmatpush.bf16.xpose.msra.mxu0 0
    %1806 = vmatpush.bf16.xpose.msra.mxu0 0
    %1807 = vmatpush.bf16.xpose.msra.mxu0 0
    %1808 = vmatpush.bf16.xpose.msra.mxu0 0
    %1809 = vmatpush.bf16.xpose.msra.mxu0 %v1800
    %1810 = vmatmul.bf16.gmra.mxu0 %v1797
    %v1811 = vpop.f32.mrf.mxu0
    %v1812 = vadd.f32 0.0, %v1811
    %v1813 = vpop.f32.mrf.mxu0
    %v1814 = vadd.f32 0.0, %v1813
    %1815 = vdwg.mxu0
    %v1818 = vunpack.c.l.b16 %v1740
    %v1819 = vunpack.c.l.b16 %v1741
    %v1820 = vpack.c.b16 %v1819, %v1818
    %v1822 = vsel %vm422, %v1820, 0
    %1824 = vmatpush.bf16.xpose.msra.mxu0 0
    %1825 = vmatpush.bf16.xpose.msra.mxu0 0
    %1826 = vmatpush.bf16.xpose.msra.mxu0 0
    %1827 = vmatpush.bf16.xpose.msra.mxu0 0
    %1828 = vmatpush.bf16.xpose.msra.mxu0 0
    %1829 = vmatpush.bf16.xpose.msra.mxu0 0
    %1830 = vmatpush.bf16.xpose.msra.mxu0 0
    %1831 = vmatpush.bf16.xpose.msra.mxu0 %v1770
    %1832 = vmatmul.bf16.gmra.mxu0 %v1822
    %v1833 = vpop.f32.mrf.mxu0
    %v1834 = vadd.f32 0.0, %v1833
    %v1835 = vpop.f32.mrf.mxu0
    %v1836 = vadd.f32 0.0, %v1835
    %1837 = vdwg.mxu0
    %v1840 = vunpack.c.l.b16 %v1742
    %v1841 = vunpack.c.l.b16 %v1743
    %v1842 = vpack.c.b16 %v1841, %v1840
    %v1844 = vsel %vm422, %v1842, 0
    %1846 = vmatpush.bf16.xpose.msra.mxu0 0
    %1847 = vmatpush.bf16.xpose.msra.mxu0 0
    %1848 = vmatpush.bf16.xpose.msra.mxu0 0
    %1849 = vmatpush.bf16.xpose.msra.mxu0 0
    %1850 = vmatpush.bf16.xpose.msra.mxu0 0
    %1851 = vmatpush.bf16.xpose.msra.mxu0 0
    %1852 = vmatpush.bf16.xpose.msra.mxu0 0
    %1853 = vmatpush.bf16.xpose.msra.mxu0 %v1800
    %1854 = vmatmul.bf16.gmra.mxu0 %v1844
    %v1855 = vpop.f32.mrf.mxu0
    %v1856 = vadd.f32 0.0, %v1855
    %v1857 = vpop.f32.mrf.mxu0
    %v1858 = vadd.f32 0.0, %v1857
    %1859 = vdwg.mxu0
    %v1862 = vunpack.c.l.b16 %v1744
    %v1863 = vunpack.c.l.b16 %v1745
    %v1864 = vpack.c.b16 %v1863, %v1862
    %v1866 = vsel %vm422, %v1864, 0
    %1868 = vmatpush.bf16.xpose.msra.mxu0 0
    %1869 = vmatpush.bf16.xpose.msra.mxu0 0
    %1870 = vmatpush.bf16.xpose.msra.mxu0 0
    %1871 = vmatpush.bf16.xpose.msra.mxu0 0
    %1872 = vmatpush.bf16.xpose.msra.mxu0 0
    %1873 = vmatpush.bf16.xpose.msra.mxu0 0
    %1874 = vmatpush.bf16.xpose.msra.mxu0 0
    %1875 = vmatpush.bf16.xpose.msra.mxu0 %v1770
    %1876 = vmatmul.bf16.gmra.mxu0 %v1866
    %v1877 = vpop.f32.mrf.mxu0
    %v1878 = vadd.f32 0.0, %v1877
    %v1879 = vpop.f32.mrf.mxu0
    %v1880 = vadd.f32 0.0, %v1879
    %1881 = vdwg.mxu0
    %v1884 = vunpack.c.l.b16 %v1746
    %v1885 = vunpack.c.l.b16 %v1747
    %v1886 = vpack.c.b16 %v1885, %v1884
    %v1888 = vsel %vm422, %v1886, 0
    %1890 = vmatpush.bf16.xpose.msra.mxu0 0
    %1891 = vmatpush.bf16.xpose.msra.mxu0 0
    %1892 = vmatpush.bf16.xpose.msra.mxu0 0
    %1893 = vmatpush.bf16.xpose.msra.mxu0 0
    %1894 = vmatpush.bf16.xpose.msra.mxu0 0
    %1895 = vmatpush.bf16.xpose.msra.mxu0 0
    %1896 = vmatpush.bf16.xpose.msra.mxu0 0
    %1897 = vmatpush.bf16.xpose.msra.mxu0 %v1800
    %1898 = vmatmul.bf16.gmra.mxu0 %v1888
    %v1899 = vpop.f32.mrf.mxu0
    %v1900 = vadd.f32 0.0, %v1899
    %v1901 = vpop.f32.mrf.mxu0
    %v1902 = vadd.f32 0.0, %v1901
    %1903 = vdwg.mxu0
    %v1906 = vunpack.c.l.b16 %v1748
    %v1907 = vunpack.c.l.b16 %v1749
    %v1908 = vpack.c.b16 %v1907, %v1906
    %v1910 = vsel %vm422, %v1908, 0
    %1912 = vmatpush.bf16.xpose.msra.mxu0 0
    %1913 = vmatpush.bf16.xpose.msra.mxu0 0
    %1914 = vmatpush.bf16.xpose.msra.mxu0 0
    %1915 = vmatpush.bf16.xpose.msra.mxu0 0
    %1916 = vmatpush.bf16.xpose.msra.mxu0 0
    %1917 = vmatpush.bf16.xpose.msra.mxu0 0
    %1918 = vmatpush.bf16.xpose.msra.mxu0 0
    %1919 = vmatpush.bf16.xpose.msra.mxu0 %v1770
    %1920 = vmatmul.bf16.gmra.mxu0 %v1910
    %v1921 = vpop.f32.mrf.mxu0
    %v1922 = vadd.f32 0.0, %v1921
    %v1923 = vpop.f32.mrf.mxu0
    %v1924 = vadd.f32 0.0, %v1923
    %1925 = vdwg.mxu0
    %v1928 = vunpack.c.l.b16 %v1750
    %v1929 = vunpack.c.l.b16 %v1751
    %v1930 = vpack.c.b16 %v1929, %v1928
    %v1932 = vsel %vm422, %v1930, 0
    %1934 = vmatpush.bf16.xpose.msra.mxu0 0
    %1935 = vmatpush.bf16.xpose.msra.mxu0 0
    %1936 = vmatpush.bf16.xpose.msra.mxu0 0
    %1937 = vmatpush.bf16.xpose.msra.mxu0 0
    %1938 = vmatpush.bf16.xpose.msra.mxu0 0
    %1939 = vmatpush.bf16.xpose.msra.mxu0 0
    %1940 = vmatpush.bf16.xpose.msra.mxu0 0
    %1941 = vmatpush.bf16.xpose.msra.mxu0 %v1800
    %1942 = vmatmul.bf16.gmra.mxu0 %v1932
    %v1943 = vpop.f32.mrf.mxu0
    %v1944 = vadd.f32 0.0, %v1943
    %v1945 = vpop.f32.mrf.mxu0
    %v1946 = vadd.f32 0.0, %v1945
    %1947 = vdwg.mxu0
    %v1948 = vsel %vm371, %v1782, -inf
    %1949 = vmax.xlane.f32.xlu0 %v1948
    %v1950 = vpop.xlane.xlu0 %1949
    %v1951 = vsel %vm371, %v1784, -inf
    %1952 = vmax.xlane.f32.xlu0 %v1951
    %v1953 = vpop.xlane.xlu0 %1952
    %v1954 = vsel %vm371, %v1812, -inf
    %1955 = vmax.xlane.f32.xlu0 %v1954
    %v1956 = vpop.xlane.xlu0 %1955
    %v1957 = vsel %vm371, %v1814, -inf
    %1958 = vmax.xlane.f32.xlu0 %v1957
    %v1959 = vpop.xlane.xlu0 %1958
    %v1960 = vsel %vm371, %v1834, -inf
    %1961 = vmax.xlane.f32.xlu0 %v1960
    %v1962 = vpop.xlane.xlu0 %1961
    %v1963 = vsel %vm371, %v1836, -inf
    %1964 = vmax.xlane.f32.xlu0 %v1963
    %v1965 = vpop.xlane.xlu0 %1964
    %v1966 = vsel %vm371, %v1856, -inf
    %1967 = vmax.xlane.f32.xlu0 %v1966
    %v1968 = vpop.xlane.xlu0 %1967
    %v1969 = vsel %vm371, %v1858, -inf
    %1970 = vmax.xlane.f32.xlu0 %v1969
    %v1971 = vpop.xlane.xlu0 %1970
    %v1972 = vsel %vm371, %v1878, -inf
    %1973 = vmax.xlane.f32.xlu0 %v1972
    %v1974 = vpop.xlane.xlu0 %1973
    %v1975 = vsel %vm371, %v1880, -inf
    %1976 = vmax.xlane.f32.xlu0 %v1975
    %v1977 = vpop.xlane.xlu0 %1976
    %v1978 = vsel %vm371, %v1900, -inf
    %1979 = vmax.xlane.f32.xlu0 %v1978
    %v1980 = vpop.xlane.xlu0 %1979
    %v1981 = vsel %vm371, %v1902, -inf
    %1982 = vmax.xlane.f32.xlu0 %v1981
    %v1983 = vpop.xlane.xlu0 %1982
    %v1984 = vsel %vm371, %v1922, -inf
    %1985 = vmax.xlane.f32.xlu0 %v1984
    %v1986 = vpop.xlane.xlu0 %1985
    %v1987 = vsel %vm371, %v1924, -inf
    %1988 = vmax.xlane.f32.xlu0 %v1987
    %v1989 = vpop.xlane.xlu0 %1988
    %v1990 = vsel %vm371, %v1944, -inf
    %1991 = vmax.xlane.f32.xlu0 %v1990
    %v1992 = vpop.xlane.xlu0 %1991
    %v1993 = vsel %vm371, %v1946, -inf
    %1994 = vmax.xlane.f32.xlu0 %v1993
    %v1995 = vpop.xlane.xlu0 %1994
    %v1996 = vsub.f32 %v1782, %v1950
    %v1997 = vsub.f32 %v1784, %v1953
    %v1998 = vsub.f32 %v1812, %v1956
    %v1999 = vsub.f32 %v1814, %v1959
    %v2000 = vsub.f32 %v1834, %v1962
    %v2001 = vsub.f32 %v1836, %v1965
    %v2002 = vsub.f32 %v1856, %v1968
    %v2003 = vsub.f32 %v1858, %v1971
    %v2004 = vsub.f32 %v1878, %v1974
    %v2005 = vsub.f32 %v1880, %v1977
    %v2006 = vsub.f32 %v1900, %v1980
    %v2007 = vsub.f32 %v1902, %v1983
    %v2008 = vsub.f32 %v1922, %v1986
    %v2009 = vsub.f32 %v1924, %v1989
    %v2010 = vsub.f32 %v1944, %v1992
    %v2011 = vsub.f32 %v1946, %v1995
    %v2012 = vmul.f32 %v1996, 1.442695
    %v2013 = vpow.pop %v2012
    %v2014 = vmul.f32 %v1997, 1.442695
    %v2015 = vpow.pop %v2014
    %v2016 = vmul.f32 %v1998, 1.442695
    %v2017 = vpow.pop %v2016
    %v2018 = vmul.f32 %v1999, 1.442695
    %v2019 = vpow.pop %v2018
    %v2020 = vmul.f32 %v2000, 1.442695
    %v2021 = vpow.pop %v2020
    %v2022 = vmul.f32 %v2001, 1.442695
    %v2023 = vpow.pop %v2022
    %v2024 = vmul.f32 %v2002, 1.442695
    %v2025 = vpow.pop %v2024
    %v2026 = vmul.f32 %v2003, 1.442695
    %v2027 = vpow.pop %v2026
    %v2028 = vmul.f32 %v2004, 1.442695
    %v2029 = vpow.pop %v2028
    %v2030 = vmul.f32 %v2005, 1.442695
    %v2031 = vpow.pop %v2030
    %v2032 = vmul.f32 %v2006, 1.442695
    %v2033 = vpow.pop %v2032
    %v2034 = vmul.f32 %v2007, 1.442695
    %v2035 = vpow.pop %v2034
    %v2036 = vmul.f32 %v2008, 1.442695
    %v2037 = vpow.pop %v2036
    %v2038 = vmul.f32 %v2009, 1.442695
    %v2039 = vpow.pop %v2038
    %v2040 = vmul.f32 %v2010, 1.442695
    %v2041 = vpow.pop %v2040
    %v2042 = vmul.f32 %v2011, 1.442695
    %v2043 = vpow.pop %v2042
    %v2044 = vsel %vm371, %v2013, 0.0
    %2045 = vadd.xlane.f32.xlu0 %v2044
    %v2046 = vpop.xlane.xlu0 %2045
    %v2047 = vsel %vm371, %v2015, 0.0
    %2048 = vadd.xlane.f32.xlu0 %v2047
    %v2049 = vpop.xlane.xlu0 %2048
    %v2050 = vsel %vm371, %v2017, 0.0
    %2051 = vadd.xlane.f32.xlu0 %v2050
    %v2052 = vpop.xlane.xlu0 %2051
    %v2053 = vsel %vm371, %v2019, 0.0
    %2054 = vadd.xlane.f32.xlu0 %v2053
    %v2055 = vpop.xlane.xlu0 %2054
    %v2056 = vsel %vm371, %v2021, 0.0
    %2057 = vadd.xlane.f32.xlu0 %v2056
    %v2058 = vpop.xlane.xlu0 %2057
    %v2059 = vsel %vm371, %v2023, 0.0
    %2060 = vadd.xlane.f32.xlu0 %v2059
    %v2061 = vpop.xlane.xlu0 %2060
    %v2062 = vsel %vm371, %v2025, 0.0
    %2063 = vadd.xlane.f32.xlu0 %v2062
    %v2064 = vpop.xlane.xlu0 %2063
    %v2065 = vsel %vm371, %v2027, 0.0
    %2066 = vadd.xlane.f32.xlu0 %v2065
    %v2067 = vpop.xlane.xlu0 %2066
    %v2068 = vsel %vm371, %v2029, 0.0
    %2069 = vadd.xlane.f32.xlu0 %v2068
    %v2070 = vpop.xlane.xlu0 %2069
    %v2071 = vsel %vm371, %v2031, 0.0
    %2072 = vadd.xlane.f32.xlu0 %v2071
    %v2073 = vpop.xlane.xlu0 %2072
    %v2074 = vsel %vm371, %v2033, 0.0
    %2075 = vadd.xlane.f32.xlu0 %v2074
    %v2076 = vpop.xlane.xlu0 %2075
    %v2077 = vsel %vm371, %v2035, 0.0
    %2078 = vadd.xlane.f32.xlu0 %v2077
    %v2079 = vpop.xlane.xlu0 %2078
    %v2080 = vsel %vm371, %v2037, 0.0
    %2081 = vadd.xlane.f32.xlu0 %v2080
    %v2082 = vpop.xlane.xlu0 %2081
    %v2083 = vsel %vm371, %v2039, 0.0
    %2084 = vadd.xlane.f32.xlu0 %v2083
    %v2085 = vpop.xlane.xlu0 %2084
    %v2086 = vsel %vm371, %v2041, 0.0
    %2087 = vadd.xlane.f32.xlu0 %v2086
    %v2088 = vpop.xlane.xlu0 %2087
    %v2089 = vsel %vm371, %v2043, 0.0
    %2090 = vadd.xlane.f32.xlu0 %v2089
    %v2091 = vpop.xlane.xlu0 %2090
    %v2092 = vrcp.pop %v2046
    %v2093 = vrcp.pop %v2049
    %v2094 = vrcp.pop %v2052
    %v2095 = vrcp.pop %v2055
    %v2096 = vrcp.pop %v2058
    %v2097 = vrcp.pop %v2061
    %v2098 = vrcp.pop %v2064
    %v2099 = vrcp.pop %v2067
    %v2100 = vrcp.pop %v2070
    %v2101 = vrcp.pop %v2073
    %v2102 = vrcp.pop %v2076
    %v2103 = vrcp.pop %v2079
    %v2104 = vrcp.pop %v2082
    %v2105 = vrcp.pop %v2085
    %v2106 = vrcp.pop %v2088
    %v2107 = vrcp.pop %v2091
    %v2108 = vmul.f32 %v2013, %v2092
    %v2109 = vmul.f32 %v2015, %v2093
    %v2110 = vmul.f32 %v2017, %v2094
    %v2111 = vmul.f32 %v2019, %v2095
    %v2112 = vmul.f32 %v2021, %v2096
    %v2113 = vmul.f32 %v2023, %v2097
    %v2114 = vmul.f32 %v2025, %v2098
    %v2115 = vmul.f32 %v2027, %v2099
    %v2116 = vmul.f32 %v2029, %v2100
    %v2117 = vmul.f32 %v2031, %v2101
    %v2118 = vmul.f32 %v2033, %v2102
    %v2119 = vmul.f32 %v2035, %v2103
    %v2120 = vmul.f32 %v2037, %v2104
    %v2121 = vmul.f32 %v2039, %v2105
    %v2122 = vmul.f32 %v2041, %v2106
    %v2123 = vmul.f32 %v2043, %v2107
    %v2124 = vpack.c.bf16 %v2108, %v2108
    %v2125 = vpack.c.bf16 %v2109, %v2109
    %v2126 = vpack.c.bf16 %v2110, %v2110
    %v2127 = vpack.c.bf16 %v2111, %v2111
    %v2128 = vpack.c.bf16 %v2112, %v2112
    %v2129 = vpack.c.bf16 %v2113, %v2113
    %v2130 = vpack.c.bf16 %v2114, %v2114
    %v2131 = vpack.c.bf16 %v2115, %v2115
    %v2132 = vpack.c.bf16 %v2116, %v2116
    %v2133 = vpack.c.bf16 %v2117, %v2117
    %v2134 = vpack.c.bf16 %v2118, %v2118
    %v2135 = vpack.c.bf16 %v2119, %v2119
    %v2136 = vpack.c.bf16 %v2120, %v2120
    %v2137 = vpack.c.bf16 %v2121, %v2121
    %v2138 = vpack.c.bf16 %v2122, %v2122
    %v2139 = vpack.c.bf16 %v2123, %v2123
    %v2140 = vpack.c.bf16 %v1720, %v1720
    %v2141 = vpack.c.bf16 %v1721, %v1721
    %v2142 = vpack.c.bf16 %v1722, %v1722
    %v2143 = vpack.c.bf16 %v1723, %v1723
    %v2144 = vpack.c.bf16 %v1724, %v1724
    %v2145 = vpack.c.bf16 %v1725, %v1725
    %v2146 = vpack.c.bf16 %v1726, %v1726
    %v2147 = vpack.c.bf16 %v1727, %v1727
    %v2148 = vpack.c.bf16 %v1728, %v1728
    %v2149 = vpack.c.bf16 %v1729, %v1729
    %v2150 = vpack.c.bf16 %v1730, %v1730
    %v2151 = vpack.c.bf16 %v1731, %v1731
    %v2152 = vpack.c.bf16 %v1732, %v1732
    %v2153 = vpack.c.bf16 %v1733, %v1733
    %v2154 = vpack.c.bf16 %v1734, %v1734
    %v2155 = vpack.c.bf16 %v1735, %v1735
    %v2158 = vunpack.c.l.b16 %v2124
    %v2159 = vunpack.c.l.b16 %v2125
    %v2160 = vpack.c.b16 %v2159, %v2158
    %v2163 = vunpack.c.l.b16 %v2140
    %v2164 = vunpack.c.l.b16 %v2141
    %v2165 = vpack.c.b16 %v2164, %v2163
    %v2168 = vsel %vm371, %v2160, 0
    %2170 = vmatpush.bf16.msra.mxu0 0
    %2171 = vmatpush.bf16.msra.mxu0 0
    %2172 = vmatpush.bf16.msra.mxu0 0
    %2173 = vmatpush.bf16.msra.mxu0 0
    %2174 = vmatpush.bf16.msra.mxu0 0
    %2175 = vmatpush.bf16.msra.mxu0 0
    %2176 = vmatpush.bf16.msra.mxu0 0
    %2177 = vmatpush.bf16.msra.mxu0 %v2165
    %2178 = vmatmul.bf16.gmra.mxu0 %v2168
    %v2179 = vpop.f32.mrf.mxu0
    %v2180 = vadd.f32 0.0, %v2179
    %v2181 = vpop.f32.mrf.mxu0
    %v2182 = vadd.f32 0.0, %v2181
    %2183 = vdwg.mxu0
    %v2186 = vunpack.c.l.b16 %v2126
    %v2187 = vunpack.c.l.b16 %v2127
    %v2188 = vpack.c.b16 %v2187, %v2186
    %v2191 = vunpack.c.l.b16 %v2142
    %v2192 = vunpack.c.l.b16 %v2143
    %v2193 = vpack.c.b16 %v2192, %v2191
    %v2196 = vsel %vm371, %v2188, 0
    %2198 = vmatpush.bf16.msra.mxu0 0
    %2199 = vmatpush.bf16.msra.mxu0 0
    %2200 = vmatpush.bf16.msra.mxu0 0
    %2201 = vmatpush.bf16.msra.mxu0 0
    %2202 = vmatpush.bf16.msra.mxu0 0
    %2203 = vmatpush.bf16.msra.mxu0 0
    %2204 = vmatpush.bf16.msra.mxu0 0
    %2205 = vmatpush.bf16.msra.mxu0 %v2193
    %2206 = vmatmul.bf16.gmra.mxu0 %v2196
    %v2207 = vpop.f32.mrf.mxu0
    %v2208 = vadd.f32 0.0, %v2207
    %v2209 = vpop.f32.mrf.mxu0
    %v2210 = vadd.f32 0.0, %v2209
    %2211 = vdwg.mxu0
    %v2214 = vunpack.c.l.b16 %v2128
    %v2215 = vunpack.c.l.b16 %v2129
    %v2216 = vpack.c.b16 %v2215, %v2214
    %v2219 = vunpack.c.l.b16 %v2144
    %v2220 = vunpack.c.l.b16 %v2145
    %v2221 = vpack.c.b16 %v2220, %v2219
    %v2224 = vsel %vm371, %v2216, 0
    %2226 = vmatpush.bf16.msra.mxu0 0
    %2227 = vmatpush.bf16.msra.mxu0 0
    %2228 = vmatpush.bf16.msra.mxu0 0
    %2229 = vmatpush.bf16.msra.mxu0 0
    %2230 = vmatpush.bf16.msra.mxu0 0
    %2231 = vmatpush.bf16.msra.mxu0 0
    %2232 = vmatpush.bf16.msra.mxu0 0
    %2233 = vmatpush.bf16.msra.mxu0 %v2221
    %2234 = vmatmul.bf16.gmra.mxu0 %v2224
    %v2235 = vpop.f32.mrf.mxu0
    %v2236 = vadd.f32 0.0, %v2235
    %v2237 = vpop.f32.mrf.mxu0
    %v2238 = vadd.f32 0.0, %v2237
    %2239 = vdwg.mxu0
    %v2242 = vunpack.c.l.b16 %v2130
    %v2243 = vunpack.c.l.b16 %v2131
    %v2244 = vpack.c.b16 %v2243, %v2242
    %v2247 = vunpack.c.l.b16 %v2146
    %v2248 = vunpack.c.l.b16 %v2147
    %v2249 = vpack.c.b16 %v2248, %v2247
    %v2252 = vsel %vm371, %v2244, 0
    %2254 = vmatpush.bf16.msra.mxu0 0
    %2255 = vmatpush.bf16.msra.mxu0 0
    %2256 = vmatpush.bf16.msra.mxu0 0
    %2257 = vmatpush.bf16.msra.mxu0 0
    %2258 = vmatpush.bf16.msra.mxu0 0
    %2259 = vmatpush.bf16.msra.mxu0 0
    %2260 = vmatpush.bf16.msra.mxu0 0
    %2261 = vmatpush.bf16.msra.mxu0 %v2249
    %2262 = vmatmul.bf16.gmra.mxu0 %v2252
    %v2263 = vpop.f32.mrf.mxu0
    %v2264 = vadd.f32 0.0, %v2263
    %v2265 = vpop.f32.mrf.mxu0
    %v2266 = vadd.f32 0.0, %v2265
    %2267 = vdwg.mxu0
    %v2270 = vunpack.c.l.b16 %v2132
    %v2271 = vunpack.c.l.b16 %v2133
    %v2272 = vpack.c.b16 %v2271, %v2270
    %v2275 = vunpack.c.l.b16 %v2148
    %v2276 = vunpack.c.l.b16 %v2149
    %v2277 = vpack.c.b16 %v2276, %v2275
    %v2280 = vsel %vm371, %v2272, 0
    %2282 = vmatpush.bf16.msra.mxu0 0
    %2283 = vmatpush.bf16.msra.mxu0 0
    %2284 = vmatpush.bf16.msra.mxu0 0
    %2285 = vmatpush.bf16.msra.mxu0 0
    %2286 = vmatpush.bf16.msra.mxu0 0
    %2287 = vmatpush.bf16.msra.mxu0 0
    %2288 = vmatpush.bf16.msra.mxu0 0
    %2289 = vmatpush.bf16.msra.mxu0 %v2277
    %2290 = vmatmul.bf16.gmra.mxu0 %v2280
    %v2291 = vpop.f32.mrf.mxu0
    %v2292 = vadd.f32 0.0, %v2291
    %v2293 = vpop.f32.mrf.mxu0
    %v2294 = vadd.f32 0.0, %v2293
    %2295 = vdwg.mxu0
    %v2298 = vunpack.c.l.b16 %v2134
    %v2299 = vunpack.c.l.b16 %v2135
    %v2300 = vpack.c.b16 %v2299, %v2298
    %v2303 = vunpack.c.l.b16 %v2150
    %v2304 = vunpack.c.l.b16 %v2151
    %v2305 = vpack.c.b16 %v2304, %v2303
    %v2308 = vsel %vm371, %v2300, 0
    %2310 = vmatpush.bf16.msra.mxu0 0
    %2311 = vmatpush.bf16.msra.mxu0 0
    %2312 = vmatpush.bf16.msra.mxu0 0
    %2313 = vmatpush.bf16.msra.mxu0 0
    %2314 = vmatpush.bf16.msra.mxu0 0
    %2315 = vmatpush.bf16.msra.mxu0 0
    %2316 = vmatpush.bf16.msra.mxu0 0
    %2317 = vmatpush.bf16.msra.mxu0 %v2305
    %2318 = vmatmul.bf16.gmra.mxu0 %v2308
    %v2319 = vpop.f32.mrf.mxu0
    %v2320 = vadd.f32 0.0, %v2319
    %v2321 = vpop.f32.mrf.mxu0
    %v2322 = vadd.f32 0.0, %v2321
    %2323 = vdwg.mxu0
    %v2326 = vunpack.c.l.b16 %v2136
    %v2327 = vunpack.c.l.b16 %v2137
    %v2328 = vpack.c.b16 %v2327, %v2326
    %v2331 = vunpack.c.l.b16 %v2152
    %v2332 = vunpack.c.l.b16 %v2153
    %v2333 = vpack.c.b16 %v2332, %v2331
    %v2336 = vsel %vm371, %v2328, 0
    %2338 = vmatpush.bf16.msra.mxu0 0
    %2339 = vmatpush.bf16.msra.mxu0 0
    %2340 = vmatpush.bf16.msra.mxu0 0
    %2341 = vmatpush.bf16.msra.mxu0 0
    %2342 = vmatpush.bf16.msra.mxu0 0
    %2343 = vmatpush.bf16.msra.mxu0 0
    %2344 = vmatpush.bf16.msra.mxu0 0
    %2345 = vmatpush.bf16.msra.mxu0 %v2333
    %2346 = vmatmul.bf16.gmra.mxu0 %v2336
    %v2347 = vpop.f32.mrf.mxu0
    %v2348 = vadd.f32 0.0, %v2347
    %v2349 = vpop.f32.mrf.mxu0
    %v2350 = vadd.f32 0.0, %v2349
    %2351 = vdwg.mxu0
    %v2354 = vunpack.c.l.b16 %v2138
    %v2355 = vunpack.c.l.b16 %v2139
    %v2356 = vpack.c.b16 %v2355, %v2354
    %v2359 = vunpack.c.l.b16 %v2154
    %v2360 = vunpack.c.l.b16 %v2155
    %v2361 = vpack.c.b16 %v2360, %v2359
    %v2364 = vsel %vm371, %v2356, 0
    %2366 = vmatpush.bf16.msra.mxu0 0
    %2367 = vmatpush.bf16.msra.mxu0 0
    %2368 = vmatpush.bf16.msra.mxu0 0
    %2369 = vmatpush.bf16.msra.mxu0 0
    %2370 = vmatpush.bf16.msra.mxu0 0
    %2371 = vmatpush.bf16.msra.mxu0 0
    %2372 = vmatpush.bf16.msra.mxu0 0
    %2373 = vmatpush.bf16.msra.mxu0 %v2361
    %2374 = vmatmul.bf16.gmra.mxu0 %v2364
    %v2375 = vpop.f32.mrf.mxu0
    %v2376 = vadd.f32 0.0, %v2375
    %v2377 = vpop.f32.mrf.mxu0
    %v2378 = vadd.f32 0.0, %v2377
    %2379 = vdwg.mxu0
    %v2380 = vadd.f32 %v2180, %v2236
    %v2381 = vadd.f32 %v2182, %v2238
    %v2382 = vadd.f32 %v2208, %v2264
    %v2383 = vadd.f32 %v2210, %v2266
    %v2384 = vadd.f32 %v2380, %v2292
    %v2385 = vadd.f32 %v2381, %v2294
    %v2386 = vadd.f32 %v2382, %v2320
    %v2387 = vadd.f32 %v2383, %v2322
    %v2388 = vadd.f32 %v2384, %v2348
    %v2389 = vadd.f32 %v2385, %v2350
    %v2390 = vadd.f32 %v2386, %v2376
    %v2391 = vadd.f32 %v2387, %v2378
    %s2392 = scalar_lea.vmem [#allocation16], 32
    %v2393 = vld [vmem:[%s2392] sm:$0xff]
    %v2394 = vld [vmem:[%s2392 + $0x8] sm:$0xff]
    %v2395 = vld [vmem:[%s2392 + $0x10] sm:$0xff]
    %v2396 = vld [vmem:[%s2392 + $0x18] sm:$0xff]
    %v2397 = vpack.c.bf16 %v2389, %v2388
    %v2398 = vpack.c.bf16 %v2391, %v2390
    %v2399 = vpack.c.bf16 %v2394, %v2393
    %v2400 = vpack.c.bf16 %v2396, %v2395
    %s2401 = scalar_lea.vmem [#allocation17], 1
    %v2402 = vld [vmem:[%s2401] sm:$0x1]
    %v2404 = vperm.slane %v2402, 0
    %v2407 = vsel %vm422, %v2397, 0
    %v2410 = vsel %vm422, %v2398, 0
    %2412 = vmatpush.bf16.msra.mxu0 0
    %2413 = vmatpush.bf16.msra.mxu0 0
    %2414 = vmatpush.bf16.msra.mxu0 0
    %2415 = vmatpush.bf16.msra.mxu0 0
    %2416 = vmatpush.bf16.msra.mxu0 0
    %2417 = vmatpush.bf16.msra.mxu0 0
    %2418 = vmatpush.bf16.msra.mxu0 %v2400
    %2419 = vmatpush.bf16.msra.mxu0 %v2399
    %2420 = vmatmul.bf16.gmra.mxu0 %v2407
    %v2421 = vpop.f32.mrf.mxu0
    %v2422 = vadd.f32 %v2404, %v2421
    %v2423 = vpop.f32.mrf.mxu0
    %v2424 = vadd.f32 %v2404, %v2423
    %2425 = vmatmul.bf16.gmra.mxu0 %v2410
    %v2426 = vpop.f32.mrf.mxu0
    %v2427 = vadd.f32 %v2404, %v2426
    %v2428 = vpop.f32.mrf.mxu0
    %v2429 = vadd.f32 %v2404, %v2428
    %2430 = vdwg.mxu0
    %v2431 = vadd.f32 %v1571, %v2422
    %v2432 = vadd.f32 %v1572, %v2424
    %v2433 = vadd.f32 %v1573, %v2427
    %v2434 = vadd.f32 %v1574, %v2429
    %s2435 = scalar_lea.vmem [#allocation19], 1
    %v2436 = vld [vmem:[%s2435] sm:$0x1]
    %s2437 = scalar_lea.vmem [#allocation20], 1
    %v2438 = vld [vmem:[%s2437] sm:$0x1]
    %v2439 = vsel %vm422, %v2431, 0.0
    %2440 = vadd.xlane.f32.xlu0 %v2439
    %v2441 = vpop.xlane.xlu0 %2440
    %v2442 = vsel %vm422, %v2432, 0.0
    %2443 = vadd.xlane.f32.xlu0 %v2442
    %v2444 = vpop.xlane.xlu0 %2443
    %v2445 = vsel %vm422, %v2433, 0.0
    %2446 = vadd.xlane.f32.xlu0 %v2445
    %v2447 = vpop.xlane.xlu0 %2446
    %v2448 = vsel %vm422, %v2434, 0.0
    %2449 = vadd.xlane.f32.xlu0 %v2448
    %v2450 = vpop.xlane.xlu0 %2449
    %v2451 = vmul.f32 %v2441, %v1287
    %v2452 = vmul.f32 %v2444, %v1287
    %v2453 = vmul.f32 %v2447, %v1287
    %v2454 = vmul.f32 %v2450, %v1287
    %v2455 = vsub.f32 %v2431, %v2451
    %v2456 = vsub.f32 %v2432, %v2452
    %v2457 = vsub.f32 %v2433, %v2453
    %v2458 = vsub.f32 %v2434, %v2454
    %v2459 = vmul.f32 %v2455, %v2455
    %v2460 = vmul.f32 %v2456, %v2456
    %v2461 = vmul.f32 %v2457, %v2457
    %v2462 = vmul.f32 %v2458, %v2458
    %v2463 = vsel %vm422, %v2459, 0.0
    %2464 = vadd.xlane.f32.xlu0 %v2463
    %v2465 = vpop.xlane.xlu0 %2464
    %v2466 = vsel %vm422, %v2460, 0.0
    %2467 = vadd.xlane.f32.xlu0 %v2466
    %v2468 = vpop.xlane.xlu0 %2467
    %v2469 = vsel %vm422, %v2461, 0.0
    %2470 = vadd.xlane.f32.xlu0 %v2469
    %v2471 = vpop.xlane.xlu0 %2470
    %v2472 = vsel %vm422, %v2462, 0.0
    %2473 = vadd.xlane.f32.xlu0 %v2472
    %v2474 = vpop.xlane.xlu0 %2473
    %v2475 = vmul.f32 %v2465, %v1287
    %v2476 = vmul.f32 %v2468, %v1287
    %v2477 = vmul.f32 %v2471, %v1287
    %v2478 = vmul.f32 %v2474, %v1287
    %v2479 = vadd.f32 %v2475, 1e-05
    %v2480 = vadd.f32 %v2476, 1e-05
    %v2481 = vadd.f32 %v2477, 1e-05
    %v2482 = vadd.f32 %v2478, 1e-05
    %v2483 = vrsqrt.pop %v2479
    %v2484 = vmul.f32 %v2483, %v2479
    %v2485 = vmul.f32 %v2484, %v2483
    %v2486 = vmul.f32 0.5, %v2485
    %v2487 = vsub.f32 1.5, %v2486
    %v2488 = vmul.f32 %v2483, %v2487
    %vm2489 = vweird.f32 %v2479
    %vm2490 = vweird.f32 %v2483
    %vm2491 = vmor %vm2489, %vm2490
    %v2492 = vsel %vm2491, %v2483, %v2488
    %v2493 = vrsqrt.pop %v2480
    %v2494 = vmul.f32 %v2493, %v2480
    %v2495 = vmul.f32 %v2494, %v2493
    %v2496 = vmul.f32 0.5, %v2495
    %v2497 = vsub.f32 1.5, %v2496
    %v2498 = vmul.f32 %v2493, %v2497
    %vm2499 = vweird.f32 %v2480
    %vm2500 = vweird.f32 %v2493
    %vm2501 = vmor %vm2499, %vm2500
    %v2502 = vsel %vm2501, %v2493, %v2498
    %v2503 = vrsqrt.pop %v2481
    %v2504 = vmul.f32 %v2503, %v2481
    %v2505 = vmul.f32 %v2504, %v2503
    %v2506 = vmul.f32 0.5, %v2505
    %v2507 = vsub.f32 1.5, %v2506
    %v2508 = vmul.f32 %v2503, %v2507
    %vm2509 = vweird.f32 %v2481
    %vm2510 = vweird.f32 %v2503
    %vm2511 = vmor %vm2509, %vm2510
    %v2512 = vsel %vm2511, %v2503, %v2508
    %v2513 = vrsqrt.pop %v2482
    %v2514 = vmul.f32 %v2513, %v2482
    %v2515 = vmul.f32 %v2514, %v2513
    %v2516 = vmul.f32 0.5, %v2515
    %v2517 = vsub.f32 1.5, %v2516
    %v2518 = vmul.f32 %v2513, %v2517
    %vm2519 = vweird.f32 %v2482
    %vm2520 = vweird.f32 %v2513
    %vm2521 = vmor %vm2519, %vm2520
    %v2522 = vsel %vm2521, %v2513, %v2518
    %v2523 = vmul.f32 %v2455, %v2492
    %v2524 = vmul.f32 %v2456, %v2502
    %v2525 = vmul.f32 %v2457, %v2512
    %v2526 = vmul.f32 %v2458, %v2522
    %v2528 = vperm.slane %v2436, 0
    %v2530 = vmul.f32 %v2523, %v2528
    %v2531 = vmul.f32 %v2524, %v2528
    %v2532 = vmul.f32 %v2525, %v2528
    %v2533 = vmul.f32 %v2526, %v2528
    %v2535 = vperm.slane %v2438, 0
    %v2537 = vadd.f32 %v2530, %v2535
    %v2538 = vadd.f32 %v2531, %v2535
    %v2539 = vadd.f32 %v2532, %v2535
    %v2540 = vadd.f32 %v2533, %v2535
    %s2541 = scalar_lea.vmem [#allocation22], 32
    %v2542 = vld [vmem:[%s2541] sm:$0xff]
    %v2543 = vld [vmem:[%s2541 + $0x8] sm:$0xff]
    %v2544 = vld [vmem:[%s2541 + $0x10] sm:$0xff]
    %v2545 = vld [vmem:[%s2541 + $0x18] sm:$0xff]
    %v2546 = vpack.c.bf16 %v2538, %v2537
    %v2547 = vpack.c.bf16 %v2540, %v2539
    %v2548 = vpack.c.bf16 %v2543, %v2542
    %v2549 = vpack.c.bf16 %v2545, %v2544
    %s2550 = scalar_lea.vmem [#allocation23], 1
    %v2551 = vld [vmem:[%s2550] sm:$0x1]
    %v2553 = vperm.slane %v2551, 0
    %v2556 = vsel %vm422, %v2546, 0
    %v2559 = vsel %vm422, %v2547, 0
    %2561 = vmatpush.bf16.msra.mxu0 0
    %2562 = vmatpush.bf16.msra.mxu0 0
    %2563 = vmatpush.bf16.msra.mxu0 0
    %2564 = vmatpush.bf16.msra.mxu0 0
    %2565 = vmatpush.bf16.msra.mxu0 0
    %2566 = vmatpush.bf16.msra.mxu0 0
    %2567 = vmatpush.bf16.msra.mxu0 %v2549
    %2568 = vmatpush.bf16.msra.mxu0 %v2548
    %2569 = vmatmul.bf16.gmra.mxu0 %v2556
    %v2570 = vpop.f32.mrf.mxu0
    %v2571 = vadd.f32 %v2553, %v2570
    %v2572 = vpop.f32.mrf.mxu0
    %v2573 = vadd.f32 %v2553, %v2572
    %2574 = vmatmul.bf16.gmra.mxu0 %v2559
    %v2575 = vpop.f32.mrf.mxu0
    %v2576 = vadd.f32 %v2553, %v2575
    %v2577 = vpop.f32.mrf.mxu0
    %v2578 = vadd.f32 %v2553, %v2577
    %2579 = vdwg.mxu0
    %v2580 = vmax.f32 %v2571, 0.0
    %v2581 = vmax.f32 %v2573, 0.0
    %v2582 = vmax.f32 %v2576, 0.0
    %v2583 = vmax.f32 %v2578, 0.0
    %s2584 = scalar_lea.vmem %s17, 64
    %v2585 = vld [vmem:[%s2584] sm:$0xff]
    %v2586 = vld [vmem:[%s2584 + $0x8] sm:$0xff]
    %v2587 = vld [vmem:[%s2584 + $0x10] sm:$0xff]
    %v2588 = vld [vmem:[%s2584 + $0x18] sm:$0xff]
    %v2589 = vld [vmem:[%s2584 + $0x20] sm:$0xff]
    %v2590 = vld [vmem:[%s2584 + $0x28] sm:$0xff]
    %v2591 = vld [vmem:[%s2584 + $0x30] sm:$0xff]
    %v2592 = vld [vmem:[%s2584 + $0x38] sm:$0xff]
    %v2593 = vpack.c.bf16 %v2581, %v2580
    %v2594 = vpack.c.bf16 %v2583, %v2582
    %v2595 = vpack.c.bf16 %v2586, %v2585
    %v2596 = vpack.c.bf16 %v2588, %v2587
    %v2597 = vpack.c.bf16 %v2590, %v2589
    %v2598 = vpack.c.bf16 %v2592, %v2591
    %v2600 = vsel %vm1433, %v2593, 0
    %v2603 = vsel %vm1433, %v2594, 0
    %2605 = vmatpush.bf16.msra.mxu0 0
    %2606 = vmatpush.bf16.msra.mxu0 0
    %2607 = vmatpush.bf16.msra.mxu0 0
    %2608 = vmatpush.bf16.msra.mxu0 0
    %2609 = vmatpush.bf16.msra.mxu0 %v2598
    %2610 = vmatpush.bf16.msra.mxu0 %v2597
    %2611 = vmatpush.bf16.msra.mxu0 %v2596
    %2612 = vmatpush.bf16.msra.mxu0 %v2595
    %2613 = vmatmul.bf16.gmra.mxu0 %v2600
    %v2614 = vpop.f32.mrf.mxu0
    %v2615 = vadd.f32 0.0, %v2614
    %v2616 = vpop.f32.mrf.mxu0
    %v2617 = vadd.f32 0.0, %v2616
    %2618 = vmatmul.bf16.gmra.mxu0 %v2603
    %v2619 = vpop.f32.mrf.mxu0
    %v2620 = vadd.f32 0.0, %v2619
    %v2621 = vpop.f32.mrf.mxu0
    %v2622 = vadd.f32 0.0, %v2621
    %2623 = vdwg.mxu0
    %v2624 = vadd.f32 %v2537, %v2615
    %v2625 = vadd.f32 %v2538, %v2617
    %v2626 = vadd.f32 %v2539, %v2620
    %v2627 = vadd.f32 %v2540, %v2622
    %s2628 = scalar_lea.vmem [#allocation25], 1
    %v2629 = vld [vmem:[%s2628] sm:$0x1]
    %v2631 = vperm.slane %v2629, 0
    %v2633 = vadd.f32 %v2624, %v2631
    %v2634 = vadd.f32 %v2625, %v2631
    %v2635 = vadd.f32 %v2626, %v2631
    %v2636 = vadd.f32 %v2627, %v2631
    %s2637 = scalar_lea.vmem [#allocation26], 1
    %v2638 = vld [vmem:[%s2637] sm:$0x1]
    %s2639 = scalar_lea.vmem [#allocation28], 1
    %v2640 = vld [vmem:[%s2639] sm:$0x1]
    %v2641 = vsel %vm422, %v2633, 0.0
    %2642 = vadd.xlane.f32.xlu0 %v2641
    %v2643 = vpop.xlane.xlu0 %2642
    %v2644 = vsel %vm422, %v2634, 0.0
    %2645 = vadd.xlane.f32.xlu0 %v2644
    %v2646 = vpop.xlane.xlu0 %2645
    %v2647 = vsel %vm422, %v2635, 0.0
    %2648 = vadd.xlane.f32.xlu0 %v2647
    %v2649 = vpop.xlane.xlu0 %2648
    %v2650 = vsel %vm422, %v2636, 0.0
    %2651 = vadd.xlane.f32.xlu0 %v2650
    %v2652 = vpop.xlane.xlu0 %2651
    %v2653 = vmul.f32 %v2643, %v1287
    %v2654 = vmul.f32 %v2646, %v1287
    %v2655 = vmul.f32 %v2649, %v1287
    %v2656 = vmul.f32 %v2652, %v1287
    %v2657 = vsub.f32 %v2633, %v2653
    %v2658 = vsub.f32 %v2634, %v2654
    %v2659 = vsub.f32 %v2635, %v2655
    %v2660 = vsub.f32 %v2636, %v2656
    %v2661 = vmul.f32 %v2657, %v2657
    %v2662 = vmul.f32 %v2658, %v2658
    %v2663 = vmul.f32 %v2659, %v2659
    %v2664 = vmul.f32 %v2660, %v2660
    %v2665 = vsel %vm422, %v2661, 0.0
    %2666 = vadd.xlane.f32.xlu0 %v2665
    %v2667 = vpop.xlane.xlu0 %2666
    %v2668 = vsel %vm422, %v2662, 0.0
    %2669 = vadd.xlane.f32.xlu0 %v2668
    %v2670 = vpop.xlane.xlu0 %2669
    %v2671 = vsel %vm422, %v2663, 0.0
    %2672 = vadd.xlane.f32.xlu0 %v2671
    %v2673 = vpop.xlane.xlu0 %2672
    %v2674 = vsel %vm422, %v2664, 0.0
    %2675 = vadd.xlane.f32.xlu0 %v2674
    %v2676 = vpop.xlane.xlu0 %2675
    %v2677 = vmul.f32 %v2667, %v1287
    %v2678 = vmul.f32 %v2670, %v1287
    %v2679 = vmul.f32 %v2673, %v1287
    %v2680 = vmul.f32 %v2676, %v1287
    %v2681 = vadd.f32 %v2677, 1e-05
    %v2682 = vadd.f32 %v2678, 1e-05
    %v2683 = vadd.f32 %v2679, 1e-05
    %v2684 = vadd.f32 %v2680, 1e-05
    %v2685 = vrsqrt.pop %v2681
    %v2686 = vmul.f32 %v2685, %v2681
    %v2687 = vmul.f32 %v2686, %v2685
    %v2688 = vmul.f32 0.5, %v2687
    %v2689 = vsub.f32 1.5, %v2688
    %v2690 = vmul.f32 %v2685, %v2689
    %vm2691 = vweird.f32 %v2681
    %vm2692 = vweird.f32 %v2685
    %vm2693 = vmor %vm2691, %vm2692
    %v2694 = vsel %vm2693, %v2685, %v2690
    %v2695 = vrsqrt.pop %v2682
    %v2696 = vmul.f32 %v2695, %v2682
    %v2697 = vmul.f32 %v2696, %v2695
    %v2698 = vmul.f32 0.5, %v2697
    %v2699 = vsub.f32 1.5, %v2698
    %v2700 = vmul.f32 %v2695, %v2699
    %vm2701 = vweird.f32 %v2682
    %vm2702 = vweird.f32 %v2695
    %vm2703 = vmor %vm2701, %vm2702
    %v2704 = vsel %vm2703, %v2695, %v2700
    %v2705 = vrsqrt.pop %v2683
    %v2706 = vmul.f32 %v2705, %v2683
    %v2707 = vmul.f32 %v2706, %v2705
    %v2708 = vmul.f32 0.5, %v2707
    %v2709 = vsub.f32 1.5, %v2708
    %v2710 = vmul.f32 %v2705, %v2709
    %vm2711 = vweird.f32 %v2683
    %vm2712 = vweird.f32 %v2705
    %vm2713 = vmor %vm2711, %vm2712
    %v2714 = vsel %vm2713, %v2705, %v2710
    %v2715 = vrsqrt.pop %v2684
    %v2716 = vmul.f32 %v2715, %v2684
    %v2717 = vmul.f32 %v2716, %v2715
    %v2718 = vmul.f32 0.5, %v2717
    %v2719 = vsub.f32 1.5, %v2718
    %v2720 = vmul.f32 %v2715, %v2719
    %vm2721 = vweird.f32 %v2684
    %vm2722 = vweird.f32 %v2715
    %vm2723 = vmor %vm2721, %vm2722
    %v2724 = vsel %vm2723, %v2715, %v2720
    %v2725 = vmul.f32 %v2657, %v2694
    %v2726 = vmul.f32 %v2658, %v2704
    %v2727 = vmul.f32 %v2659, %v2714
    %v2728 = vmul.f32 %v2660, %v2724
    %v2730 = vperm.slane %v2638, 0
    %v2732 = vmul.f32 %v2725, %v2730
    %v2733 = vmul.f32 %v2726, %v2730
    %v2734 = vmul.f32 %v2727, %v2730
    %v2735 = vmul.f32 %v2728, %v2730
    %v2737 = vperm.slane %v2640, 0
    %v2739 = vadd.f32 %v2732, %v2737
    %v2740 = vadd.f32 %v2733, %v2737
    %v2741 = vadd.f32 %v2734, %v2737
    %v2742 = vadd.f32 %v2735, %v2737
    %2743 = vst.msk [vmem:[#allocation31] sm:$0xff] %vm422, %v2739
    %2744 = vst.msk [vmem:[#allocation31 + $0x8] sm:$0xff] %vm422, %v2740
    %2745 = vst.msk [vmem:[#allocation31 + $0x10] sm:$0xff] %vm422, %v2741
    %2746 = vst.msk [vmem:[#allocation31 + $0x18] sm:$0xff] %vm422, %v2742
    %v2747 = vld [vmem:[#allocation29] sm:$0xff]
    %v2748 = vld [vmem:[#allocation29 + $0x8] sm:$0xff]
    %v2749 = vld [vmem:[#allocation29 + $0x10] sm:$0xff]
    %v2750 = vld [vmem:[#allocation29 + $0x18] sm:$0xff]
    %v2751 = vld [vmem:[#allocation29 + $0x20] sm:$0xff]
    %v2752 = vld [vmem:[#allocation29 + $0x28] sm:$0xff]
    %v2753 = vld [vmem:[#allocation29 + $0x30] sm:$0xff]
    %v2754 = vld [vmem:[#allocation29 + $0x38] sm:$0xff]
    %v2755 = vld [vmem:[#allocation29 + $0x40] sm:$0xff]
    %v2756 = vld [vmem:[#allocation29 + $0x48] sm:$0xff]
    %v2757 = vld [vmem:[#allocation29 + $0x50] sm:$0xff]
    %v2758 = vld [vmem:[#allocation29 + $0x58] sm:$0xff]
    %v2759 = vld [vmem:[#allocation29 + $0x60] sm:$0xff]
    %v2760 = vld [vmem:[#allocation29 + $0x68] sm:$0xff]
    %v2761 = vld [vmem:[#allocation29 + $0x70] sm:$0xff]
    %v2762 = vld [vmem:[#allocation29 + $0x78] sm:$0xff]
    %v2763 = vld [vmem:[#allocation29 + $0x80] sm:$0xff]
    %v2764 = vld [vmem:[#allocation29 + $0x88] sm:$0xff]
    %v2765 = vld [vmem:[#allocation29 + $0x90] sm:$0xff]
    %v2766 = vld [vmem:[#allocation29 + $0x98] sm:$0xff]
    %v2767 = vld [vmem:[#allocation29 + $0xa0] sm:$0xff]
    %v2768 = vld [vmem:[#allocation29 + $0xa8] sm:$0xff]
    %v2769 = vld [vmem:[#allocation29 + $0xb0] sm:$0xff]
    %v2770 = vld [vmem:[#allocation29 + $0xb8] sm:$0xff]
    %v2771 = vld [vmem:[#allocation29 + $0xc0] sm:$0xff]
    %v2772 = vld [vmem:[#allocation29 + $0xc8] sm:$0xff]
    %v2773 = vld [vmem:[#allocation29 + $0xd0] sm:$0xff]
    %v2774 = vld [vmem:[#allocation29 + $0xd8] sm:$0xff]
    %v2775 = vld [vmem:[#allocation29 + $0xe0] sm:$0xff]
    %v2776 = vld [vmem:[#allocation29 + $0xe8] sm:$0xff]
    %v2777 = vld [vmem:[#allocation29 + $0xf0] sm:$0xff]
    %v2778 = vld [vmem:[#allocation29 + $0xf8] sm:$0xff]
    %v2779 = vld [vmem:[#allocation29 + $0x100] sm:$0xff]
    %v2780 = vld [vmem:[#allocation29 + $0x108] sm:$0xff]
    %v2781 = vld [vmem:[#allocation29 + $0x110] sm:$0xff]
    %v2782 = vld [vmem:[#allocation29 + $0x118] sm:$0xff]
    %v2783 = vpack.c.bf16 %v2739, %v2739
    %v2784 = vpack.c.bf16 %v2740, %v2740
    %v2785 = vpack.c.bf16 %v2741, %v2741
    %v2786 = vpack.c.bf16 %v2742, %v2742
    %v2787 = vpack.c.bf16 %v2747, %v2747
    %v2788 = vpack.c.bf16 %v2748, %v2748
    %v2789 = vpack.c.bf16 %v2749, %v2749
    %v2790 = vpack.c.bf16 %v2750, %v2750
    %v2791 = vpack.c.bf16 %v2751, %v2751
    %v2792 = vpack.c.bf16 %v2752, %v2752
    %v2793 = vpack.c.bf16 %v2753, %v2753
    %v2794 = vpack.c.bf16 %v2754, %v2754
    %v2795 = vpack.c.bf16 %v2755, %v2755
    %v2796 = vpack.c.bf16 %v2756, %v2756
    %v2797 = vpack.c.bf16 %v2757, %v2757
    %v2798 = vpack.c.bf16 %v2758, %v2758
    %v2799 = vpack.c.bf16 %v2759, %v2759
    %v2800 = vpack.c.bf16 %v2760, %v2760
    %v2801 = vpack.c.bf16 %v2761, %v2761
    %v2802 = vpack.c.bf16 %v2762, %v2762
    %v2803 = vpack.c.bf16 %v2763, %v2763
    %v2804 = vpack.c.bf16 %v2764, %v2764
    %v2805 = vpack.c.bf16 %v2765, %v2765
    %v2806 = vpack.c.bf16 %v2766, %v2766
    %v2807 = vpack.c.bf16 %v2767, %v2767
    %v2808 = vpack.c.bf16 %v2768, %v2768
    %v2809 = vpack.c.bf16 %v2769, %v2769
    %v2810 = vpack.c.bf16 %v2770, %v2770
    %v2811 = vpack.c.bf16 %v2771, %v2771
    %v2812 = vpack.c.bf16 %v2772, %v2772
    %v2813 = vpack.c.bf16 %v2773, %v2773
    %v2814 = vpack.c.bf16 %v2774, %v2774
    %v2815 = vpack.c.bf16 %v2775, %v2775
    %v2816 = vpack.c.bf16 %v2776, %v2776
    %v2817 = vpack.c.bf16 %v2777, %v2777
    %v2818 = vpack.c.bf16 %v2778, %v2778
    %v2819 = vpack.c.bf16 %v2779, %v2779
    %v2820 = vpack.c.bf16 %v2780, %v2780
    %v2821 = vpack.c.bf16 %v2781, %v2781
    %v2822 = vpack.c.bf16 %v2782, %v2782
    %v2827 = vunpack.c.l.b16 %v2783
    %v2828 = vunpack.c.l.b16 %v2784
    %v2829 = vunpack.c.l.b16 %v2785
    %v2830 = vunpack.c.l.b16 %v2786
    %v2831 = vpack.c.b16 %v2828, %v2827
    %v2832 = vpack.c.b16 %v2830, %v2829
    %v2837 = vunpack.c.l.b16 %v2787
    %v2838 = vunpack.c.l.b16 %v2788
    %v2839 = vunpack.c.l.b16 %v2789
    %v2840 = vunpack.c.l.b16 %v2790
    %v2841 = vpack.c.b16 %v2838, %v2837
    %v2842 = vpack.c.b16 %v2840, %v2839
    %v2846 = vsel %vm422, %v2831, 0
    %v2849 = vsel %vm422, %v2832, 0
    %2851 = vmatpush.bf16.msra.mxu0 0
    %2852 = vmatpush.bf16.msra.mxu0 0
    %2853 = vmatpush.bf16.msra.mxu0 0
    %2854 = vmatpush.bf16.msra.mxu0 0
    %2855 = vmatpush.bf16.msra.mxu0 0
    %2856 = vmatpush.bf16.msra.mxu0 0
    %2857 = vmatpush.bf16.msra.mxu0 %v2842
    %2858 = vmatpush.bf16.msra.mxu0 %v2841
    %2859 = vmatmul.bf16.gmra.mxu0 %v2846
    %v2860 = vpop.f32.mrf.mxu0
    %v2861 = vadd.f32 0.0, %v2860
    %v2862 = vpop.f32.mrf.mxu0
    %v2863 = vadd.f32 0.0, %v2862
    %2864 = vmatmul.bf16.gmra.mxu0 %v2849
    %v2865 = vpop.f32.mrf.mxu0
    %v2866 = vadd.f32 0.0, %v2865
    %v2867 = vpop.f32.mrf.mxu0
    %v2868 = vadd.f32 0.0, %v2867
    %2869 = vdwg.mxu0
    %v2874 = vunpack.c.l.b16 %v2791
    %v2875 = vunpack.c.l.b16 %v2792
    %v2876 = vunpack.c.l.b16 %v2793
    %v2877 = vunpack.c.l.b16 %v2794
    %v2878 = vpack.c.b16 %v2875, %v2874
    %v2879 = vpack.c.b16 %v2877, %v2876
    %2882 = vmatpush.bf16.msra.mxu0 0
    %2883 = vmatpush.bf16.msra.mxu0 0
    %2884 = vmatpush.bf16.msra.mxu0 0
    %2885 = vmatpush.bf16.msra.mxu0 0
    %2886 = vmatpush.bf16.msra.mxu0 0
    %2887 = vmatpush.bf16.msra.mxu0 0
    %2888 = vmatpush.bf16.msra.mxu0 %v2879
    %2889 = vmatpush.bf16.msra.mxu0 %v2878
    %2890 = vmatmul.bf16.gmra.mxu0 %v2846
    %v2891 = vpop.f32.mrf.mxu0
    %v2892 = vadd.f32 0.0, %v2891
    %v2893 = vpop.f32.mrf.mxu0
    %v2894 = vadd.f32 0.0, %v2893
    %2895 = vmatmul.bf16.gmra.mxu0 %v2849
    %v2896 = vpop.f32.mrf.mxu0
    %v2897 = vadd.f32 0.0, %v2896
    %v2898 = vpop.f32.mrf.mxu0
    %v2899 = vadd.f32 0.0, %v2898
    %2900 = vdwg.mxu0
    %v2905 = vunpack.c.l.b16 %v2795
    %v2906 = vunpack.c.l.b16 %v2796
    %v2907 = vunpack.c.l.b16 %v2797
    %v2908 = vunpack.c.l.b16 %v2798
    %v2909 = vpack.c.b16 %v2906, %v2905
    %v2910 = vpack.c.b16 %v2908, %v2907
    %2913 = vmatpush.bf16.msra.mxu0 0
    %2914 = vmatpush.bf16.msra.mxu0 0
    %2915 = vmatpush.bf16.msra.mxu0 0
    %2916 = vmatpush.bf16.msra.mxu0 0
    %2917 = vmatpush.bf16.msra.mxu0 0
    %2918 = vmatpush.bf16.msra.mxu0 0
    %2919 = vmatpush.bf16.msra.mxu0 %v2910
    %2920 = vmatpush.bf16.msra.mxu0 %v2909
    %2921 = vmatmul.bf16.gmra.mxu0 %v2846
    %v2922 = vpop.f32.mrf.mxu0
    %v2923 = vadd.f32 0.0, %v2922
    %v2924 = vpop.f32.mrf.mxu0
    %v2925 = vadd.f32 0.0, %v2924
    %2926 = vmatmul.bf16.gmra.mxu0 %v2849
    %v2927 = vpop.f32.mrf.mxu0
    %v2928 = vadd.f32 0.0, %v2927
    %v2929 = vpop.f32.mrf.mxu0
    %v2930 = vadd.f32 0.0, %v2929
    %2931 = vdwg.mxu0
    %v2936 = vunpack.c.l.b16 %v2799
    %v2937 = vunpack.c.l.b16 %v2800
    %v2938 = vunpack.c.l.b16 %v2801
    %v2939 = vunpack.c.l.b16 %v2802
    %v2940 = vpack.c.b16 %v2937, %v2936
    %v2941 = vpack.c.b16 %v2939, %v2938
    %2944 = vmatpush.bf16.msra.mxu0 0
    %2945 = vmatpush.bf16.msra.mxu0 0
    %2946 = vmatpush.bf16.msra.mxu0 0
    %2947 = vmatpush.bf16.msra.mxu0 0
    %2948 = vmatpush.bf16.msra.mxu0 0
    %2949 = vmatpush.bf16.msra.mxu0 0
    %2950 = vmatpush.bf16.msra.mxu0 %v2941
    %2951 = vmatpush.bf16.msra.mxu0 %v2940
    %2952 = vmatmul.bf16.gmra.mxu0 %v2846
    %v2953 = vpop.f32.mrf.mxu0
    %v2954 = vadd.f32 0.0, %v2953
    %v2955 = vpop.f32.mrf.mxu0
    %v2956 = vadd.f32 0.0, %v2955
    %2957 = vmatmul.bf16.gmra.mxu0 %v2849
    %v2958 = vpop.f32.mrf.mxu0
    %v2959 = vadd.f32 0.0, %v2958
    %v2960 = vpop.f32.mrf.mxu0
    %v2961 = vadd.f32 0.0, %v2960
    %2962 = vdwg.mxu0
    %v2967 = vunpack.c.l.b16 %v2803
    %v2968 = vunpack.c.l.b16 %v2804
    %v2969 = vunpack.c.l.b16 %v2805
    %v2970 = vunpack.c.l.b16 %v2806
    %v2971 = vpack.c.b16 %v2968, %v2967
    %v2972 = vpack.c.b16 %v2970, %v2969
    %2975 = vmatpush.bf16.msra.mxu0 0
    %2976 = vmatpush.bf16.msra.mxu0 0
    %2977 = vmatpush.bf16.msra.mxu0 0
    %2978 = vmatpush.bf16.msra.mxu0 0
    %2979 = vmatpush.bf16.msra.mxu0 0
    %2980 = vmatpush.bf16.msra.mxu0 0
    %2981 = vmatpush.bf16.msra.mxu0 %v2972
    %2982 = vmatpush.bf16.msra.mxu0 %v2971
    %2983 = vmatmul.bf16.gmra.mxu0 %v2846
    %v2984 = vpop.f32.mrf.mxu0
    %v2985 = vadd.f32 0.0, %v2984
    %v2986 = vpop.f32.mrf.mxu0
    %v2987 = vadd.f32 0.0, %v2986
    %2988 = vmatmul.bf16.gmra.mxu0 %v2849
    %v2989 = vpop.f32.mrf.mxu0
    %v2990 = vadd.f32 0.0, %v2989
    %v2991 = vpop.f32.mrf.mxu0
    %v2992 = vadd.f32 0.0, %v2991
    %2993 = vdwg.mxu0
    %v2998 = vunpack.c.l.b16 %v2807
    %v2999 = vunpack.c.l.b16 %v2808
    %v3000 = vunpack.c.l.b16 %v2809
    %v3001 = vunpack.c.l.b16 %v2810
    %v3002 = vpack.c.b16 %v2999, %v2998
    %v3003 = vpack.c.b16 %v3001, %v3000
    %3006 = vmatpush.bf16.msra.mxu0 0
    %3007 = vmatpush.bf16.msra.mxu0 0
    %3008 = vmatpush.bf16.msra.mxu0 0
    %3009 = vmatpush.bf16.msra.mxu0 0
    %3010 = vmatpush.bf16.msra.mxu0 0
    %3011 = vmatpush.bf16.msra.mxu0 0
    %3012 = vmatpush.bf16.msra.mxu0 %v3003
    %3013 = vmatpush.bf16.msra.mxu0 %v3002
    %3014 = vmatmul.bf16.gmra.mxu0 %v2846
    %v3015 = vpop.f32.mrf.mxu0
    %v3016 = vadd.f32 0.0, %v3015
    %v3017 = vpop.f32.mrf.mxu0
    %v3018 = vadd.f32 0.0, %v3017
    %3019 = vmatmul.bf16.gmra.mxu0 %v2849
    %v3020 = vpop.f32.mrf.mxu0
    %v3021 = vadd.f32 0.0, %v3020
    %v3022 = vpop.f32.mrf.mxu0
    %v3023 = vadd.f32 0.0, %v3022
    %3024 = vdwg.mxu0
    %v3029 = vunpack.c.l.b16 %v2811
    %v3030 = vunpack.c.l.b16 %v2812
    %v3031 = vunpack.c.l.b16 %v2813
    %v3032 = vunpack.c.l.b16 %v2814
    %v3033 = vpack.c.b16 %v3030, %v3029
    %v3034 = vpack.c.b16 %v3032, %v3031
    %3037 = vmatpush.bf16.msra.mxu0 0
    %3038 = vmatpush.bf16.msra.mxu0 0
    %3039 = vmatpush.bf16.msra.mxu0 0
    %3040 = vmatpush.bf16.msra.mxu0 0
    %3041 = vmatpush.bf16.msra.mxu0 0
    %3042 = vmatpush.bf16.msra.mxu0 0
    %3043 = vmatpush.bf16.msra.mxu0 %v3034
    %3044 = vmatpush.bf16.msra.mxu0 %v3033
    %3045 = vmatmul.bf16.gmra.mxu0 %v2846
    %v3046 = vpop.f32.mrf.mxu0
    %v3047 = vadd.f32 0.0, %v3046
    %v3048 = vpop.f32.mrf.mxu0
    %v3049 = vadd.f32 0.0, %v3048
    %3050 = vmatmul.bf16.gmra.mxu0 %v2849
    %v3051 = vpop.f32.mrf.mxu0
    %v3052 = vadd.f32 0.0, %v3051
    %v3053 = vpop.f32.mrf.mxu0
    %v3054 = vadd.f32 0.0, %v3053
    %3055 = vdwg.mxu0
    %v3060 = vunpack.c.l.b16 %v2815
    %v3061 = vunpack.c.l.b16 %v2816
    %v3062 = vunpack.c.l.b16 %v2817
    %v3063 = vunpack.c.l.b16 %v2818
    %v3064 = vpack.c.b16 %v3061, %v3060
    %v3065 = vpack.c.b16 %v3063, %v3062
    %3068 = vmatpush.bf16.msra.mxu0 0
    %3069 = vmatpush.bf16.msra.mxu0 0
    %3070 = vmatpush.bf16.msra.mxu0 0
    %3071 = vmatpush.bf16.msra.mxu0 0
    %3072 = vmatpush.bf16.msra.mxu0 0
    %3073 = vmatpush.bf16.msra.mxu0 0
    %3074 = vmatpush.bf16.msra.mxu0 %v3065
    %3075 = vmatpush.bf16.msra.mxu0 %v3064
    %3076 = vmatmul.bf16.gmra.mxu0 %v2846
    %v3077 = vpop.f32.mrf.mxu0
    %v3078 = vadd.f32 0.0, %v3077
    %v3079 = vpop.f32.mrf.mxu0
    %v3080 = vadd.f32 0.0, %v3079
    %3081 = vmatmul.bf16.gmra.mxu0 %v2849
    %v3082 = vpop.f32.mrf.mxu0
    %v3083 = vadd.f32 0.0, %v3082
    %v3084 = vpop.f32.mrf.mxu0
    %v3085 = vadd.f32 0.0, %v3084
    %3086 = vdwg.mxu0
    %v3091 = vunpack.c.l.b16 %v2819
    %v3092 = vunpack.c.l.b16 %v2820
    %v3093 = vunpack.c.l.b16 %v2821
    %v3094 = vunpack.c.l.b16 %v2822
    %v3095 = vpack.c.b16 %v3092, %v3091
    %v3096 = vpack.c.b16 %v3094, %v3093
    %3099 = vmatpush.bf16.msra.mxu0 0
    %3100 = vmatpush.bf16.msra.mxu0 0
    %3101 = vmatpush.bf16.msra.mxu0 0
    %3102 = vmatpush.bf16.msra.mxu0 0
    %3103 = vmatpush.bf16.msra.mxu0 0
    %3104 = vmatpush.bf16.msra.mxu0 0
    %3105 = vmatpush.bf16.msra.mxu0 %v3096
    %3106 = vmatpush.bf16.msra.mxu0 %v3095
    %3107 = vmatmul.bf16.gmra.mxu0 %v2846
    %v3108 = vpop.f32.mrf.mxu0
    %v3109 = vadd.f32 0.0, %v3108
    %v3110 = vpop.f32.mrf.mxu0
    %v3111 = vadd.f32 0.0, %v3110
    %3112 = vmatmul.bf16.gmra.mxu0 %v2849
    %v3113 = vpop.f32.mrf.mxu0
    %v3114 = vadd.f32 0.0, %v3113
    %v3115 = vpop.f32.mrf.mxu0
    %v3116 = vadd.f32 0.0, %v3115
    %3117 = vdwg.mxu0
    %v3118 = vld [vmem:[%s23] sm:$0xff]
    %v3119 = vld [vmem:[%s23 + $0x8] sm:$0xff]
    %v3120 = vld [vmem:[%s23 + $0x10] sm:$0xff]
    %v3121 = vld [vmem:[%s23 + $0x18] sm:$0xff]
    %v3122 = vld [vmem:[%s23 + $0x20] sm:$0xff]
    %v3123 = vld [vmem:[%s23 + $0x28] sm:$0xff]
    %v3124 = vld [vmem:[%s23 + $0x30] sm:$0xff]
    %v3125 = vld [vmem:[%s23 + $0x38] sm:$0xff]
    %v3126 = vld [vmem:[%s23 + $0x40] sm:$0xff]
    %v3127 = vld [vmem:[%s23 + $0x48] sm:$0xff]
    %v3128 = vld [vmem:[%s23 + $0x50] sm:$0xff]
    %v3129 = vld [vmem:[%s23 + $0x58] sm:$0xff]
    %v3130 = vpack.c.bf16 %v3121, %v3118
    %v3131 = vpack.c.bf16 %v3122, %v3119
    %v3132 = vpack.c.bf16 %v3123, %v3120
    %v3133 = vpack.c.bf16 %v3127, %v3124
    %v3134 = vpack.c.bf16 %v3128, %v3125
    %v3135 = vpack.c.bf16 %v3129, %v3126
    %v3136 = vpack.c.bf16 %v2863, %v2861
    %v3137 = vpack.c.bf16 %v2868, %v2866
    %v3138 = vpack.c.bf16 %v2894, %v2892
    %v3139 = vpack.c.bf16 %v2899, %v2897
    %v3140 = vpack.c.bf16 %v2925, %v2923
    %v3141 = vpack.c.bf16 %v2930, %v2928
    %v3142 = vpack.c.bf16 %v2956, %v2954
    %v3143 = vpack.c.bf16 %v2961, %v2959
    %v3144 = vpack.c.bf16 %v2987, %v2985
    %v3145 = vpack.c.bf16 %v2992, %v2990
    %v3146 = vpack.c.bf16 %v3018, %v3016
    %v3147 = vpack.c.bf16 %v3023, %v3021
    %v3148 = vpack.c.bf16 %v3049, %v3047
    %v3149 = vpack.c.bf16 %v3054, %v3052
    %v3150 = vpack.c.bf16 %v3080, %v3078
    %v3151 = vpack.c.bf16 %v3085, %v3083
    %v3152 = vpack.c.bf16 %v3111, %v3109
    %v3153 = vpack.c.bf16 %v3116, %v3114
    %v3154 = vld [vmem:[%s22] sm:$0x1]
    %v3156 = vperm.slane %v3154, 0
    %v3159 = vsel %vm422, %v3132, 0
    %v3162 = vsel %vm422, %v3135, 0
    %3164 = vmatpush.bf16.msra.mxu0 %v3143
    %3165 = vmatpush.bf16.msra.mxu0 %v3142
    %3166 = vmatpush.bf16.msra.mxu0 %v3141
    %3167 = vmatpush.bf16.msra.mxu0 %v3140
    %3168 = vmatpush.bf16.msra.mxu0 %v3139
    %3169 = vmatpush.bf16.msra.mxu0 %v3138
    %3170 = vmatpush.bf16.msra.mxu0 %v3137
    %3171 = vmatpush.bf16.msra.mxu0 %v3136
    %3172 = vmatmul.bf16.gmra.mxu0 %v3130
    %v3173 = vpop.f32.mrf.mxu0
    %v3174 = vadd.f32 %v3156, %v3173
    %v3175 = vpop.f32.mrf.mxu0
    %v3176 = vadd.f32 %v3156, %v3175
    %3177 = vmatmul.bf16.gmra.mxu0 %v3133
    %v3178 = vpop.f32.mrf.mxu0
    %v3179 = vadd.f32 %v3156, %v3178
    %v3180 = vpop.f32.mrf.mxu0
    %v3181 = vadd.f32 %v3156, %v3180
    %3182 = vdwg.mxu0
    %3183 = vmatpush.bf16.msra.mxu0 %v3151
    %3184 = vmatpush.bf16.msra.mxu0 %v3150
    %3185 = vmatpush.bf16.msra.mxu0 %v3149
    %3186 = vmatpush.bf16.msra.mxu0 %v3148
    %3187 = vmatpush.bf16.msra.mxu0 %v3147
    %3188 = vmatpush.bf16.msra.mxu0 %v3146
    %3189 = vmatpush.bf16.msra.mxu0 %v3145
    %3190 = vmatpush.bf16.msra.mxu0 %v3144
    %3191 = vmatmul.bf16.gmra.mxu0 %v3131
    %v3192 = vpop.f32.mrf.mxu0
    %v3193 = vadd.f32 %v3174, %v3192
    %v3194 = vpop.f32.mrf.mxu0
    %v3195 = vadd.f32 %v3176, %v3194
    %3196 = vmatmul.bf16.gmra.mxu0 %v3134
    %v3197 = vpop.f32.mrf.mxu0
    %v3198 = vadd.f32 %v3179, %v3197
    %v3199 = vpop.f32.mrf.mxu0
    %v3200 = vadd.f32 %v3181, %v3199
    %3201 = vdwg.mxu0
    %3202 = vmatpush.bf16.msra.mxu0 0
    %3203 = vmatpush.bf16.msra.mxu0 0
    %3204 = vmatpush.bf16.msra.mxu0 0
    %3205 = vmatpush.bf16.msra.mxu0 0
    %3206 = vmatpush.bf16.msra.mxu0 0
    %3207 = vmatpush.bf16.msra.mxu0 0
    %3208 = vmatpush.bf16.msra.mxu0 %v3153
    %3209 = vmatpush.bf16.msra.mxu0 %v3152
    %3210 = vmatmul.bf16.gmra.mxu0 %v3159
    %v3211 = vpop.f32.mrf.mxu0
    %v3212 = vadd.f32 %v3193, %v3211
    %v3213 = vpop.f32.mrf.mxu0
    %v3214 = vadd.f32 %v3195, %v3213
    %3215 = vmatmul.bf16.gmra.mxu0 %v3162
    %v3216 = vpop.f32.mrf.mxu0
    %v3217 = vadd.f32 %v3198, %v3216
    %v3218 = vpop.f32.mrf.mxu0
    %v3219 = vadd.f32 %v3200, %v3218
    %3220 = vdwg.mxu0
    %v3221 = vmax.f32 %v3212, 0.0
    %v3222 = vmax.f32 %v3214, 0.0
    %v3223 = vmax.f32 %v3217, 0.0
    %v3224 = vmax.f32 %v3219, 0.0
    %3225 = vst.msk [vmem:[#allocation32] sm:$0xff] %vm422, %v3221
    %3226 = vst.msk [vmem:[#allocation32 + $0x8] sm:$0xff] %vm422, %v3222
    %3227 = vst.msk [vmem:[#allocation32 + $0x10] sm:$0xff] %vm422, %v3223
    %3228 = vst.msk [vmem:[#allocation32 + $0x18] sm:$0xff] %vm422, %v3224
    // Predicated region
    $region170: #{tpu_custom_call.1} parent=1 // pred_check
      _
    $region171: #{tpu_custom_call.1} parent=1 // pred_check_branch
      %3230 = sbr.rel (0) target = $region173
    $region172: #{tpu_custom_call.1} parent=1 // pred_region
      %3232 = vsyncadd [#allocation4], 0
      %s3233 = sshll.u32 [#allocation31], 4
      %s3234 = int_to_ptr.vmem [resolvable:$true] %s3233
      %s3235 = sshll.u32 %s24, 4
      %s3236 = int_to_ptr.hbm [resolvable:$true] %s3235
      %3241 = dma.vmem_to_hbm [thread:$0]  %s3234, 512, %s3236, [#allocation4], 128, 128, 8
    $region173: #{tpu_custom_call.1} parent=1 // pred_fallthru
      _
    // Predicated region
    $region174: #{tpu_custom_call.1} parent=1 // pred_check
      _
    $region175: #{tpu_custom_call.1} parent=1 // pred_check_branch
      %3243 = sbr.rel (0) target = $region177
    $region176: #{tpu_custom_call.1} parent=1 // pred_region
      %3245 = vsyncadd [#allocation33], 0
      %s3246 = sshll.u32 [#allocation32], 4
      %s3247 = int_to_ptr.vmem [resolvable:$true] %s3246
      %s3248 = sshll.u32 %s25, 4
      %s3249 = int_to_ptr.hbm [resolvable:$true] %s3248
      %3254 = dma.vmem_to_hbm [thread:$0]  %s3247, 512, %s3249, [#allocation33], 128, 128, 8
    $region177: #{tpu_custom_call.1} parent=1 // pred_fallthru
      _
    // Predicated region
    $region178: #{tpu_custom_call.1} parent=1 // pred_check
      _
    $region179: #{tpu_custom_call.1} parent=1 // pred_check_branch
      %3256 = sbr.rel (0) target = $region181
    $region180: #{tpu_custom_call.1} parent=1 // pred_region
      %3258 = dma.done [#allocation4], 512
    $region181: #{tpu_custom_call.1} parent=1 // pred_fallthru
      _
    // Predicated region
    $region182: #{tpu_custom_call.1} parent=1 // pred_check
      _
    $region183: #{tpu_custom_call.1} parent=1 // pred_check_branch
      %3260 = sbr.rel (0) target = $region185
    $region184: #{tpu_custom_call.1} parent=1 // pred_region
      %3262 = dma.done [#allocation33], 512
    $region185: #{tpu_custom_call.1} parent=1 // pred_fallthru
      _
    %3263 = vsyncpa [#allocation3], 1
    %3264 = vsyncpa [#allocation6], 1
    %3265 = vsyncpa [#allocation9], 1
    %3266 = vsyncpa [#allocation12], 1
    %3267 = vsyncpa [#allocation15], 1
    %3268 = vsyncpa [#allocation18], 1
    %3269 = vsyncpa [#allocation21], 1
    %3270 = vsyncpa [#allocation24], 1
    %3271 = vsyncpa [#allocation27], 1
    %3272 = vsyncpa [#allocation30], 1
    %3273 = vsyncpa [#allocation4], 1
    %3274 = vsyncpa [#allocation33], 1

</llo_original>
